<compile_context>
chip_gen: v7x
topology: tpu7x:2x2x1
jax: 0.10.0
libtpu: 0.0.40
codegen_flags: <defaults>
</compile_context>

<pallas_src>
import functools
import math

import jax
import jax.numpy as jnp
from jax.experimental import pallas as pl
from jax.experimental.pallas import tpu as pltpu


# ---------------------------------------------------------------------------
# Small helpers
# ---------------------------------------------------------------------------
def _round_up(a, b):
    return (a + b - 1) // b * b


def _tile_rows(M, target=256):
    """Pick a row tile (multiple of 8) aiming for >= 2 grid steps (megacore)."""
    if M >= 2 * target:
        tm = target
    else:
        tm = max(8, _round_up(max(1, (M + 1) // 2), 8))
    Mp = _round_up(M, tm)
    return tm, Mp, Mp // tm


def _block_bytes(*shapes_dtypes):
    total = 0
    for shp, dt in shapes_dtypes:
        n = 1
        for s in shp:
            n *= int(s)
        total += n * jnp.dtype(dt).itemsize
    return total


def _cparams(n_grid_axes, block_bytes):
    """Parallel dimension semantics + raise scoped VMEM limit only if needed."""
    kw = dict(dimension_semantics=("parallel",) * n_grid_axes)
    est = int(block_bytes * 2 * 1.25) + (2 << 20)   # double-buffer + headroom
    if est > (32 << 20):                            # above default scoped limit
        kw["vmem_limit_bytes"] = min(est, 96 << 20)
    return pltpu.CompilerParams(**kw)


# ---------------------------------------------------------------------------
# Pallas kernels
# ---------------------------------------------------------------------------
def _linear_kernel(x_ref, w_ref, b_ref, o_ref):
    # bf16 operands, f32 accumulation on the MXU.
    o_ref[...] = (
        jnp.dot(x_ref[...].astype(jnp.bfloat16), w_ref[...],
                preferred_element_type=jnp.float32)
        + b_ref[...]
    )


def pallas_linear(x, w, b):
    """(M, K) @ (K, N) + (N,) -> (M, N); row-tiled, weight kept VMEM-resident.

    NOTE: at the toy config N < 128 so output stores are masked (low lane
    occupancy); at real MAE dims (multiples of 128) stores are unmasked.
    """
    M, K = x.shape
    N = w.shape[1]
    w = w.astype(jnp.bfloat16)
    b = b.reshape(1, N).astype(jnp.float32)
    tm, Mp, g = _tile_rows(M)
    if Mp != M:
        x = jnp.pad(x, ((0, Mp - M), (0, 0)))
    out = pl.pallas_call(
        _linear_kernel,
        out_shape=jax.ShapeDtypeStruct((Mp, N), jnp.float32),
        grid=(g,),
        in_specs=[
            pl.BlockSpec((tm, K), lambda i: (i, 0)),
            pl.BlockSpec((K, N), lambda i: (0, 0)),
            pl.BlockSpec((1, N), lambda i: (0, 0)),
        ],
        out_specs=pl.BlockSpec((tm, N), lambda i: (i, 0)),
        compiler_params=_cparams(1, _block_bytes(
            ((tm, K), jnp.float32), ((K, N), jnp.bfloat16),
            ((1, N), jnp.float32), ((tm, N), jnp.float32))),
    )(x, w, b)
    return out[:M] if Mp != M else out


def _layernorm_kernel(x_ref, wb_ref, o_ref):
    x = x_ref[...]
    g = wb_ref[0:1, :]
    b = wb_ref[1:2, :]
    mu = jnp.mean(x, axis=-1, keepdims=True)
    var = jnp.mean((x - mu) ** 2, axis=-1, keepdims=True)
    o_ref[...] = (x - mu) * jax.lax.rsqrt(var + 1e-5) * g + b


def pallas_layernorm(x, w, b):
    M, D = x.shape
    wb = jnp.stack([w, b]).astype(jnp.float32)          # (2, D)
    tm, Mp, g = _tile_rows(M)
    if Mp != M:
        x = jnp.pad(x, ((0, Mp - M), (0, 0)))
    out = pl.pallas_call(
        _layernorm_kernel,
        out_shape=jax.ShapeDtypeStruct((Mp, D), jnp.float32),
        grid=(g,),
        in_specs=[
            pl.BlockSpec((tm, D), lambda i: (i, 0)),
            pl.BlockSpec((2, D), lambda i: (0, 0)),
        ],
        out_specs=pl.BlockSpec((tm, D), lambda i: (i, 0)),
        compiler_params=_cparams(1, _block_bytes(
            ((tm, D), jnp.float32), ((2, D), jnp.float32), ((tm, D), jnp.float32))),
    )(x, wb)
    return out[:M] if Mp != M else out


def _ln_linear_kernel(x_ref, lnp_ref, w_ref, b_ref, o_ref):
    """Fused pre-LayerNorm + (fused QKV) projection for one row tile."""
    x = x_ref[...]
    g = lnp_ref[0:1, :]
    be = lnp_ref[1:2, :]
    mu = jnp.mean(x, axis=-1, keepdims=True)
    var = jnp.mean((x - mu) ** 2, axis=-1, keepdims=True)
    h = (x - mu) * jax.lax.rsqrt(var + 1e-5) * g + be
    o_ref[...] = (
        jnp.dot(h.astype(jnp.bfloat16), w_ref[...],
                preferred_element_type=jnp.float32)
        + b_ref[...]
    )


def pallas_ln_linear(x, lnp, w, b):
    M, D = x.shape
    N = w.shape[1]
    tm, Mp, g = _tile_rows(M)
    if Mp != M:
        x = jnp.pad(x, ((0, Mp - M), (0, 0)))
    out = pl.pallas_call(
        _ln_linear_kernel,
        out_shape=jax.ShapeDtypeStruct((Mp, N), jnp.float32),
        grid=(g,),
        in_specs=[
            pl.BlockSpec((tm, D), lambda i: (i, 0)),
            pl.BlockSpec((2, D), lambda i: (0, 0)),
            pl.BlockSpec((D, N), lambda i: (0, 0)),
            pl.BlockSpec((1, N), lambda i: (0, 0)),
        ],
        out_specs=pl.BlockSpec((tm, N), lambda i: (i, 0)),
        compiler_params=_cparams(1, _block_bytes(
            ((tm, D), jnp.float32), ((2, D), jnp.float32),
            ((D, N), jnp.bfloat16), ((1, N), jnp.float32),
            ((tm, N), jnp.float32))),
    )(x, lnp, w, b)
    return out[:M] if Mp != M else out


def _attention_kernel(q_ref, k_ref, v_ref, o_ref, *, scale):
    # One batch element per grid step; heads batched on the leading dim of the
    # dot_general (flash-attention style) -- no per-head slices / concats.
    q = q_ref[0].astype(jnp.bfloat16)       # (H, N, hd)
    k = k_ref[0].astype(jnp.bfloat16)
    v = v_ref[0].astype(jnp.bfloat16)
    s = jnp.einsum("hnd,hmd->hnm", q, k,
                   preferred_element_type=jnp.float32) * scale
    s = s - jnp.max(s, axis=-1, keepdims=True)
    p = jnp.exp(s)
    p = p * pl.reciprocal(jnp.sum(p, axis=-1, keepdims=True), approx=True)
    o_ref[0] = jnp.einsum("hnm,hmd->hnd", p.astype(jnp.bfloat16), v,
                          preferred_element_type=jnp.float32)


def pallas_attention(q, k, v):
    B, H, N, hd = q.shape
    scale = 1.0 / math.sqrt(hd)
    spec = pl.BlockSpec((1, H, N, hd), lambda b: (b, 0, 0, 0))
    return pl.pallas_call(
        functools.partial(_attention_kernel, scale=scale),
        out_shape=jax.ShapeDtypeStruct((B, H, N, hd), jnp.float32),
        grid=(B,),
        in_specs=[spec, spec, spec],
        out_specs=spec,
        compiler_params=_cparams(1, _block_bytes(
            *([((1, H, N, hd), jnp.float32)] * 4))),
    )(q, k, v)


def _out_mlp_kernel(x_ref, a_ref, wo_ref, vecd_ref, w1_ref, b1_ref, w2_ref, o_ref):
    """attn out-proj + residual -> LN2 -> GELU MLP -> residual, per row tile."""
    bo = vecd_ref[0:1, :]
    g2 = vecd_ref[1:2, :]
    be2 = vecd_ref[2:3, :]
    b2 = vecd_ref[3:4, :]

    y = x_ref[...] + jnp.dot(a_ref[...].astype(jnp.bfloat16), wo_ref[...],
                             preferred_element_type=jnp.float32) + bo
    mu = jnp.mean(y, axis=-1, keepdims=True)
    var = jnp.mean((y - mu) ** 2, axis=-1, keepdims=True)
    h = (y - mu) * jax.lax.rsqrt(var + 1e-5) * g2 + be2
    ff = jnp.dot(h.astype(jnp.bfloat16), w1_ref[...],
                 preferred_element_type=jnp.float32) + b1_ref[...]
    # TODO(synk): BlockVisionTransformer's source was not provided; tanh-GELU
    # is used here (swap to jax.nn.gelu(..., approximate=False) if the
    # reference block uses PyTorch's default exact-erf nn.GELU).
    ff = jax.nn.gelu(ff, approximate=True)
    o_ref[...] = y + jnp.dot(ff.astype(jnp.bfloat16), w2_ref[...],
                             preferred_element_type=jnp.float32) + b2


def pallas_out_mlp(x, attn, wo, vecd, w1, b1, w2):
    M, D = x.shape
    F = w1.shape[1]
    tm, Mp, g = _tile_rows(M)
    if Mp != M:
        pad = ((0, Mp - M), (0, 0))
        x = jnp.pad(x, pad)
        attn = jnp.pad(attn, pad)
    out = pl.pallas_call(
        _out_mlp_kernel,
        out_shape=jax.ShapeDtypeStruct((Mp, D), jnp.float32),
        grid=(g,),
        in_specs=[
            pl.BlockSpec((tm, D), lambda i: (i, 0)),
            pl.BlockSpec((tm, D), lambda i: (i, 0)),
            pl.BlockSpec((D, D), lambda i: (0, 0)),
            pl.BlockSpec((4, D), lambda i: (0, 0)),
            pl.BlockSpec((D, F), lambda i: (0, 0)),
            pl.BlockSpec((1, F), lambda i: (0, 0)),
            pl.BlockSpec((F, D), lambda i: (0, 0)),
        ],
        out_specs=pl.BlockSpec((tm, D), lambda i: (i, 0)),
        compiler_params=_cparams(1, _block_bytes(
            ((tm, D), jnp.float32), ((tm, D), jnp.float32),
            ((D, D), jnp.bfloat16), ((4, D), jnp.float32),
            ((D, F), jnp.bfloat16), ((1, F), jnp.float32),
            ((F, D), jnp.bfloat16), ((tm, D), jnp.float32))),
    )(x, attn, wo, vecd, w1, b1, w2)
    return out[:M] if Mp != M else out


# ---------------------------------------------------------------------------
# Transformer block (pre-norm ViT block, dropout = identity / eval mode)
# ---------------------------------------------------------------------------
def vit_block(x, p, num_heads):
    B, N, D = x.shape
    H = num_heads
    hd = D // H
    x2 = x.reshape(B * N, D)

    # LN1 + fused QKV projection (row-parallel)
    qkv = pallas_ln_linear(x2, p["ln1"], p["wqkv"], p["bqkv"])      # (B*N, 3D)

    # head split is cheap XLA layout plumbing
    qkv = qkv.reshape(B, N, 3, H, hd).transpose(2, 0, 3, 1, 4)      # (3, B, H, N, hd)
    ctx = pallas_attention(qkv[0], qkv[1], qkv[2])                  # (B, H, N, hd)
    attn = ctx.transpose(0, 2, 1, 3).reshape(B * N, D)

    # out-proj + residual + LN2 + MLP + residual (row-parallel)
    out = pallas_out_mlp(x2, attn, p["wo"], p["vecd"], p["w1"], p["b1"], p["w2"])
    return out.reshape(B, N, D)


# ---------------------------------------------------------------------------
# Parameter construction (deterministic, in-script)
# ---------------------------------------------------------------------------
def _xavier_uniform(key, shape):
    fan_in, fan_out = shape[0], shape[1]
    bound = math.sqrt(6.0 / (fan_in + fan_out))
    return jax.random.uniform(key, shape, jnp.float32, -bound, bound)


def _init_block(key, D, F):
    ks = jax.random.split(key, 6)
    wq = _xavier_uniform(ks[0], (D, D))
    wk = _xavier_uniform(ks[1], (D, D))
    wv = _xavier_uniform(ks[2], (D, D))
    wo = _xavier_uniform(ks[3], (D, D))
    w1 = _xavier_uniform(ks[4], (D, F))
    w2 = _xavier_uniform(ks[5], (F, D))
    zD = jnp.zeros((D,), jnp.float32)
    oD = jnp.ones((D,), jnp.float32)
    return dict(
        ln1=jnp.stack([oD, zD]),                                       # [ln1_w, ln1_b]
        wqkv=jnp.concatenate([wq, wk, wv], axis=1).astype(jnp.bfloat16),  # (D, 3D)
        bqkv=jnp.zeros((1, 3 * D), jnp.float32),
        wo=wo.astype(jnp.bfloat16),
        vecd=jnp.stack([zD, oD, zD, zD]),                              # [bo, ln2_w, ln2_b, b2]
        w1=w1.astype(jnp.bfloat16),
        b1=jnp.zeros((1, F), jnp.float32),
        w2=w2.astype(jnp.bfloat16),
    )


def init_params(key, cfg):
    P = (cfg["img"][0] // cfg["patch"][0]) * (cfg["img"][1] // cfg["patch"][1])
    cfg = dict(cfg, num_patches=P)
    patch_dim = 3 * cfg["patch"][0] * cfg["patch"][1]
    keys = iter(jax.random.split(key, 16 + cfg["enc_layers"] + cfg["dec_layers"]))

    def nk():
        return next(keys)

    enc = dict(
        patch_w=_xavier_uniform(nk(), (patch_dim, cfg["enc_dim"])),
        patch_b=jnp.zeros((cfg["enc_dim"],), jnp.float32),
        pos_embed=0.02 * jax.random.normal(nk(), (1, 1 + P, cfg["enc_dim"]), jnp.float32),
        cls_token=0.02 * jax.random.normal(nk(), (1, 1, cfg["enc_dim"]), jnp.float32),
        blocks=[_init_block(nk(), cfg["enc_dim"], cfg["enc_ff"])
                for _ in range(cfg["enc_layers"])],
        norm_w=jnp.ones((cfg["enc_dim"],), jnp.float32),
        norm_b=jnp.zeros((cfg["enc_dim"],), jnp.float32),
    )
    dec = dict(
        emb_w=_xavier_uniform(nk(), (cfg["enc_dim"], cfg["dec_dim"])),
        emb_b=jnp.zeros((cfg["dec_dim"],), jnp.float32),
        mask_token=0.02 * jax.random.normal(nk(), (1, 1, cfg["dec_dim"]), jnp.float32),
        pos_embed=0.02 * jax.random.normal(nk(), (1, 1 + P, cfg["dec_dim"]), jnp.float32),
        blocks=[_init_block(nk(), cfg["dec_dim"], cfg["dec_ff"])
                for _ in range(cfg["dec_layers"])],
        norm_w=jnp.ones((cfg["dec_dim"],), jnp.float32),
        norm_b=jnp.zeros((cfg["dec_dim"],), jnp.float32),
        head_w=_xavier_uniform(nk(), (cfg["dec_dim"], patch_dim)),
        head_b=jnp.zeros((patch_dim,), jnp.float32),
    )
    return dict(cfg=cfg, enc=enc, dec=dec)


# ---------------------------------------------------------------------------
# Forward pass (MAEVisionTransformer.forward)
# ---------------------------------------------------------------------------
def mae_forward(params, x_img, noise):
    cfg = params["cfg"]
    enc, dec = params["enc"], params["dec"]
    B, C = x_img.shape[0], x_img.shape[1]
    ph, pw = cfg["patch"]
    P = cfg["num_patches"]
    Hp = x_img.shape[2] // ph
    Wp = x_img.shape[3] // pw
    De, Dd = cfg["enc_dim"], cfg["dec_dim"]

    # ----- encoder: patch embedding (Conv2d stride=patch == unfold + matmul) --
    patches = x_img.reshape(B, C, Hp, ph, Wp, pw)
    patches = patches.transpose(0, 2, 4, 1, 3, 5).reshape(B, P, C * ph * pw)
    x = pallas_linear(patches.reshape(B * P, -1), enc["patch_w"], enc["patch_b"])
    x = x.reshape(B, P, De)
    x = x + enc["pos_embed"][:, 1:]

    # ----- random masking (noise supplied externally for determinism) --------
    # TODO(synk): torch uses torch.zeros(...).uniform_() internally; here the
    # uniform noise is passed in as an argument (same distribution, fixed key).
    indices = jnp.argsort(noise, axis=1)
    restore = jnp.argsort(indices, axis=1)
    keep = int(P * (1 - cfg["mask_ratio"]))
    idx_keep = indices[:, :keep]
    x = jnp.take_along_axis(x, idx_keep[:, :, None], axis=1)
    mask = jnp.ones((B, P), jnp.float32).at[:, :keep].set(0.0)
    mask = jnp.take_along_axis(mask, restore, axis=1)

    cls = jnp.broadcast_to(enc["cls_token"], (B, 1, De))
    x = jnp.concatenate([cls, x], axis=1)
    x = x + enc["pos_embed"][:, :1]

    for bp in enc["blocks"]:
        x = vit_block(x, bp, cfg["enc_heads"])
    N_enc = x.shape[1]
    x = pallas_layernorm(x.reshape(B * N_enc, De), enc["norm_w"], enc["norm_b"])
    x = x.reshape(B, N_enc, De)

    # ----- decoder -------------------------------------------------------------
    x = pallas_linear(x.reshape(B * N_enc, De), dec["emb_w"], dec["emb_b"])
    x = x.reshape(B, N_enc, Dd)
    n_mask = P + 1 - N_enc
    mask_tokens = jnp.broadcast_to(dec["mask_token"], (B, n_mask, Dd))
    cls_tok = x[:, :1]
    x_ = jnp.concatenate([x[:, 1:], mask_tokens], axis=1)          # (B, P, Dd)
    x_ = jnp.take_along_axis(x_, restore[:, :, None], axis=1)
    x = jnp.concatenate([cls_tok, x_], axis=1)                     # (B, P+1, Dd)
    x = x + dec["pos_embed"]

    for bp in dec["blocks"]:
        x = vit_block(x, bp, cfg["dec_heads"])
    Nd = x.shape[1]
    x2 = pallas_layernorm(x.reshape(B * Nd, Dd), dec["norm_w"], dec["norm_b"])
    x2 = pallas_linear(x2, dec["head_w"], dec["head_b"])
    x = x2.reshape(B, Nd, -1)
    x = x[:, 1:, :]                                                # drop cls
    return x, mask


# ---------------------------------------------------------------------------
if __name__ == "__main__":
    cfg = dict(
        patch=(4, 4), img=(16, 16), mask_ratio=0.75,
        enc_dim=32, enc_layers=2, enc_heads=4, enc_ff=64,
        dec_dim=32, dec_layers=2, dec_heads=4, dec_ff=64,
    )
    key = jax.random.PRNGKey(0)
    k_param, k_x, k_noise = jax.random.split(key, 3)

    params = init_params(k_param, cfg)
    P = params["cfg"]["num_patches"]

    x = jax.random.normal(k_x, (2, 3, 16, 16), jnp.float32)        # NCHW
    noise = jax.random.uniform(k_noise, (2, P), jnp.float32)

    fwd = jax.jit(functools.partial(mae_forward, params))
    recon, mask = fwd(x, noise)
    jax.block_until_ready(recon)
    jax.block_until_ready(mask)

    assert recon.shape == (2, P, cfg["patch"][0] * cfg["patch"][1] * 3), recon.shape
    assert mask.shape == (2, P), mask.shape
    assert bool(jnp.all(jnp.isfinite(recon)))
    print("KERNEL_OK")
</pallas_src>

<mosaic_0001>
module attributes {stable_mosaic.version = 11 : i64} {
  func.func @_linear_kernel(%arg0: i32, %arg1: memref<16x48xf32, #tpu.memory_space<vmem>>, %arg2: memref<48x32xbf16, #tpu.memory_space<vmem>>, %arg3: memref<1x32xf32, #tpu.memory_space<vmem>>, %arg4: memref<16x32xf32, #tpu.memory_space<vmem>>) attributes {dimension_semantics = [#tpu.dimension_semantics<parallel>], iteration_bounds = array<i64: 2>, scalar_prefetch = 0 : i64, scratch_operands = 0 : i64, tpu.core_type = #tpu.core_type<tc>, window_params = [{transform_indices = @transform_0, window_bounds = array<i64: 16, 48>}, {pipeline_mode = #tpu.pipeline_mode<synchronous>, transform_indices = @transform_1, window_bounds = array<i64: 48, 32>}, {pipeline_mode = #tpu.pipeline_mode<synchronous>, transform_indices = @transform_2, window_bounds = array<i64: 1, 32>}, {transform_indices = @transform_3, window_bounds = array<i64: 16, 32>}]} {
    %c0 = arith.constant 0 : index
    %c0_0 = arith.constant 0 : index
    %0 = vector.load %arg1[%c0, %c0_0] : memref<16x48xf32, #tpu.memory_space<vmem>>, vector<16x48xf32>
    %1 = arith.truncf %0 : vector<16x48xf32> to vector<16x48xbf16>
    %c0_1 = arith.constant 0 : index
    %c0_2 = arith.constant 0 : index
    %2 = vector.load %arg2[%c0_1, %c0_2] : memref<48x32xbf16, #tpu.memory_space<vmem>>, vector<48x32xbf16>
    %cst = arith.constant dense<0.000000e+00> : vector<16x32xf32>
    %3 = tpu.matmul %1, %2, %cst {dimension_numbers = #tpu.dot_dimension_numbers<[1], [0], [0], [1], [0, 0, 1, 1], [], []>} : vector<16x48xbf16>, vector<48x32xbf16>, vector<16x32xf32> -> vector<16x32xf32>
    %c0_3 = arith.constant 0 : index
    %c0_4 = arith.constant 0 : index
    %4 = vector.load %arg3[%c0_3, %c0_4] : memref<1x32xf32, #tpu.memory_space<vmem>>, vector<1x32xf32>
    %5 = vector.broadcast %4 : vector<1x32xf32> to vector<16x32xf32>
    %6 = arith.addf %3, %5 : vector<16x32xf32>
    %c0_5 = arith.constant 0 : index
    %c0_6 = arith.constant 0 : index
    %7 = vector.load %arg4[%c0_5, %c0_6] : memref<16x32xf32, #tpu.memory_space<vmem>>, vector<16x32xf32>
    tpu.vector_store %arg4[%c0_5, %c0_6], %6 {strides = array<i32>} : memref<16x32xf32, #tpu.memory_space<vmem>>, vector<16x32xf32>,
    return
  }
  func.func @transform_0(%arg0: i32) -> (i32, i32) {
    %c0_i32 = arith.constant 0 : i32
    %c0_i32_0 = arith.constant 0 : i32
    return %arg0, %c0_i32 : i32, i32
  }
  func.func @transform_1(%arg0: i32) -> (i32, i32) {
    %c0_i32 = arith.constant 0 : i32
    %c0_i32_0 = arith.constant 0 : i32
    %c0_i32_1 = arith.constant 0 : i32
    return %c0_i32, %c0_i32_0 : i32, i32
  }
  func.func @transform_2(%arg0: i32) -> (i32, i32) {
    %c0_i32 = arith.constant 0 : i32
    %c0_i32_0 = arith.constant 0 : i32
    %c0_i32_1 = arith.constant 0 : i32
    return %c0_i32, %c0_i32_0 : i32, i32
  }
  func.func @transform_3(%arg0: i32) -> (i32, i32) {
    %c0_i32 = arith.constant 0 : i32
    %c0_i32_0 = arith.constant 0 : i32
    return %arg0, %c0_i32 : i32, i32
  }
}

module attributes {stable_mosaic.version = 11 : i64} {
  func.func @_ln_linear_kernel(%arg0: i32, %arg1: memref<8x32xf32, #tpu.memory_space<vmem>>, %arg2: memref<2x32xf32, #tpu.memory_space<vmem>>, %arg3: memref<32x96xbf16, #tpu.memory_space<vmem>>, %arg4: memref<1x96xf32, #tpu.memory_space<vmem>>, %arg5: memref<8x96xf32, #tpu.memory_space<vmem>>) attributes {dimension_semantics = [#tpu.dimension_semantics<parallel>], iteration_bounds = array<i64: 2>, scalar_prefetch = 0 : i64, scratch_operands = 0 : i64, tpu.core_type = #tpu.core_type<tc>, window_params = [{transform_indices = @transform_0, window_bounds = array<i64: 8, 32>}, {pipeline_mode = #tpu.pipeline_mode<synchronous>, transform_indices = @transform_1, window_bounds = array<i64: 2, 32>}, {pipeline_mode = #tpu.pipeline_mode<synchronous>, transform_indices = @transform_2, window_bounds = array<i64: 32, 96>}, {pipeline_mode = #tpu.pipeline_mode<synchronous>, transform_indices = @transform_3, window_bounds = array<i64: 1, 96>}, {transform_indices = @transform_4, window_bounds = array<i64: 8, 96>}]} {
    %c0 = arith.constant 0 : index
    %c0_0 = arith.constant 0 : index
    %0 = vector.load %arg1[%c0, %c0_0] : memref<8x32xf32, #tpu.memory_space<vmem>>, vector<8x32xf32>
    %c0_1 = arith.constant 0 : index
    %c0_2 = arith.constant 0 : index
    %1 = vector.load %arg2[%c0_1, %c0_2] : memref<2x32xf32, #tpu.memory_space<vmem>>, vector<1x32xf32>
    %c1 = arith.constant 1 : index
    %c0_3 = arith.constant 0 : index
    %2 = vector.load %arg2[%c1, %c0_3] : memref<2x32xf32, #tpu.memory_space<vmem>>, vector<1x32xf32>
    %cst = arith.constant dense<0.000000e+00> : vector<8xf32>
    %3 = vector.multi_reduction <add>, %0, %cst [1] : vector<8x32xf32> to vector<8xf32>
    %4 = vector.shape_cast %3 : vector<8xf32> to vector<8x1xf32>
    %cst_4 = arith.constant 3.200000e+01 : f32
    %5 = vector.broadcast %cst_4 : f32 to vector<8x1xf32>
    %6 = arith.divf %4, %5 : vector<8x1xf32>
    %7 = vector.broadcast %6 : vector<8x1xf32> to vector<8x32xf32>
    %8 = arith.subf %0, %7 : vector<8x32xf32>
    %9 = arith.mulf %8, %8 : vector<8x32xf32>
    %cst_5 = arith.constant dense<0.000000e+00> : vector<8xf32>
    %10 = vector.multi_reduction <add>, %9, %cst_5 [1] : vector<8x32xf32> to vector<8xf32>
    %11 = vector.shape_cast %10 : vector<8xf32> to vector<8x1xf32>
    %cst_6 = arith.constant 3.200000e+01 : f32
    %12 = vector.broadcast %cst_6 : f32 to vector<8x1xf32>
    %13 = arith.divf %11, %12 : vector<8x1xf32>
    %14 = vector.broadcast %6 : vector<8x1xf32> to vector<8x32xf32>
    %15 = arith.subf %0, %14 : vector<8x32xf32>
    %cst_7 = arith.constant 9.99999974E-6 : f32
    %16 = vector.broadcast %cst_7 : f32 to vector<8x1xf32>
    %17 = arith.addf %13, %16 : vector<8x1xf32>
    %18 = math.rsqrt %17 : vector<8x1xf32>
    %19 = vector.broadcast %18 : vector<8x1xf32> to vector<8x32xf32>
    %20 = arith.mulf %15, %19 : vector<8x32xf32>
    %21 = vector.broadcast %1 : vector<1x32xf32> to vector<8x32xf32>
    %22 = arith.mulf %20, %21 : vector<8x32xf32>
    %23 = vector.broadcast %2 : vector<1x32xf32> to vector<8x32xf32>
    %24 = arith.addf %22, %23 : vector<8x32xf32>
    %25 = arith.truncf %24 : vector<8x32xf32> to vector<8x32xbf16>
    %c0_8 = arith.constant 0 : index
    %c0_9 = arith.constant 0 : index
    %26 = vector.load %arg3[%c0_8, %c0_9] : memref<32x96xbf16, #tpu.memory_space<vmem>>, vector<32x96xbf16>
    %cst_10 = arith.constant dense<0.000000e+00> : vector<8x96xf32>
    %27 = tpu.matmul %25, %26, %cst_10 {dimension_numbers = #tpu.dot_dimension_numbers<[1], [0], [0], [1], [0, 0, 1, 1], [], []>} : vector<8x32xbf16>, vector<32x96xbf16>, vector<8x96xf32> -> vector<8x96xf32>
    %c0_11 = arith.constant 0 : index
    %c0_12 = arith.constant 0 : index
    %28 = vector.load %arg4[%c0_11, %c0_12] : memref<1x96xf32, #tpu.memory_space<vmem>>, vector<1x96xf32>
    %29 = vector.broadcast %28 : vector<1x96xf32> to vector<8x96xf32>
    %30 = arith.addf %27, %29 : vector<8x96xf32>
    %c0_13 = arith.constant 0 : index
    %c0_14 = arith.constant 0 : index
    %31 = vector.load %arg5[%c0_13, %c0_14] : memref<8x96xf32, #tpu.memory_space<vmem>>, vector<8x96xf32>
    tpu.vector_store %arg5[%c0_13, %c0_14], %30 {strides = array<i32>} : memref<8x96xf32, #tpu.memory_space<vmem>>, vector<8x96xf32>,
    return
  }
  func.func @transform_0(%arg0: i32) -> (i32, i32) {
    %c0_i32 = arith.constant 0 : i32
    %c0_i32_0 = arith.constant 0 : i32
    return %arg0, %c0_i32 : i32, i32
  }
  func.func @transform_1(%arg0: i32) -> (i32, i32) {
    %c0_i32 = arith.constant 0 : i32
    %c0_i32_0 = arith.constant 0 : i32
    %c0_i32_1 = arith.constant 0 : i32
    return %c0_i32, %c0_i32_0 : i32, i32
  }
  func.func @transform_2(%arg0: i32) -> (i32, i32) {
    %c0_i32 = arith.constant 0 : i32
    %c0_i32_0 = arith.constant 0 : i32
    %c0_i32_1 = arith.constant 0 : i32
    return %c0_i32, %c0_i32_0 : i32, i32
  }
  func.func @transform_3(%arg0: i32) -> (i32, i32) {
    %c0_i32 = arith.constant 0 : i32
    %c0_i32_0 = arith.constant 0 : i32
    %c0_i32_1 = arith.constant 0 : i32
    return %c0_i32, %c0_i32_0 : i32, i32
  }
  func.func @transform_4(%arg0: i32) -> (i32, i32) {
    %c0_i32 = arith.constant 0 : i32
    %c0_i32_0 = arith.constant 0 : i32
    return %arg0, %c0_i32 : i32, i32
  }
}

module attributes {stable_mosaic.version = 11 : i64} {
  func.func @_layernorm_kernel(%arg0: i32, %arg1: memref<8x32xf32, #tpu.memory_space<vmem>>, %arg2: memref<2x32xf32, #tpu.memory_space<vmem>>, %arg3: memref<8x32xf32, #tpu.memory_space<vmem>>) attributes {dimension_semantics = [#tpu.dimension_semantics<parallel>], iteration_bounds = array<i64: 2>, scalar_prefetch = 0 : i64, scratch_operands = 0 : i64, tpu.core_type = #tpu.core_type<tc>, window_params = [{transform_indices = @transform_0, window_bounds = array<i64: 8, 32>}, {pipeline_mode = #tpu.pipeline_mode<synchronous>, transform_indices = @transform_1, window_bounds = array<i64: 2, 32>}, {transform_indices = @transform_2, window_bounds = array<i64: 8, 32>}]} {
    %c0 = arith.constant 0 : index
    %c0_0 = arith.constant 0 : index
    %0 = vector.load %arg1[%c0, %c0_0] : memref<8x32xf32, #tpu.memory_space<vmem>>, vector<8x32xf32>
    %c0_1 = arith.constant 0 : index
    %c0_2 = arith.constant 0 : index
    %1 = vector.load %arg2[%c0_1, %c0_2] : memref<2x32xf32, #tpu.memory_space<vmem>>, vector<1x32xf32>
    %c1 = arith.constant 1 : index
    %c0_3 = arith.constant 0 : index
    %2 = vector.load %arg2[%c1, %c0_3] : memref<2x32xf32, #tpu.memory_space<vmem>>, vector<1x32xf32>
    %cst = arith.constant dense<0.000000e+00> : vector<8xf32>
    %3 = vector.multi_reduction <add>, %0, %cst [1] : vector<8x32xf32> to vector<8xf32>
    %4 = vector.shape_cast %3 : vector<8xf32> to vector<8x1xf32>
    %cst_4 = arith.constant 3.200000e+01 : f32
    %5 = vector.broadcast %cst_4 : f32 to vector<8x1xf32>
    %6 = arith.divf %4, %5 : vector<8x1xf32>
    %7 = vector.broadcast %6 : vector<8x1xf32> to vector<8x32xf32>
    %8 = arith.subf %0, %7 : vector<8x32xf32>
    %9 = arith.mulf %8, %8 : vector<8x32xf32>
    %cst_5 = arith.constant dense<0.000000e+00> : vector<8xf32>
    %10 = vector.multi_reduction <add>, %9, %cst_5 [1] : vector<8x32xf32> to vector<8xf32>
    %11 = vector.shape_cast %10 : vector<8xf32> to vector<8x1xf32>
    %cst_6 = arith.constant 3.200000e+01 : f32
    %12 = vector.broadcast %cst_6 : f32 to vector<8x1xf32>
    %13 = arith.divf %11, %12 : vector<8x1xf32>
    %14 = vector.broadcast %6 : vector<8x1xf32> to vector<8x32xf32>
    %15 = arith.subf %0, %14 : vector<8x32xf32>
    %cst_7 = arith.constant 9.99999974E-6 : f32
    %16 = vector.broadcast %cst_7 : f32 to vector<8x1xf32>
    %17 = arith.addf %13, %16 : vector<8x1xf32>
    %18 = math.rsqrt %17 : vector<8x1xf32>
    %19 = vector.broadcast %18 : vector<8x1xf32> to vector<8x32xf32>
    %20 = arith.mulf %15, %19 : vector<8x32xf32>
    %21 = vector.broadcast %1 : vector<1x32xf32> to vector<8x32xf32>
    %22 = arith.mulf %20, %21 : vector<8x32xf32>
    %23 = vector.broadcast %2 : vector<1x32xf32> to vector<8x32xf32>
    %24 = arith.addf %22, %23 : vector<8x32xf32>
    %c0_8 = arith.constant 0 : index
    %c0_9 = arith.constant 0 : index
    %25 = vector.load %arg3[%c0_8, %c0_9] : memref<8x32xf32, #tpu.memory_space<vmem>>, vector<8x32xf32>
    tpu.vector_store %arg3[%c0_8, %c0_9], %24 {strides = array<i32>} : memref<8x32xf32, #tpu.memory_space<vmem>>, vector<8x32xf32>,
    return
  }
  func.func @transform_0(%arg0: i32) -> (i32, i32) {
    %c0_i32 = arith.constant 0 : i32
    %c0_i32_0 = arith.constant 0 : i32
    return %arg0, %c0_i32 : i32, i32
  }
  func.func @transform_1(%arg0: i32) -> (i32, i32) {
    %c0_i32 = arith.constant 0 : i32
    %c0_i32_0 = arith.constant 0 : i32
    %c0_i32_1 = arith.constant 0 : i32
    return %c0_i32, %c0_i32_0 : i32, i32
  }
  func.func @transform_2(%arg0: i32) -> (i32, i32) {
    %c0_i32 = arith.constant 0 : i32
    %c0_i32_0 = arith.constant 0 : i32
    return %arg0, %c0_i32 : i32, i32
  }
}

module attributes {stable_mosaic.version = 11 : i64} {
  func.func @_attention_kernel(%arg0: i32, %arg1: memref<1x4x5x8xf32, #tpu.memory_space<vmem>>, %arg2: memref<1x4x5x8xf32, #tpu.memory_space<vmem>>, %arg3: memref<1x4x5x8xf32, #tpu.memory_space<vmem>>, %arg4: memref<1x4x5x8xf32, #tpu.memory_space<vmem>>) attributes {dimension_semantics = [#tpu.dimension_semantics<parallel>], iteration_bounds = array<i64: 2>, scalar_prefetch = 0 : i64, scratch_operands = 0 : i64, tpu.core_type = #tpu.core_type<tc>, window_params = [{transform_indices = @transform_0, window_bounds = array<i64: 1, 4, 5, 8>}, {transform_indices = @transform_1, window_bounds = array<i64: 1, 4, 5, 8>}, {transform_indices = @transform_2, window_bounds = array<i64: 1, 4, 5, 8>}, {transform_indices = @transform_3, window_bounds = array<i64: 1, 4, 5, 8>}]} {
    %c0 = arith.constant 0 : index
    %c0_0 = arith.constant 0 : index
    %c0_1 = arith.constant 0 : index
    %c0_2 = arith.constant 0 : index
    %0 = vector.load %arg1[%c0, %c0_0, %c0_1, %c0_2] : memref<1x4x5x8xf32, #tpu.memory_space<vmem>>, vector<1x4x5x8xf32>
    %1 = vector.shape_cast %0 : vector<1x4x5x8xf32> to vector<4x5x8xf32>
    %2 = arith.truncf %1 : vector<4x5x8xf32> to vector<4x5x8xbf16>
    %c0_3 = arith.constant 0 : index
    %c0_4 = arith.constant 0 : index
    %c0_5 = arith.constant 0 : index
    %c0_6 = arith.constant 0 : index
    %3 = vector.load %arg2[%c0_3, %c0_4, %c0_5, %c0_6] : memref<1x4x5x8xf32, #tpu.memory_space<vmem>>, vector<1x4x5x8xf32>
    %4 = vector.shape_cast %3 : vector<1x4x5x8xf32> to vector<4x5x8xf32>
    %5 = arith.truncf %4 : vector<4x5x8xf32> to vector<4x5x8xbf16>
    %c0_7 = arith.constant 0 : index
    %c0_8 = arith.constant 0 : index
    %c0_9 = arith.constant 0 : index
    %c0_10 = arith.constant 0 : index
    %6 = vector.load %arg3[%c0_7, %c0_8, %c0_9, %c0_10] : memref<1x4x5x8xf32, #tpu.memory_space<vmem>>, vector<1x4x5x8xf32>
    %7 = vector.shape_cast %6 : vector<1x4x5x8xf32> to vector<4x5x8xf32>
    %8 = arith.truncf %7 : vector<4x5x8xf32> to vector<4x5x8xbf16>
    "tpu.trace_start"() <{level = 10 : i32, message = "hnd,hmd->hnm"}> : () -> ()
    %cst = arith.constant dense<0.000000e+00> : vector<4x5x5xf32>
    %9 = tpu.matmul %2, %5, %cst {dimension_numbers = #tpu.dot_dimension_numbers<[2], [2], [1], [1], [0, 0, 0, 1, 1, 1], [0], [0]>} : vector<4x5x8xbf16>, vector<4x5x8xbf16>, vector<4x5x5xf32> -> vector<4x5x5xf32>
    "tpu.trace_stop"() : () -> ()
    %cst_11 = arith.constant 0.353553385 : f32
    %10 = vector.broadcast %cst_11 : f32 to vector<4x5x5xf32>
    %11 = arith.mulf %9, %10 : vector<4x5x5xf32>
    %cst_12 = arith.constant dense<0xFF800000> : vector<4x5xf32>
    %12 = vector.multi_reduction <maximumf>, %11, %cst_12 [2] : vector<4x5x5xf32> to vector<4x5xf32>
    %13 = vector.shape_cast %12 : vector<4x5xf32> to vector<4x5x1xf32>
    %14 = vector.broadcast %13 : vector<4x5x1xf32> to vector<4x5x5xf32>
    %15 = arith.subf %11, %14 : vector<4x5x5xf32>
    %16 = math.exp %15 : vector<4x5x5xf32>
    %cst_13 = arith.constant dense<0.000000e+00> : vector<4x5xf32>
    %17 = vector.multi_reduction <add>, %16, %cst_13 [2] : vector<4x5x5xf32> to vector<4x5xf32>
    %18 = vector.shape_cast %17 : vector<4x5xf32> to vector<4x5x1xf32>
    %19 = tpu.reciprocal %18 {approx = true} : vector<4x5x1xf32> -> vector<4x5x1xf32>
    %20 = vector.broadcast %19 : vector<4x5x1xf32> to vector<4x5x5xf32>
    %21 = arith.mulf %16, %20 : vector<4x5x5xf32>
    %22 = arith.truncf %21 : vector<4x5x5xf32> to vector<4x5x5xbf16>
    "tpu.trace_start"() <{level = 10 : i32, message = "hnm,hmd->hnd"}> : () -> ()
    %cst_14 = arith.constant dense<0.000000e+00> : vector<4x5x8xf32>
    %23 = tpu.matmul %22, %8, %cst_14 {dimension_numbers = #tpu.dot_dimension_numbers<[2], [1], [1], [2], [0, 0, 0, 1, 1, 2], [0], [0]>} : vector<4x5x5xbf16>, vector<4x5x8xbf16>, vector<4x5x8xf32> -> vector<4x5x8xf32>
    "tpu.trace_stop"() : () -> ()
    %c0_15 = arith.constant 0 : index
    %c0_16 = arith.constant 0 : index
    %c0_17 = arith.constant 0 : index
    %c0_18 = arith.constant 0 : index
    %24 = vector.load %arg4[%c0_15, %c0_16, %c0_17, %c0_18] : memref<1x4x5x8xf32, #tpu.memory_space<vmem>>, vector<1x4x5x8xf32>
    %25 = vector.shape_cast %24 : vector<1x4x5x8xf32> to vector<4x5x8xf32>
    %26 = vector.shape_cast %23 : vector<4x5x8xf32> to vector<1x4x5x8xf32>
    tpu.vector_store %arg4[%c0_15, %c0_16, %c0_17, %c0_18], %26 {strides = array<i32>} : memref<1x4x5x8xf32, #tpu.memory_space<vmem>>, vector<1x4x5x8xf32>,
    return
  }
  func.func @transform_0(%arg0: i32) -> (i32, i32, i32, i32) {
    %c0_i32 = arith.constant 0 : i32
    %c0_i32_0 = arith.constant 0 : i32
    %c0_i32_1 = arith.constant 0 : i32
    %c0_i32_2 = arith.constant 0 : i32
    return %arg0, %c0_i32, %c0_i32_0, %c0_i32_1 : i32, i32, i32, i32
  }
  func.func @transform_1(%arg0: i32) -> (i32, i32, i32, i32) {
    %c0_i32 = arith.constant 0 : i32
    %c0_i32_0 = arith.constant 0 : i32
    %c0_i32_1 = arith.constant 0 : i32
    %c0_i32_2 = arith.constant 0 : i32
    return %arg0, %c0_i32, %c0_i32_0, %c0_i32_1 : i32, i32, i32, i32
  }
  func.func @transform_2(%arg0: i32) -> (i32, i32, i32, i32) {
    %c0_i32 = arith.constant 0 : i32
    %c0_i32_0 = arith.constant 0 : i32
    %c0_i32_1 = arith.constant 0 : i32
    %c0_i32_2 = arith.constant 0 : i32
    return %arg0, %c0_i32, %c0_i32_0, %c0_i32_1 : i32, i32, i32, i32
  }
  func.func @transform_3(%arg0: i32) -> (i32, i32, i32, i32) {
    %c0_i32 = arith.constant 0 : i32
    %c0_i32_0 = arith.constant 0 : i32
    %c0_i32_1 = arith.constant 0 : i32
    %c0_i32_2 = arith.constant 0 : i32
    return %arg0, %c0_i32, %c0_i32_0, %c0_i32_1 : i32, i32, i32, i32
  }
}

module attributes {stable_mosaic.version = 11 : i64} {
  func.func @_out_mlp_kernel(%arg0: i32, %arg1: memref<8x32xf32, #tpu.memory_space<vmem>>, %arg2: memref<8x32xf32, #tpu.memory_space<vmem>>, %arg3: memref<32x32xbf16, #tpu.memory_space<vmem>>, %arg4: memref<4x32xf32, #tpu.memory_space<vmem>>, %arg5: memref<32x64xbf16, #tpu.memory_space<vmem>>, %arg6: memref<1x64xf32, #tpu.memory_space<vmem>>, %arg7: memref<64x32xbf16, #tpu.memory_space<vmem>>, %arg8: memref<8x32xf32, #tpu.memory_space<vmem>>) attributes {dimension_semantics = [#tpu.dimension_semantics<parallel>], iteration_bounds = array<i64: 2>, scalar_prefetch = 0 : i64, scratch_operands = 0 : i64, tpu.core_type = #tpu.core_type<tc>, window_params = [{transform_indices = @transform_0, window_bounds = array<i64: 8, 32>}, {transform_indices = @transform_1, window_bounds = array<i64: 8, 32>}, {pipeline_mode = #tpu.pipeline_mode<synchronous>, transform_indices = @transform_2, window_bounds = array<i64: 32, 32>}, {pipeline_mode = #tpu.pipeline_mode<synchronous>, transform_indices = @transform_3, window_bounds = array<i64: 4, 32>}, {pipeline_mode = #tpu.pipeline_mode<synchronous>, transform_indices = @transform_4, window_bounds = array<i64: 32, 64>}, {pipeline_mode = #tpu.pipeline_mode<synchronous>, transform_indices = @transform_5, window_bounds = array<i64: 1, 64>}, {pipeline_mode = #tpu.pipeline_mode<synchronous>, transform_indices = @transform_6, window_bounds = array<i64: 64, 32>}, {transform_indices = @transform_7, window_bounds = array<i64: 8, 32>}]} {
    %c0 = arith.constant 0 : index
    %c0_0 = arith.constant 0 : index
    %0 = vector.load %arg4[%c0, %c0_0] : memref<4x32xf32, #tpu.memory_space<vmem>>, vector<1x32xf32>
    %c1 = arith.constant 1 : index
    %c0_1 = arith.constant 0 : index
    %1 = vector.load %arg4[%c1, %c0_1] : memref<4x32xf32, #tpu.memory_space<vmem>>, vector<1x32xf32>
    %c2 = arith.constant 2 : index
    %c0_2 = arith.constant 0 : index
    %2 = vector.load %arg4[%c2, %c0_2] : memref<4x32xf32, #tpu.memory_space<vmem>>, vector<1x32xf32>
    %c3 = arith.constant 3 : index
    %c0_3 = arith.constant 0 : index
    %3 = vector.load %arg4[%c3, %c0_3] : memref<4x32xf32, #tpu.memory_space<vmem>>, vector<1x32xf32>
    %c0_4 = arith.constant 0 : index
    %c0_5 = arith.constant 0 : index
    %4 = vector.load %arg1[%c0_4, %c0_5] : memref<8x32xf32, #tpu.memory_space<vmem>>, vector<8x32xf32>
    %c0_6 = arith.constant 0 : index
    %c0_7 = arith.constant 0 : index
    %5 = vector.load %arg2[%c0_6, %c0_7] : memref<8x32xf32, #tpu.memory_space<vmem>>, vector<8x32xf32>
    %6 = arith.truncf %5 : vector<8x32xf32> to vector<8x32xbf16>
    %c0_8 = arith.constant 0 : index
    %c0_9 = arith.constant 0 : index
    %7 = vector.load %arg3[%c0_8, %c0_9] : memref<32x32xbf16, #tpu.memory_space<vmem>>, vector<32x32xbf16>
    %cst = arith.constant dense<0.000000e+00> : vector<8x32xf32>
    %8 = tpu.matmul %6, %7, %cst {dimension_numbers = #tpu.dot_dimension_numbers<[1], [0], [0], [1], [0, 0, 1, 1], [], []>} : vector<8x32xbf16>, vector<32x32xbf16>, vector<8x32xf32> -> vector<8x32xf32>
    %9 = arith.addf %4, %8 : vector<8x32xf32>
    %10 = vector.broadcast %0 : vector<1x32xf32> to vector<8x32xf32>
    %11 = arith.addf %9, %10 : vector<8x32xf32>
    %cst_10 = arith.constant dense<0.000000e+00> : vector<8xf32>
    %12 = vector.multi_reduction <add>, %11, %cst_10 [1] : vector<8x32xf32> to vector<8xf32>
    %13 = vector.shape_cast %12 : vector<8xf32> to vector<8x1xf32>
    %cst_11 = arith.constant 3.200000e+01 : f32
    %14 = vector.broadcast %cst_11 : f32 to vector<8x1xf32>
    %15 = arith.divf %13, %14 : vector<8x1xf32>
    %16 = vector.broadcast %15 : vector<8x1xf32> to vector<8x32xf32>
    %17 = arith.subf %11, %16 : vector<8x32xf32>
    %18 = arith.mulf %17, %17 : vector<8x32xf32>
    %cst_12 = arith.constant dense<0.000000e+00> : vector<8xf32>
    %19 = vector.multi_reduction <add>, %18, %cst_12 [1] : vector<8x32xf32> to vector<8xf32>
    %20 = vector.shape_cast %19 : vector<8xf32> to vector<8x1xf32>
    %cst_13 = arith.constant 3.200000e+01 : f32
    %21 = vector.broadcast %cst_13 : f32 to vector<8x1xf32>
    %22 = arith.divf %20, %21 : vector<8x1xf32>
    %23 = vector.broadcast %15 : vector<8x1xf32> to vector<8x32xf32>
    %24 = arith.subf %11, %23 : vector<8x32xf32>
    %cst_14 = arith.constant 9.99999974E-6 : f32
    %25 = vector.broadcast %cst_14 : f32 to vector<8x1xf32>
    %26 = arith.addf %22, %25 : vector<8x1xf32>
    %27 = math.rsqrt %26 : vector<8x1xf32>
    %28 = vector.broadcast %27 : vector<8x1xf32> to vector<8x32xf32>
    %29 = arith.mulf %24, %28 : vector<8x32xf32>
    %30 = vector.broadcast %1 : vector<1x32xf32> to vector<8x32xf32>
    %31 = arith.mulf %29, %30 : vector<8x32xf32>
    %32 = vector.broadcast %2 : vector<1x32xf32> to vector<8x32xf32>
    %33 = arith.addf %31, %32 : vector<8x32xf32>
    %34 = arith.truncf %33 : vector<8x32xf32> to vector<8x32xbf16>
    %c0_15 = arith.constant 0 : index
    %c0_16 = arith.constant 0 : index
    %35 = vector.load %arg5[%c0_15, %c0_16] : memref<32x64xbf16, #tpu.memory_space<vmem>>, vector<32x64xbf16>
    %cst_17 = arith.constant dense<0.000000e+00> : vector<8x64xf32>
    %36 = tpu.matmul %34, %35, %cst_17 {dimension_numbers = #tpu.dot_dimension_numbers<[1], [0], [0], [1], [0, 0, 1, 1], [], []>} : vector<8x32xbf16>, vector<32x64xbf16>, vector<8x64xf32> -> vector<8x64xf32>
    %c0_18 = arith.constant 0 : index
    %c0_19 = arith.constant 0 : index
    %37 = vector.load %arg6[%c0_18, %c0_19] : memref<1x64xf32, #tpu.memory_space<vmem>>, vector<1x64xf32>
    %38 = vector.broadcast %37 : vector<1x64xf32> to vector<8x64xf32>
    %39 = arith.addf %36, %38 : vector<8x64xf32>
    %40 = arith.mulf %39, %39 : vector<8x64xf32>
    %41 = arith.mulf %39, %40 : vector<8x64xf32>
    %cst_20 = arith.constant 4.471500e-02 : f32
    %42 = vector.broadcast %cst_20 : f32 to vector<8x64xf32>
    %43 = arith.mulf %42, %41 : vector<8x64xf32>
    %44 = arith.addf %39, %43 : vector<8x64xf32>
    %cst_21 = arith.constant 0.797884583 : f32
    %45 = vector.broadcast %cst_21 : f32 to vector<8x64xf32>
    %46 = arith.mulf %45, %44 : vector<8x64xf32>
    %47 = math.tanh %46 : vector<8x64xf32>
    %cst_22 = arith.constant 1.000000e+00 : f32
    %48 = vector.broadcast %cst_22 : f32 to vector<8x64xf32>
    %49 = arith.addf %48, %47 : vector<8x64xf32>
    %cst_23 = arith.constant 5.000000e-01 : f32
    %50 = vector.broadcast %cst_23 : f32 to vector<8x64xf32>
    %51 = arith.mulf %50, %49 : vector<8x64xf32>
    %52 = arith.mulf %39, %51 : vector<8x64xf32>
    %53 = arith.truncf %52 : vector<8x64xf32> to vector<8x64xbf16>
    %c0_24 = arith.constant 0 : index
    %c0_25 = arith.constant 0 : index
    %54 = vector.load %arg7[%c0_24, %c0_25] : memref<64x32xbf16, #tpu.memory_space<vmem>>, vector<64x32xbf16>
    %cst_26 = arith.constant dense<0.000000e+00> : vector<8x32xf32>
    %55 = tpu.matmul %53, %54, %cst_26 {dimension_numbers = #tpu.dot_dimension_numbers<[1], [0], [0], [1], [0, 0, 1, 1], [], []>} : vector<8x64xbf16>, vector<64x32xbf16>, vector<8x32xf32> -> vector<8x32xf32>
    %56 = arith.addf %11, %55 : vector<8x32xf32>
    %57 = vector.broadcast %3 : vector<1x32xf32> to vector<8x32xf32>
    %58 = arith.addf %56, %57 : vector<8x32xf32>
    %c0_27 = arith.constant 0 : index
    %c0_28 = arith.constant 0 : index
    %59 = vector.load %arg8[%c0_27, %c0_28] : memref<8x32xf32, #tpu.memory_space<vmem>>, vector<8x32xf32>
    tpu.vector_store %arg8[%c0_27, %c0_28], %58 {strides = array<i32>} : memref<8x32xf32, #tpu.memory_space<vmem>>, vector<8x32xf32>,
    return
  }
  func.func @transform_0(%arg0: i32) -> (i32, i32) {
    %c0_i32 = arith.constant 0 : i32
    %c0_i32_0 = arith.constant 0 : i32
    return %arg0, %c0_i32 : i32, i32
  }
  func.func @transform_1(%arg0: i32) -> (i32, i32) {
    %c0_i32 = arith.constant 0 : i32
    %c0_i32_0 = arith.constant 0 : i32
    return %arg0, %c0_i32 : i32, i32
  }
  func.func @transform_2(%arg0: i32) -> (i32, i32) {
    %c0_i32 = arith.constant 0 : i32
    %c0_i32_0 = arith.constant 0 : i32
    %c0_i32_1 = arith.constant 0 : i32
    return %c0_i32, %c0_i32_0 : i32, i32
  }
  func.func @transform_3(%arg0: i32) -> (i32, i32) {
    %c0_i32 = arith.constant 0 : i32
    %c0_i32_0 = arith.constant 0 : i32
    %c0_i32_1 = arith.constant 0 : i32
    return %c0_i32, %c0_i32_0 : i32, i32
  }
  func.func @transform_4(%arg0: i32) -> (i32, i32) {
    %c0_i32 = arith.constant 0 : i32
    %c0_i32_0 = arith.constant 0 : i32
    %c0_i32_1 = arith.constant 0 : i32
    return %c0_i32, %c0_i32_0 : i32, i32
  }
  func.func @transform_5(%arg0: i32) -> (i32, i32) {
    %c0_i32 = arith.constant 0 : i32
    %c0_i32_0 = arith.constant 0 : i32
    %c0_i32_1 = arith.constant 0 : i32
    return %c0_i32, %c0_i32_0 : i32, i32
  }
  func.func @transform_6(%arg0: i32) -> (i32, i32) {
    %c0_i32 = arith.constant 0 : i32
    %c0_i32_0 = arith.constant 0 : i32
    %c0_i32_1 = arith.constant 0 : i32
    return %c0_i32, %c0_i32_0 : i32, i32
  }
  func.func @transform_7(%arg0: i32) -> (i32, i32) {
    %c0_i32 = arith.constant 0 : i32
    %c0_i32_0 = arith.constant 0 : i32
    return %arg0, %c0_i32 : i32, i32
  }
}

module attributes {stable_mosaic.version = 11 : i64} {
  func.func @_linear_kernel(%arg0: i32, %arg1: memref<8x32xf32, #tpu.memory_space<vmem>>, %arg2: memref<32x32xbf16, #tpu.memory_space<vmem>>, %arg3: memref<1x32xf32, #tpu.memory_space<vmem>>, %arg4: memref<8x32xf32, #tpu.memory_space<vmem>>) attributes {dimension_semantics = [#tpu.dimension_semantics<parallel>], iteration_bounds = array<i64: 2>, scalar_prefetch = 0 : i64, scratch_operands = 0 : i64, tpu.core_type = #tpu.core_type<tc>, window_params = [{transform_indices = @transform_0, window_bounds = array<i64: 8, 32>}, {pipeline_mode = #tpu.pipeline_mode<synchronous>, transform_indices = @transform_1, window_bounds = array<i64: 32, 32>}, {pipeline_mode = #tpu.pipeline_mode<synchronous>, transform_indices = @transform_2, window_bounds = array<i64: 1, 32>}, {transform_indices = @transform_3, window_bounds = array<i64: 8, 32>}]} {
    %c0 = arith.constant 0 : index
    %c0_0 = arith.constant 0 : index
    %0 = vector.load %arg1[%c0, %c0_0] : memref<8x32xf32, #tpu.memory_space<vmem>>, vector<8x32xf32>
    %1 = arith.truncf %0 : vector<8x32xf32> to vector<8x32xbf16>
    %c0_1 = arith.constant 0 : index
    %c0_2 = arith.constant 0 : index
    %2 = vector.load %arg2[%c0_1, %c0_2] : memref<32x32xbf16, #tpu.memory_space<vmem>>, vector<32x32xbf16>
    %cst = arith.constant dense<0.000000e+00> : vector<8x32xf32>
    %3 = tpu.matmul %1, %2, %cst {dimension_numbers = #tpu.dot_dimension_numbers<[1], [0], [0], [1], [0, 0, 1, 1], [], []>} : vector<8x32xbf16>, vector<32x32xbf16>, vector<8x32xf32> -> vector<8x32xf32>
    %c0_3 = arith.constant 0 : index
    %c0_4 = arith.constant 0 : index
    %4 = vector.load %arg3[%c0_3, %c0_4] : memref<1x32xf32, #tpu.memory_space<vmem>>, vector<1x32xf32>
    %5 = vector.broadcast %4 : vector<1x32xf32> to vector<8x32xf32>
    %6 = arith.addf %3, %5 : vector<8x32xf32>
    %c0_5 = arith.constant 0 : index
    %c0_6 = arith.constant 0 : index
    %7 = vector.load %arg4[%c0_5, %c0_6] : memref<8x32xf32, #tpu.memory_space<vmem>>, vector<8x32xf32>
    tpu.vector_store %arg4[%c0_5, %c0_6], %6 {strides = array<i32>} : memref<8x32xf32, #tpu.memory_space<vmem>>, vector<8x32xf32>,
    return
  }
  func.func @transform_0(%arg0: i32) -> (i32, i32) {
    %c0_i32 = arith.constant 0 : i32
    %c0_i32_0 = arith.constant 0 : i32
    return %arg0, %c0_i32 : i32, i32
  }
  func.func @transform_1(%arg0: i32) -> (i32, i32) {
    %c0_i32 = arith.constant 0 : i32
    %c0_i32_0 = arith.constant 0 : i32
    %c0_i32_1 = arith.constant 0 : i32
    return %c0_i32, %c0_i32_0 : i32, i32
  }
  func.func @transform_2(%arg0: i32) -> (i32, i32) {
    %c0_i32 = arith.constant 0 : i32
    %c0_i32_0 = arith.constant 0 : i32
    %c0_i32_1 = arith.constant 0 : i32
    return %c0_i32, %c0_i32_0 : i32, i32
  }
  func.func @transform_3(%arg0: i32) -> (i32, i32) {
    %c0_i32 = arith.constant 0 : i32
    %c0_i32_0 = arith.constant 0 : i32
    return %arg0, %c0_i32 : i32, i32
  }
}

module attributes {stable_mosaic.version = 11 : i64} {
  func.func @_ln_linear_kernel(%arg0: i32, %arg1: memref<24x32xf32, #tpu.memory_space<vmem>>, %arg2: memref<2x32xf32, #tpu.memory_space<vmem>>, %arg3: memref<32x96xbf16, #tpu.memory_space<vmem>>, %arg4: memref<1x96xf32, #tpu.memory_space<vmem>>, %arg5: memref<24x96xf32, #tpu.memory_space<vmem>>) attributes {dimension_semantics = [#tpu.dimension_semantics<parallel>], iteration_bounds = array<i64: 2>, scalar_prefetch = 0 : i64, scratch_operands = 0 : i64, tpu.core_type = #tpu.core_type<tc>, window_params = [{transform_indices = @transform_0, window_bounds = array<i64: 24, 32>}, {pipeline_mode = #tpu.pipeline_mode<synchronous>, transform_indices = @transform_1, window_bounds = array<i64: 2, 32>}, {pipeline_mode = #tpu.pipeline_mode<synchronous>, transform_indices = @transform_2, window_bounds = array<i64: 32, 96>}, {pipeline_mode = #tpu.pipeline_mode<synchronous>, transform_indices = @transform_3, window_bounds = array<i64: 1, 96>}, {transform_indices = @transform_4, window_bounds = array<i64: 24, 96>}]} {
    %c0 = arith.constant 0 : index
    %c0_0 = arith.constant 0 : index
    %0 = vector.load %arg1[%c0, %c0_0] : memref<24x32xf32, #tpu.memory_space<vmem>>, vector<24x32xf32>
    %c0_1 = arith.constant 0 : index
    %c0_2 = arith.constant 0 : index
    %1 = vector.load %arg2[%c0_1, %c0_2] : memref<2x32xf32, #tpu.memory_space<vmem>>, vector<1x32xf32>
    %c1 = arith.constant 1 : index
    %c0_3 = arith.constant 0 : index
    %2 = vector.load %arg2[%c1, %c0_3] : memref<2x32xf32, #tpu.memory_space<vmem>>, vector<1x32xf32>
    %cst = arith.constant dense<0.000000e+00> : vector<24xf32>
    %3 = vector.multi_reduction <add>, %0, %cst [1] : vector<24x32xf32> to vector<24xf32>
    %4 = vector.shape_cast %3 : vector<24xf32> to vector<24x1xf32>
    %cst_4 = arith.constant 3.200000e+01 : f32
    %5 = vector.broadcast %cst_4 : f32 to vector<24x1xf32>
    %6 = arith.divf %4, %5 : vector<24x1xf32>
    %7 = vector.broadcast %6 : vector<24x1xf32> to vector<24x32xf32>
    %8 = arith.subf %0, %7 : vector<24x32xf32>
    %9 = arith.mulf %8, %8 : vector<24x32xf32>
    %cst_5 = arith.constant dense<0.000000e+00> : vector<24xf32>
    %10 = vector.multi_reduction <add>, %9, %cst_5 [1] : vector<24x32xf32> to vector<24xf32>
    %11 = vector.shape_cast %10 : vector<24xf32> to vector<24x1xf32>
    %cst_6 = arith.constant 3.200000e+01 : f32
    %12 = vector.broadcast %cst_6 : f32 to vector<24x1xf32>
    %13 = arith.divf %11, %12 : vector<24x1xf32>
    %14 = vector.broadcast %6 : vector<24x1xf32> to vector<24x32xf32>
    %15 = arith.subf %0, %14 : vector<24x32xf32>
    %cst_7 = arith.constant 9.99999974E-6 : f32
    %16 = vector.broadcast %cst_7 : f32 to vector<24x1xf32>
    %17 = arith.addf %13, %16 : vector<24x1xf32>
    %18 = math.rsqrt %17 : vector<24x1xf32>
    %19 = vector.broadcast %18 : vector<24x1xf32> to vector<24x32xf32>
    %20 = arith.mulf %15, %19 : vector<24x32xf32>
    %21 = vector.broadcast %1 : vector<1x32xf32> to vector<24x32xf32>
    %22 = arith.mulf %20, %21 : vector<24x32xf32>
    %23 = vector.broadcast %2 : vector<1x32xf32> to vector<24x32xf32>
    %24 = arith.addf %22, %23 : vector<24x32xf32>
    %25 = arith.truncf %24 : vector<24x32xf32> to vector<24x32xbf16>
    %c0_8 = arith.constant 0 : index
    %c0_9 = arith.constant 0 : index
    %26 = vector.load %arg3[%c0_8, %c0_9] : memref<32x96xbf16, #tpu.memory_space<vmem>>, vector<32x96xbf16>
    %cst_10 = arith.constant dense<0.000000e+00> : vector<24x96xf32>
    %27 = tpu.matmul %25, %26, %cst_10 {dimension_numbers = #tpu.dot_dimension_numbers<[1], [0], [0], [1], [0, 0, 1, 1], [], []>} : vector<24x32xbf16>, vector<32x96xbf16>, vector<24x96xf32> -> vector<24x96xf32>
    %c0_11 = arith.constant 0 : index
    %c0_12 = arith.constant 0 : index
    %28 = vector.load %arg4[%c0_11, %c0_12] : memref<1x96xf32, #tpu.memory_space<vmem>>, vector<1x96xf32>
    %29 = vector.broadcast %28 : vector<1x96xf32> to vector<24x96xf32>
    %30 = arith.addf %27, %29 : vector<24x96xf32>
    %c0_13 = arith.constant 0 : index
    %c0_14 = arith.constant 0 : index
    %31 = vector.load %arg5[%c0_13, %c0_14] : memref<24x96xf32, #tpu.memory_space<vmem>>, vector<24x96xf32>
    tpu.vector_store %arg5[%c0_13, %c0_14], %30 {strides = array<i32>} : memref<24x96xf32, #tpu.memory_space<vmem>>, vector<24x96xf32>,
    return
  }
  func.func @transform_0(%arg0: i32) -> (i32, i32) {
    %c0_i32 = arith.constant 0 : i32
    %c0_i32_0 = arith.constant 0 : i32
    return %arg0, %c0_i32 : i32, i32
  }
  func.func @transform_1(%arg0: i32) -> (i32, i32) {
    %c0_i32 = arith.constant 0 : i32
    %c0_i32_0 = arith.constant 0 : i32
    %c0_i32_1 = arith.constant 0 : i32
    return %c0_i32, %c0_i32_0 : i32, i32
  }
  func.func @transform_2(%arg0: i32) -> (i32, i32) {
    %c0_i32 = arith.constant 0 : i32
    %c0_i32_0 = arith.constant 0 : i32
    %c0_i32_1 = arith.constant 0 : i32
    return %c0_i32, %c0_i32_0 : i32, i32
  }
  func.func @transform_3(%arg0: i32) -> (i32, i32) {
    %c0_i32 = arith.constant 0 : i32
    %c0_i32_0 = arith.constant 0 : i32
    %c0_i32_1 = arith.constant 0 : i32
    return %c0_i32, %c0_i32_0 : i32, i32
  }
  func.func @transform_4(%arg0: i32) -> (i32, i32) {
    %c0_i32 = arith.constant 0 : i32
    %c0_i32_0 = arith.constant 0 : i32
    return %arg0, %c0_i32 : i32, i32
  }
}

module attributes {stable_mosaic.version = 11 : i64} {
  func.func @_attention_kernel(%arg0: i32, %arg1: memref<1x4x17x8xf32, #tpu.memory_space<vmem>>, %arg2: memref<1x4x17x8xf32, #tpu.memory_space<vmem>>, %arg3: memref<1x4x17x8xf32, #tpu.memory_space<vmem>>, %arg4: memref<1x4x17x8xf32, #tpu.memory_space<vmem>>) attributes {dimension_semantics = [#tpu.dimension_semantics<parallel>], iteration_bounds = array<i64: 2>, scalar_prefetch = 0 : i64, scratch_operands = 0 : i64, tpu.core_type = #tpu.core_type<tc>, window_params = [{transform_indices = @transform_0, window_bounds = array<i64: 1, 4, 17, 8>}, {transform_indices = @transform_1, window_bounds = array<i64: 1, 4, 17, 8>}, {transform_indices = @transform_2, window_bounds = array<i64: 1, 4, 17, 8>}, {transform_indices = @transform_3, window_bounds = array<i64: 1, 4, 17, 8>}]} {
    %c0 = arith.constant 0 : index
    %c0_0 = arith.constant 0 : index
    %c0_1 = arith.constant 0 : index
    %c0_2 = arith.constant 0 : index
    %0 = vector.load %arg1[%c0, %c0_0, %c0_1, %c0_2] : memref<1x4x17x8xf32, #tpu.memory_space<vmem>>, vector<1x4x17x8xf32>
    %1 = vector.shape_cast %0 : vector<1x4x17x8xf32> to vector<4x17x8xf32>
    %2 = arith.truncf %1 : vector<4x17x8xf32> to vector<4x17x8xbf16>
    %c0_3 = arith.constant 0 : index
    %c0_4 = arith.constant 0 : index
    %c0_5 = arith.constant 0 : index
    %c0_6 = arith.constant 0 : index
    %3 = vector.load %arg2[%c0_3, %c0_4, %c0_5, %c0_6] : memref<1x4x17x8xf32, #tpu.memory_space<vmem>>, vector<1x4x17x8xf32>
    %4 = vector.shape_cast %3 : vector<1x4x17x8xf32> to vector<4x17x8xf32>
    %5 = arith.truncf %4 : vector<4x17x8xf32> to vector<4x17x8xbf16>
    %c0_7 = arith.constant 0 : index
    %c0_8 = arith.constant 0 : index
    %c0_9 = arith.constant 0 : index
    %c0_10 = arith.constant 0 : index
    %6 = vector.load %arg3[%c0_7, %c0_8, %c0_9, %c0_10] : memref<1x4x17x8xf32, #tpu.memory_space<vmem>>, vector<1x4x17x8xf32>
    %7 = vector.shape_cast %6 : vector<1x4x17x8xf32> to vector<4x17x8xf32>
    %8 = arith.truncf %7 : vector<4x17x8xf32> to vector<4x17x8xbf16>
    "tpu.trace_start"() <{level = 10 : i32, message = "hnd,hmd->hnm"}> : () -> ()
    %cst = arith.constant dense<0.000000e+00> : vector<4x17x17xf32>
    %9 = tpu.matmul %2, %5, %cst {dimension_numbers = #tpu.dot_dimension_numbers<[2], [2], [1], [1], [0, 0, 0, 1, 1, 1], [0], [0]>} : vector<4x17x8xbf16>, vector<4x17x8xbf16>, vector<4x17x17xf32> -> vector<4x17x17xf32>
    "tpu.trace_stop"() : () -> ()
    %cst_11 = arith.constant 0.353553385 : f32
    %10 = vector.broadcast %cst_11 : f32 to vector<4x17x17xf32>
    %11 = arith.mulf %9, %10 : vector<4x17x17xf32>
    %cst_12 = arith.constant dense<0xFF800000> : vector<4x17xf32>
    %12 = vector.multi_reduction <maximumf>, %11, %cst_12 [2] : vector<4x17x17xf32> to vector<4x17xf32>
    %13 = vector.shape_cast %12 : vector<4x17xf32> to vector<4x17x1xf32>
    %14 = vector.broadcast %13 : vector<4x17x1xf32> to vector<4x17x17xf32>
    %15 = arith.subf %11, %14 : vector<4x17x17xf32>
    %16 = math.exp %15 : vector<4x17x17xf32>
    %cst_13 = arith.constant dense<0.000000e+00> : vector<4x17xf32>
    %17 = vector.multi_reduction <add>, %16, %cst_13 [2] : vector<4x17x17xf32> to vector<4x17xf32>
    %18 = vector.shape_cast %17 : vector<4x17xf32> to vector<4x17x1xf32>
    %19 = tpu.reciprocal %18 {approx = true} : vector<4x17x1xf32> -> vector<4x17x1xf32>
    %20 = vector.broadcast %19 : vector<4x17x1xf32> to vector<4x17x17xf32>
    %21 = arith.mulf %16, %20 : vector<4x17x17xf32>
    %22 = arith.truncf %21 : vector<4x17x17xf32> to vector<4x17x17xbf16>
    "tpu.trace_start"() <{level = 10 : i32, message = "hnm,hmd->hnd"}> : () -> ()
    %cst_14 = arith.constant dense<0.000000e+00> : vector<4x17x8xf32>
    %23 = tpu.matmul %22, %8, %cst_14 {dimension_numbers = #tpu.dot_dimension_numbers<[2], [1], [1], [2], [0, 0, 0, 1, 1, 2], [0], [0]>} : vector<4x17x17xbf16>, vector<4x17x8xbf16>, vector<4x17x8xf32> -> vector<4x17x8xf32>
    "tpu.trace_stop"() : () -> ()
    %c0_15 = arith.constant 0 : index
    %c0_16 = arith.constant 0 : index
    %c0_17 = arith.constant 0 : index
    %c0_18 = arith.constant 0 : index
    %24 = vector.load %arg4[%c0_15, %c0_16, %c0_17, %c0_18] : memref<1x4x17x8xf32, #tpu.memory_space<vmem>>, vector<1x4x17x8xf32>
    %25 = vector.shape_cast %24 : vector<1x4x17x8xf32> to vector<4x17x8xf32>
    %26 = vector.shape_cast %23 : vector<4x17x8xf32> to vector<1x4x17x8xf32>
    tpu.vector_store %arg4[%c0_15, %c0_16, %c0_17, %c0_18], %26 {strides = array<i32>} : memref<1x4x17x8xf32, #tpu.memory_space<vmem>>, vector<1x4x17x8xf32>,
    return
  }
  func.func @transform_0(%arg0: i32) -> (i32, i32, i32, i32) {
    %c0_i32 = arith.constant 0 : i32
    %c0_i32_0 = arith.constant 0 : i32
    %c0_i32_1 = arith.constant 0 : i32
    %c0_i32_2 = arith.constant 0 : i32
    return %arg0, %c0_i32, %c0_i32_0, %c0_i32_1 : i32, i32, i32, i32
  }
  func.func @transform_1(%arg0: i32) -> (i32, i32, i32, i32) {
    %c0_i32 = arith.constant 0 : i32
    %c0_i32_0 = arith.constant 0 : i32
    %c0_i32_1 = arith.constant 0 : i32
    %c0_i32_2 = arith.constant 0 : i32
    return %arg0, %c0_i32, %c0_i32_0, %c0_i32_1 : i32, i32, i32, i32
  }
  func.func @transform_2(%arg0: i32) -> (i32, i32, i32, i32) {
    %c0_i32 = arith.constant 0 : i32
    %c0_i32_0 = arith.constant 0 : i32
    %c0_i32_1 = arith.constant 0 : i32
    %c0_i32_2 = arith.constant 0 : i32
    return %arg0, %c0_i32, %c0_i32_0, %c0_i32_1 : i32, i32, i32, i32
  }
  func.func @transform_3(%arg0: i32) -> (i32, i32, i32, i32) {
    %c0_i32 = arith.constant 0 : i32
    %c0_i32_0 = arith.constant 0 : i32
    %c0_i32_1 = arith.constant 0 : i32
    %c0_i32_2 = arith.constant 0 : i32
    return %arg0, %c0_i32, %c0_i32_0, %c0_i32_1 : i32, i32, i32, i32
  }
}

module attributes {stable_mosaic.version = 11 : i64} {
  func.func @_layernorm_kernel(%arg0: i32, %arg1: memref<24x32xf32, #tpu.memory_space<vmem>>, %arg2: memref<2x32xf32, #tpu.memory_space<vmem>>, %arg3: memref<24x32xf32, #tpu.memory_space<vmem>>) attributes {dimension_semantics = [#tpu.dimension_semantics<parallel>], iteration_bounds = array<i64: 2>, scalar_prefetch = 0 : i64, scratch_operands = 0 : i64, tpu.core_type = #tpu.core_type<tc>, window_params = [{transform_indices = @transform_0, window_bounds = array<i64: 24, 32>}, {pipeline_mode = #tpu.pipeline_mode<synchronous>, transform_indices = @transform_1, window_bounds = array<i64: 2, 32>}, {transform_indices = @transform_2, window_bounds = array<i64: 24, 32>}]} {
    %c0 = arith.constant 0 : index
    %c0_0 = arith.constant 0 : index
    %0 = vector.load %arg1[%c0, %c0_0] : memref<24x32xf32, #tpu.memory_space<vmem>>, vector<24x32xf32>
    %c0_1 = arith.constant 0 : index
    %c0_2 = arith.constant 0 : index
    %1 = vector.load %arg2[%c0_1, %c0_2] : memref<2x32xf32, #tpu.memory_space<vmem>>, vector<1x32xf32>
    %c1 = arith.constant 1 : index
    %c0_3 = arith.constant 0 : index
    %2 = vector.load %arg2[%c1, %c0_3] : memref<2x32xf32, #tpu.memory_space<vmem>>, vector<1x32xf32>
    %cst = arith.constant dense<0.000000e+00> : vector<24xf32>
    %3 = vector.multi_reduction <add>, %0, %cst [1] : vector<24x32xf32> to vector<24xf32>
    %4 = vector.shape_cast %3 : vector<24xf32> to vector<24x1xf32>
    %cst_4 = arith.constant 3.200000e+01 : f32
    %5 = vector.broadcast %cst_4 : f32 to vector<24x1xf32>
    %6 = arith.divf %4, %5 : vector<24x1xf32>
    %7 = vector.broadcast %6 : vector<24x1xf32> to vector<24x32xf32>
    %8 = arith.subf %0, %7 : vector<24x32xf32>
    %9 = arith.mulf %8, %8 : vector<24x32xf32>
    %cst_5 = arith.constant dense<0.000000e+00> : vector<24xf32>
    %10 = vector.multi_reduction <add>, %9, %cst_5 [1] : vector<24x32xf32> to vector<24xf32>
    %11 = vector.shape_cast %10 : vector<24xf32> to vector<24x1xf32>
    %cst_6 = arith.constant 3.200000e+01 : f32
    %12 = vector.broadcast %cst_6 : f32 to vector<24x1xf32>
    %13 = arith.divf %11, %12 : vector<24x1xf32>
    %14 = vector.broadcast %6 : vector<24x1xf32> to vector<24x32xf32>
    %15 = arith.subf %0, %14 : vector<24x32xf32>
    %cst_7 = arith.constant 9.99999974E-6 : f32
    %16 = vector.broadcast %cst_7 : f32 to vector<24x1xf32>
    %17 = arith.addf %13, %16 : vector<24x1xf32>
    %18 = math.rsqrt %17 : vector<24x1xf32>
    %19 = vector.broadcast %18 : vector<24x1xf32> to vector<24x32xf32>
    %20 = arith.mulf %15, %19 : vector<24x32xf32>
    %21 = vector.broadcast %1 : vector<1x32xf32> to vector<24x32xf32>
    %22 = arith.mulf %20, %21 : vector<24x32xf32>
    %23 = vector.broadcast %2 : vector<1x32xf32> to vector<24x32xf32>
    %24 = arith.addf %22, %23 : vector<24x32xf32>
    %c0_8 = arith.constant 0 : index
    %c0_9 = arith.constant 0 : index
    %25 = vector.load %arg3[%c0_8, %c0_9] : memref<24x32xf32, #tpu.memory_space<vmem>>, vector<24x32xf32>
    tpu.vector_store %arg3[%c0_8, %c0_9], %24 {strides = array<i32>} : memref<24x32xf32, #tpu.memory_space<vmem>>, vector<24x32xf32>,
    return
  }
  func.func @transform_0(%arg0: i32) -> (i32, i32) {
    %c0_i32 = arith.constant 0 : i32
    %c0_i32_0 = arith.constant 0 : i32
    return %arg0, %c0_i32 : i32, i32
  }
  func.func @transform_1(%arg0: i32) -> (i32, i32) {
    %c0_i32 = arith.constant 0 : i32
    %c0_i32_0 = arith.constant 0 : i32
    %c0_i32_1 = arith.constant 0 : i32
    return %c0_i32, %c0_i32_0 : i32, i32
  }
  func.func @transform_2(%arg0: i32) -> (i32, i32) {
    %c0_i32 = arith.constant 0 : i32
    %c0_i32_0 = arith.constant 0 : i32
    return %arg0, %c0_i32 : i32, i32
  }
}

module attributes {stable_mosaic.version = 11 : i64} {
  func.func @_out_mlp_kernel(%arg0: i32, %arg1: memref<24x32xf32, #tpu.memory_space<vmem>>, %arg2: memref<24x32xf32, #tpu.memory_space<vmem>>, %arg3: memref<32x32xbf16, #tpu.memory_space<vmem>>, %arg4: memref<4x32xf32, #tpu.memory_space<vmem>>, %arg5: memref<32x64xbf16, #tpu.memory_space<vmem>>, %arg6: memref<1x64xf32, #tpu.memory_space<vmem>>, %arg7: memref<64x32xbf16, #tpu.memory_space<vmem>>, %arg8: memref<24x32xf32, #tpu.memory_space<vmem>>) attributes {dimension_semantics = [#tpu.dimension_semantics<parallel>], iteration_bounds = array<i64: 2>, scalar_prefetch = 0 : i64, scratch_operands = 0 : i64, tpu.core_type = #tpu.core_type<tc>, window_params = [{transform_indices = @transform_0, window_bounds = array<i64: 24, 32>}, {transform_indices = @transform_1, window_bounds = array<i64: 24, 32>}, {pipeline_mode = #tpu.pipeline_mode<synchronous>, transform_indices = @transform_2, window_bounds = array<i64: 32, 32>}, {pipeline_mode = #tpu.pipeline_mode<synchronous>, transform_indices = @transform_3, window_bounds = array<i64: 4, 32>}, {pipeline_mode = #tpu.pipeline_mode<synchronous>, transform_indices = @transform_4, window_bounds = array<i64: 32, 64>}, {pipeline_mode = #tpu.pipeline_mode<synchronous>, transform_indices = @transform_5, window_bounds = array<i64: 1, 64>}, {pipeline_mode = #tpu.pipeline_mode<synchronous>, transform_indices = @transform_6, window_bounds = array<i64: 64, 32>}, {transform_indices = @transform_7, window_bounds = array<i64: 24, 32>}]} {
    %c0 = arith.constant 0 : index
    %c0_0 = arith.constant 0 : index
    %0 = vector.load %arg4[%c0, %c0_0] : memref<4x32xf32, #tpu.memory_space<vmem>>, vector<1x32xf32>
    %c1 = arith.constant 1 : index
    %c0_1 = arith.constant 0 : index
    %1 = vector.load %arg4[%c1, %c0_1] : memref<4x32xf32, #tpu.memory_space<vmem>>, vector<1x32xf32>
    %c2 = arith.constant 2 : index
    %c0_2 = arith.constant 0 : index
    %2 = vector.load %arg4[%c2, %c0_2] : memref<4x32xf32, #tpu.memory_space<vmem>>, vector<1x32xf32>
    %c3 = arith.constant 3 : index
    %c0_3 = arith.constant 0 : index
    %3 = vector.load %arg4[%c3, %c0_3] : memref<4x32xf32, #tpu.memory_space<vmem>>, vector<1x32xf32>
    %c0_4 = arith.constant 0 : index
    %c0_5 = arith.constant 0 : index
    %4 = vector.load %arg1[%c0_4, %c0_5] : memref<24x32xf32, #tpu.memory_space<vmem>>, vector<24x32xf32>
    %c0_6 = arith.constant 0 : index
    %c0_7 = arith.constant 0 : index
    %5 = vector.load %arg2[%c0_6, %c0_7] : memref<24x32xf32, #tpu.memory_space<vmem>>, vector<24x32xf32>
    %6 = arith.truncf %5 : vector<24x32xf32> to vector<24x32xbf16>
    %c0_8 = arith.constant 0 : index
    %c0_9 = arith.constant 0 : index
    %7 = vector.load %arg3[%c0_8, %c0_9] : memref<32x32xbf16, #tpu.memory_space<vmem>>, vector<32x32xbf16>
    %cst = arith.constant dense<0.000000e+00> : vector<24x32xf32>
    %8 = tpu.matmul %6, %7, %cst {dimension_numbers = #tpu.dot_dimension_numbers<[1], [0], [0], [1], [0, 0, 1, 1], [], []>} : vector<24x32xbf16>, vector<32x32xbf16>, vector<24x32xf32> -> vector<24x32xf32>
    %9 = arith.addf %4, %8 : vector<24x32xf32>
    %10 = vector.broadcast %0 : vector<1x32xf32> to vector<24x32xf32>
    %11 = arith.addf %9, %10 : vector<24x32xf32>
    %cst_10 = arith.constant dense<0.000000e+00> : vector<24xf32>
    %12 = vector.multi_reduction <add>, %11, %cst_10 [1] : vector<24x32xf32> to vector<24xf32>
    %13 = vector.shape_cast %12 : vector<24xf32> to vector<24x1xf32>
    %cst_11 = arith.constant 3.200000e+01 : f32
    %14 = vector.broadcast %cst_11 : f32 to vector<24x1xf32>
    %15 = arith.divf %13, %14 : vector<24x1xf32>
    %16 = vector.broadcast %15 : vector<24x1xf32> to vector<24x32xf32>
    %17 = arith.subf %11, %16 : vector<24x32xf32>
    %18 = arith.mulf %17, %17 : vector<24x32xf32>
    %cst_12 = arith.constant dense<0.000000e+00> : vector<24xf32>
    %19 = vector.multi_reduction <add>, %18, %cst_12 [1] : vector<24x32xf32> to vector<24xf32>
    %20 = vector.shape_cast %19 : vector<24xf32> to vector<24x1xf32>
    %cst_13 = arith.constant 3.200000e+01 : f32
    %21 = vector.broadcast %cst_13 : f32 to vector<24x1xf32>
    %22 = arith.divf %20, %21 : vector<24x1xf32>
    %23 = vector.broadcast %15 : vector<24x1xf32> to vector<24x32xf32>
    %24 = arith.subf %11, %23 : vector<24x32xf32>
    %cst_14 = arith.constant 9.99999974E-6 : f32
    %25 = vector.broadcast %cst_14 : f32 to vector<24x1xf32>
    %26 = arith.addf %22, %25 : vector<24x1xf32>
    %27 = math.rsqrt %26 : vector<24x1xf32>
    %28 = vector.broadcast %27 : vector<24x1xf32> to vector<24x32xf32>
    %29 = arith.mulf %24, %28 : vector<24x32xf32>
    %30 = vector.broadcast %1 : vector<1x32xf32> to vector<24x32xf32>
    %31 = arith.mulf %29, %30 : vector<24x32xf32>
    %32 = vector.broadcast %2 : vector<1x32xf32> to vector<24x32xf32>
    %33 = arith.addf %31, %32 : vector<24x32xf32>
    %34 = arith.truncf %33 : vector<24x32xf32> to vector<24x32xbf16>
    %c0_15 = arith.constant 0 : index
    %c0_16 = arith.constant 0 : index
    %35 = vector.load %arg5[%c0_15, %c0_16] : memref<32x64xbf16, #tpu.memory_space<vmem>>, vector<32x64xbf16>
    %cst_17 = arith.constant dense<0.000000e+00> : vector<24x64xf32>
    %36 = tpu.matmul %34, %35, %cst_17 {dimension_numbers = #tpu.dot_dimension_numbers<[1], [0], [0], [1], [0, 0, 1, 1], [], []>} : vector<24x32xbf16>, vector<32x64xbf16>, vector<24x64xf32> -> vector<24x64xf32>
    %c0_18 = arith.constant 0 : index
    %c0_19 = arith.constant 0 : index
    %37 = vector.load %arg6[%c0_18, %c0_19] : memref<1x64xf32, #tpu.memory_space<vmem>>, vector<1x64xf32>
    %38 = vector.broadcast %37 : vector<1x64xf32> to vector<24x64xf32>
    %39 = arith.addf %36, %38 : vector<24x64xf32>
    %40 = arith.mulf %39, %39 : vector<24x64xf32>
    %41 = arith.mulf %39, %40 : vector<24x64xf32>
    %cst_20 = arith.constant 4.471500e-02 : f32
    %42 = vector.broadcast %cst_20 : f32 to vector<24x64xf32>
    %43 = arith.mulf %42, %41 : vector<24x64xf32>
    %44 = arith.addf %39, %43 : vector<24x64xf32>
    %cst_21 = arith.constant 0.797884583 : f32
    %45 = vector.broadcast %cst_21 : f32 to vector<24x64xf32>
    %46 = arith.mulf %45, %44 : vector<24x64xf32>
    %47 = math.tanh %46 : vector<24x64xf32>
    %cst_22 = arith.constant 1.000000e+00 : f32
    %48 = vector.broadcast %cst_22 : f32 to vector<24x64xf32>
    %49 = arith.addf %48, %47 : vector<24x64xf32>
    %cst_23 = arith.constant 5.000000e-01 : f32
    %50 = vector.broadcast %cst_23 : f32 to vector<24x64xf32>
    %51 = arith.mulf %50, %49 : vector<24x64xf32>
    %52 = arith.mulf %39, %51 : vector<24x64xf32>
    %53 = arith.truncf %52 : vector<24x64xf32> to vector<24x64xbf16>
    %c0_24 = arith.constant 0 : index
    %c0_25 = arith.constant 0 : index
    %54 = vector.load %arg7[%c0_24, %c0_25] : memref<64x32xbf16, #tpu.memory_space<vmem>>, vector<64x32xbf16>
    %cst_26 = arith.constant dense<0.000000e+00> : vector<24x32xf32>
    %55 = tpu.matmul %53, %54, %cst_26 {dimension_numbers = #tpu.dot_dimension_numbers<[1], [0], [0], [1], [0, 0, 1, 1], [], []>} : vector<24x64xbf16>, vector<64x32xbf16>, vector<24x32xf32> -> vector<24x32xf32>
    %56 = arith.addf %11, %55 : vector<24x32xf32>
    %57 = vector.broadcast %3 : vector<1x32xf32> to vector<24x32xf32>
    %58 = arith.addf %56, %57 : vector<24x32xf32>
    %c0_27 = arith.constant 0 : index
    %c0_28 = arith.constant 0 : index
    %59 = vector.load %arg8[%c0_27, %c0_28] : memref<24x32xf32, #tpu.memory_space<vmem>>, vector<24x32xf32>
    tpu.vector_store %arg8[%c0_27, %c0_28], %58 {strides = array<i32>} : memref<24x32xf32, #tpu.memory_space<vmem>>, vector<24x32xf32>,
    return
  }
  func.func @transform_0(%arg0: i32) -> (i32, i32) {
    %c0_i32 = arith.constant 0 : i32
    %c0_i32_0 = arith.constant 0 : i32
    return %arg0, %c0_i32 : i32, i32
  }
  func.func @transform_1(%arg0: i32) -> (i32, i32) {
    %c0_i32 = arith.constant 0 : i32
    %c0_i32_0 = arith.constant 0 : i32
    return %arg0, %c0_i32 : i32, i32
  }
  func.func @transform_2(%arg0: i32) -> (i32, i32) {
    %c0_i32 = arith.constant 0 : i32
    %c0_i32_0 = arith.constant 0 : i32
    %c0_i32_1 = arith.constant 0 : i32
    return %c0_i32, %c0_i32_0 : i32, i32
  }
  func.func @transform_3(%arg0: i32) -> (i32, i32) {
    %c0_i32 = arith.constant 0 : i32
    %c0_i32_0 = arith.constant 0 : i32
    %c0_i32_1 = arith.constant 0 : i32
    return %c0_i32, %c0_i32_0 : i32, i32
  }
  func.func @transform_4(%arg0: i32) -> (i32, i32) {
    %c0_i32 = arith.constant 0 : i32
    %c0_i32_0 = arith.constant 0 : i32
    %c0_i32_1 = arith.constant 0 : i32
    return %c0_i32, %c0_i32_0 : i32, i32
  }
  func.func @transform_5(%arg0: i32) -> (i32, i32) {
    %c0_i32 = arith.constant 0 : i32
    %c0_i32_0 = arith.constant 0 : i32
    %c0_i32_1 = arith.constant 0 : i32
    return %c0_i32, %c0_i32_0 : i32, i32
  }
  func.func @transform_6(%arg0: i32) -> (i32, i32) {
    %c0_i32 = arith.constant 0 : i32
    %c0_i32_0 = arith.constant 0 : i32
    %c0_i32_1 = arith.constant 0 : i32
    return %c0_i32, %c0_i32_0 : i32, i32
  }
  func.func @transform_7(%arg0: i32) -> (i32, i32) {
    %c0_i32 = arith.constant 0 : i32
    %c0_i32_0 = arith.constant 0 : i32
    return %arg0, %c0_i32 : i32, i32
  }
}

module attributes {stable_mosaic.version = 11 : i64} {
  func.func @_linear_kernel(%arg0: i32, %arg1: memref<24x32xf32, #tpu.memory_space<vmem>>, %arg2: memref<32x48xbf16, #tpu.memory_space<vmem>>, %arg3: memref<1x48xf32, #tpu.memory_space<vmem>>, %arg4: memref<24x48xf32, #tpu.memory_space<vmem>>) attributes {dimension_semantics = [#tpu.dimension_semantics<parallel>], iteration_bounds = array<i64: 2>, scalar_prefetch = 0 : i64, scratch_operands = 0 : i64, tpu.core_type = #tpu.core_type<tc>, window_params = [{transform_indices = @transform_0, window_bounds = array<i64: 24, 32>}, {pipeline_mode = #tpu.pipeline_mode<synchronous>, transform_indices = @transform_1, window_bounds = array<i64: 32, 48>}, {pipeline_mode = #tpu.pipeline_mode<synchronous>, transform_indices = @transform_2, window_bounds = array<i64: 1, 48>}, {transform_indices = @transform_3, window_bounds = array<i64: 24, 48>}]} {
    %c0 = arith.constant 0 : index
    %c0_0 = arith.constant 0 : index
    %0 = vector.load %arg1[%c0, %c0_0] : memref<24x32xf32, #tpu.memory_space<vmem>>, vector<24x32xf32>
    %1 = arith.truncf %0 : vector<24x32xf32> to vector<24x32xbf16>
    %c0_1 = arith.constant 0 : index
    %c0_2 = arith.constant 0 : index
    %2 = vector.load %arg2[%c0_1, %c0_2] : memref<32x48xbf16, #tpu.memory_space<vmem>>, vector<32x48xbf16>
    %cst = arith.constant dense<0.000000e+00> : vector<24x48xf32>
    %3 = tpu.matmul %1, %2, %cst {dimension_numbers = #tpu.dot_dimension_numbers<[1], [0], [0], [1], [0, 0, 1, 1], [], []>} : vector<24x32xbf16>, vector<32x48xbf16>, vector<24x48xf32> -> vector<24x48xf32>
    %c0_3 = arith.constant 0 : index
    %c0_4 = arith.constant 0 : index
    %4 = vector.load %arg3[%c0_3, %c0_4] : memref<1x48xf32, #tpu.memory_space<vmem>>, vector<1x48xf32>
    %5 = vector.broadcast %4 : vector<1x48xf32> to vector<24x48xf32>
    %6 = arith.addf %3, %5 : vector<24x48xf32>
    %c0_5 = arith.constant 0 : index
    %c0_6 = arith.constant 0 : index
    %7 = vector.load %arg4[%c0_5, %c0_6] : memref<24x48xf32, #tpu.memory_space<vmem>>, vector<24x48xf32>
    tpu.vector_store %arg4[%c0_5, %c0_6], %6 {strides = array<i32>} : memref<24x48xf32, #tpu.memory_space<vmem>>, vector<24x48xf32>,
    return
  }
  func.func @transform_0(%arg0: i32) -> (i32, i32) {
    %c0_i32 = arith.constant 0 : i32
    %c0_i32_0 = arith.constant 0 : i32
    return %arg0, %c0_i32 : i32, i32
  }
  func.func @transform_1(%arg0: i32) -> (i32, i32) {
    %c0_i32 = arith.constant 0 : i32
    %c0_i32_0 = arith.constant 0 : i32
    %c0_i32_1 = arith.constant 0 : i32
    return %c0_i32, %c0_i32_0 : i32, i32
  }
  func.func @transform_2(%arg0: i32) -> (i32, i32) {
    %c0_i32 = arith.constant 0 : i32
    %c0_i32_0 = arith.constant 0 : i32
    %c0_i32_1 = arith.constant 0 : i32
    return %c0_i32, %c0_i32_0 : i32, i32
  }
  func.func @transform_3(%arg0: i32) -> (i32, i32) {
    %c0_i32 = arith.constant 0 : i32
    %c0_i32_0 = arith.constant 0 : i32
    return %arg0, %c0_i32 : i32, i32
  }
}

</mosaic_0001>

<llo_original>
// kernel: mae_forward.17
$region0: #{mae_forward.17}
  #allocation0 [shape = 'u32[]', space=smem, size = 0x4, offset = 0x4, fixed_abs, tag = 'smem constant byte address 0x4 - core index']
  #allocation1 [shape = 'u32[144,128]{1,0:T(1,128)}', space=vmem, size = 0x12000, scoped, tag = 'internal scratch']
  %s0 = inlined_call_operand.vmem [shape: f32[32,48], index: 0, kind: input, shape index: {}]
  %s1 = inlined_call_operand.vmem [shape: bf16[48,32], index: 1, kind: input, shape index: {}]
  %s2 = inlined_call_operand.vmem [shape: f32[1,32], index: 2, kind: input, shape index: {}]
  %s3 = inlined_call_operand.vmem [shape: f32[32,32], index: 3, kind: output, shape index: {}]
  %s4 = sld [smem:[#allocation0]]
  $region45: #{mae_forward.17} parent=0
    _
  %s6 = ssub.s32 1, %s4
  %s7 = scalar_select 0, %s6, %s4
  loop: start=0, step=1, limit=4
  $region2: #{mae_forward.17} parent=0 // loop_pre_header
    _
  $region3: #{mae_forward.17} parent=0 // loop_header
    %s9 = sphi 0, %s13
    %p10 = scmp.ge.s32.totalorder %s9, 4
    %s19 = sphi 0, %s21
    %s22 = sphi 0, %s19
    %s23 = sphi 0, %s22
    %s39 = sphi 0, %s23
    %s43 = sphi 0, %s43
    %s45 = sphi 0, %s43
    %s46 = sphi 0, %s45
    %s60 = sphi 0, %s46
    %s64 = sphi 0, %s64
    %s66 = sphi 0, %s64
    %s67 = sphi 0, %s66
    %s81 = sphi 0, %s67
    %s87 = sphi 0, %s89
    %s90 = sphi 0, %s87
    %s91 = sphi 0, %s90
    %s107 = sphi 0, %s91
  $region4: #{mae_forward.17} parent=0 // loop_header_branch
    %12 = sbr.rel (%p10) target = $region8
  $region5: #{mae_forward.17} parent=0 // loop_body
    %s14 = ssub.s32 %s9, 1
    %s15 = ssub.s32 %s9, 2
    %s16 = sadd.s32 %s9, 1
    %s17 = ssub.s32 %s9, %s16
    %p18 = scmp.eq.s32.totalorder %s17, 0
    %s20 = sadd.s32 %s19, 1
    %s21 = scalar_select %p18, %s19, %s20
    %p24 = pneg %p18
    %p25 = scmp.eq.s32.totalorder %s9, 1
    %p26 = por %p24, %p25
    %p27 = scmp.ne.s32.totalorder %s19, %s22
    %p28 = scmp.eq.s32.totalorder %s9, 0
    %p29 = por %p27, %p28
    %p30 = scmp.ne.s32.totalorder %s19, %s22
    %p31 = scmp.eq.s32.totalorder %s14, 1
    %p32 = por %p30, %p31
    %p33 = scmp.ne.s32.totalorder %s22, %s23
    %p34 = scmp.eq.s32.totalorder %s14, 0
    %p35 = por %p33, %p34
    %p36 = scmp.ne.s32.totalorder %s22, %s23
    %p37 = scmp.eq.s32.totalorder %s15, 1
    %p38 = por %p36, %p37
    %p40 = scmp.ne.s32.totalorder %s23, %s39
    %p41 = scmp.eq.s32.totalorder %s15, 0
    %p42 = por %p40, %p41
    %s44 = sadd.s32 %s43, 1
    %p47 = scmp.eq.s32.totalorder %s9, 1
    %p48 = scmp.ne.s32.totalorder %s43, %s45
    %p49 = scmp.eq.s32.totalorder %s9, 0
    %p50 = por %p48, %p49
    %p51 = scmp.ne.s32.totalorder %s43, %s45
    %p52 = scmp.eq.s32.totalorder %s14, 1
    %p53 = por %p51, %p52
    %p54 = scmp.ne.s32.totalorder %s45, %s46
    %p55 = scmp.eq.s32.totalorder %s14, 0
    %p56 = por %p54, %p55
    %p57 = scmp.ne.s32.totalorder %s45, %s46
    %p58 = scmp.eq.s32.totalorder %s15, 1
    %p59 = por %p57, %p58
    %p61 = scmp.ne.s32.totalorder %s46, %s60
    %p62 = scmp.eq.s32.totalorder %s15, 0
    %p63 = por %p61, %p62
    %s65 = sadd.s32 %s64, 1
    %p68 = scmp.eq.s32.totalorder %s9, 1
    %p69 = scmp.ne.s32.totalorder %s64, %s66
    %p70 = scmp.eq.s32.totalorder %s9, 0
    %p71 = por %p69, %p70
    %p72 = scmp.ne.s32.totalorder %s64, %s66
    %p73 = scmp.eq.s32.totalorder %s14, 1
    %p74 = por %p72, %p73
    %p75 = scmp.ne.s32.totalorder %s66, %s67
    %p76 = scmp.eq.s32.totalorder %s14, 0
    %p77 = por %p75, %p76
    %p78 = scmp.ne.s32.totalorder %s66, %s67
    %p79 = scmp.eq.s32.totalorder %s15, 1
    %p80 = por %p78, %p79
    %p82 = scmp.ne.s32.totalorder %s67, %s81
    %p83 = scmp.eq.s32.totalorder %s15, 0
    %p84 = por %p82, %p83
    %s85 = ssub.s32 %s9, %s16
    %p86 = scmp.eq.s32.totalorder %s85, 0
    %s88 = sadd.s32 %s87, 1
    %s89 = scalar_select %p86, %s87, %s88
    %p92 = pneg %p86
    %p93 = scmp.eq.s32.totalorder %s9, 1
    %p94 = por %p92, %p93
    %p95 = scmp.ne.s32.totalorder %s87, %s90
    %p96 = scmp.eq.s32.totalorder %s9, 0
    %p97 = por %p95, %p96
    %p98 = scmp.ne.s32.totalorder %s87, %s90
    %p99 = scmp.eq.s32.totalorder %s14, 1
    %p100 = por %p98, %p99
    %p101 = scmp.ne.s32.totalorder %s90, %s91
    %p102 = scmp.eq.s32.totalorder %s14, 0
    %p103 = por %p101, %p102
    %p104 = scmp.ne.s32.totalorder %s90, %s91
    %p105 = scmp.eq.s32.totalorder %s15, 1
    %p106 = por %p104, %p105
    %p108 = scmp.ne.s32.totalorder %s91, %s107
    %p109 = scmp.eq.s32.totalorder %s15, 0
    %p110 = por %p108, %p109
    %p111 = scmp.le.s32.totalorder 1, %s9
    %p112 = scmp.lt.s32.totalorder %s9, 3
    %p113 = pnand %p111, %p112
    %p114 = pneg %p113
    // Predicated region
    $region9: #{mae_forward.17} parent=5 // pred_check
      _
    $region10: #{mae_forward.17} parent=5 // pred_check_branch
      %116 = sbr.rel (%p113) target = $region12
    $region11: #{mae_forward.17} parent=5 // pred_region
      %s117 = ssub.s32 %s9, 1
      // Predicated region
      $region13: #{mae_forward.17} parent=11 // pred_check
        %p118 = pneg %p56
      $region14: #{mae_forward.17} parent=11 // pred_check_branch
        %120 = sbr.rel (%p118) target = $region16
      $region15: #{mae_forward.17} parent=11 // pred_region
        _
      $region16: #{mae_forward.17} parent=11 // pred_fallthru
        _
      // Predicated region
      $region17: #{mae_forward.17} parent=11 // pred_check
        %p121 = pneg %p77
      $region18: #{mae_forward.17} parent=11 // pred_check_branch
        %123 = sbr.rel (%p121) target = $region20
      $region19: #{mae_forward.17} parent=11 // pred_region
        _
      $region20: #{mae_forward.17} parent=11 // pred_fallthru
        _
    $region12: #{mae_forward.17} parent=5 // pred_fallthru
      _
    %p124 = scmp.lt.s32.totalorder %s9, 2
    // Predicated region
    $region21: #{mae_forward.17} parent=5 // pred_check
      %p125 = pneg %p124
    $region22: #{mae_forward.17} parent=5 // pred_check_branch
      %127 = sbr.rel (%p125) target = $region24
    $region23: #{mae_forward.17} parent=5 // pred_region
      // Predicated region
      $region25: #{mae_forward.17} parent=23 // pred_check
        %p128 = pneg %p29
      $region26: #{mae_forward.17} parent=23 // pred_check_branch
        %130 = sbr.rel (%p128) target = $region28
      $region27: #{mae_forward.17} parent=23 // pred_region
        %s131 = smul.u32 2, %s9
        %p132 = scmp.lt.s32.totalorder %s131, 3
        %s133 = scalar_select %p132, %s131, 3
        %s134 = smul.addr %s133, 8
        %s135 = scalar_lea.vmem %s0, %s134
        %s136 = smul.u32 2, %s9
      $region28: #{mae_forward.17} parent=23 // pred_fallthru
        _
    $region24: #{mae_forward.17} parent=5 // pred_fallthru
      _
    %p137 = scmp.le.s32.totalorder 1, %s9
    %p138 = scmp.lt.s32.totalorder %s9, 3
    %p139 = pnand %p137, %p138
    %p140 = pneg %p139
    // Predicated region
    $region29: #{mae_forward.17} parent=5 // pred_check
      _
    $region30: #{mae_forward.17} parent=5 // pred_check_branch
      %142 = sbr.rel (%p139) target = $region32
    $region31: #{mae_forward.17} parent=5 // pred_region
      %s143 = ssub.s32 %s9, 1
      %s144 = smul.u32 2, %s14
      %p145 = scmp.lt.s32.totalorder %s144, 3
      %s146 = scalar_select %p145, %s144, 3
      %s147 = smul.addr %s146, 8
      %s148 = scalar_lea.vmem %s0, %s147
      %p149 = pneg %p35
      %p150 = pneg %p32
      %p151 = pneg %p56
      %p152 = pneg %p53
      %p153 = pneg %p77
      %p154 = pneg %p74
      %p155 = pneg %p103
      %p156 = pneg %p100
      %s157 = smul.u32 2, %s14
      %p158 = scmp.lt.s32.totalorder %s157, 3
      %s159 = scalar_select %p158, %s157, 3
      %s160 = smul.addr %s159, 8
      %s161 = scalar_lea.vmem %s3, %s160
      %s162 = smul.u32 2, %s14
      %p163 = scmp.lt.s32.totalorder %s162, 3
      %s164 = scalar_select %p163, %s162, 3
      %s165 = smul.addr %s164, 8
      %s166 = scalar_lea.vmem %s0, %s165
      %s167 = smul.u32 2, %s14
      %s168 = smul.u32 2, %s14
      %p169 = scmp.lt.s32.totalorder %s168, 3
      %s170 = scalar_select %p169, %s168, 3
      %s171 = smul.addr %s170, 8
      %s172 = scalar_lea.vmem %s3, %s171
      %s173 = smul.u32 2, %s14
      %v175 = vld [vmem:[%s166] sm:$0xff]
      %v176 = vld [vmem:[%s166 + $0x8] sm:$0xff]
      %v177 = vpack.c.bf16 %v176, %v175
      %v178 = vld [vmem:[%s1] sm:$0xf]
      %v179 = vld [vmem:[%s1 + $0x4] sm:$0xf]
      %v180 = vld [vmem:[%s1 + $0x8] sm:$0xf]
      %v181 = vld [vmem:[%s1 + $0xc] sm:$0xf]
      %v182 = vld [vmem:[%s1 + $0x10] sm:$0xf]
      %v183 = vld [vmem:[%s1 + $0x14] sm:$0xf]
      %v184 = vld [vmem:[%s2] sm:$0x1]
      %v186 = vlaneseq
      %v187 = vshrl.u32 %v186, 7
      %v188 = vsub.s32 0, %v187
      %v189 = vrot.slane %v184, %v188
      %v197 = vunpack.c.l.b16 %v178
      %v198 = vunpack.c.l.b16 %v179
      %v199 = vunpack.c.l.b16 %v180
      %v200 = vunpack.c.l.b16 %v181
      %v201 = vunpack.c.l.b16 %v182
      %v202 = vunpack.c.l.b16 %v183
      %v203 = vpack.c.b16 %v198, %v197
      %v204 = vpack.c.b16 %v200, %v199
      %v205 = vpack.c.b16 %v202, %v201
      %vm209 = vcmask 392192
      %v211 = vsel %vm209, %v177, 0
      %213 = vmatprep.subr.bf16.mxu0 0
      %214 = vmatpush1.bf16.msra.mxu0 %v203
      %215 = vmatprep.subr.bf16.mxu0 0
      %216 = vmatpush1.bf16.msra.mxu0 %v204
      %217 = vmatprep.subr.bf16.mxu0 0
      %218 = vmatpush1.bf16.msra.mxu0 %v205
      %219 = vmatprep.subr.bf16.mxu0 0
      %220 = vmatpush1.bf16.msra.mxu0 0
      %221 = vmatprep.subr.bf16.mxu0 0
      %222 = vmatpush1.bf16.msra.mxu0 0
      %223 = vmatprep.subr.bf16.mxu0 0
      %224 = vmatpush1.bf16.msra.mxu0 0
      %225 = vmatprep.subr.bf16.mxu0 0
      %226 = vmatpush1.bf16.msra.mxu0 0
      %227 = vmatprep.subr.bf16.mxu0 0
      %228 = vmatpush1.bf16.msra.mxu0 0
      %229 = vmatprep.subr.bf16.mxu0 0
      %230 = vmatpush1.bf16.msra.mxu0 0
      %231 = vmatprep.subr.bf16.mxu0 0
      %232 = vmatpush1.bf16.msra.mxu0 0
      %233 = vmatprep.subr.bf16.mxu0 0
      %234 = vmatpush1.bf16.msra.mxu0 0
      %235 = vmatprep.subr.bf16.mxu0 0
      %236 = vmatpush1.bf16.msra.mxu0 0
      %237 = vmatprep.subr.bf16.mxu0 0
      %238 = vmatpush1.bf16.msra.mxu0 0
      %239 = vmatprep.subr.bf16.mxu0 0
      %240 = vmatpush1.bf16.msra.mxu0 0
      %241 = vmatprep.subr.bf16.mxu0 0
      %242 = vmatpush1.bf16.msra.mxu0 0
      %243 = vmatprep.subr.bf16.mxu0 0
      %244 = vmatpush1.bf16.msra.mxu0 0
      %245 = vmatprep.mubr.bf16.mxu0 0
      %246 = vmatmul.mubr.bf16.gmra.mrb[0].mxu0 %v211
      %v247 = vpop.f32.mrb[0].mxu0
      %v248 = vadd.f32 %v189, %v247
      %v249 = vpop.f32.mrb[0].mxu0
      %v250 = vpop.f32.mrb[0].mxu0
      %v251 = vadd.f32 %v189, %v250
      %v252 = vpop.f32.mrb[0].mxu0
      %253 = vdwg.mxu0
      %vm254 = vcmask 261120
      %255 = vst.msk [vmem:[%s172] sm:$0xff] %vm254, %v248
      %256 = vst.msk [vmem:[%s172 + $0x8] sm:$0xff] %vm254, %v251
      %s257 = smul.u32 2, %s14
      %p258 = scmp.lt.s32.totalorder %s257, 3
      %s259 = scalar_select %p258, %s257, 3
      %s260 = smul.addr %s259, 8
      %s261 = scalar_lea.vmem %s3, %s260
      // Predicated region
      $region33: #{mae_forward.17} parent=31 // pred_check
        %p262 = pneg %p100
      $region34: #{mae_forward.17} parent=31 // pred_check_branch
        %264 = sbr.rel (%p262) target = $region36
      $region35: #{mae_forward.17} parent=31 // pred_region
        %s265 = smul.u32 2, %s14
      $region36: #{mae_forward.17} parent=31 // pred_fallthru
        _
    $region32: #{mae_forward.17} parent=5 // pred_fallthru
      _
    %p266 = scmp.le.s32.totalorder 2, %s9
    // Predicated region
    $region37: #{mae_forward.17} parent=5 // pred_check
      %p267 = pneg %p266
    $region38: #{mae_forward.17} parent=5 // pred_check_branch
      %269 = sbr.rel (%p267) target = $region40
    $region39: #{mae_forward.17} parent=5 // pred_region
      %s270 = ssub.s32 %s9, 2
      // Predicated region
      $region41: #{mae_forward.17} parent=39 // pred_check
        %p271 = pneg %p106
      $region42: #{mae_forward.17} parent=39 // pred_check_branch
        %273 = sbr.rel (%p271) target = $region44
      $region43: #{mae_forward.17} parent=39 // pred_region
        %s274 = smul.u32 2, %s15
        %p275 = scmp.lt.s32.totalorder %s274, 3
        %s276 = scalar_select %p275, %s274, 3
        %s277 = smul.addr %s276, 8
        %s278 = scalar_lea.vmem %s3, %s277
      $region44: #{mae_forward.17} parent=39 // pred_fallthru
        _
    $region40: #{mae_forward.17} parent=5 // pred_fallthru
      _
  $region6: #{mae_forward.17} parent=0 // loop_footer
    %s13 = sadd.s32 1, %s9
  $region7: #{mae_forward.17} parent=0 // loop_footer_branch
    %8 = sbr.rel target = $region3
  $region8: #{mae_forward.17} parent=0 // loop_exit
    _

// kernel: mae_forward.24
$region0: #{mae_forward.24}
  #allocation0 [shape = 'u32[]', space=smem, size = 0x4, offset = 0x4, fixed_abs, tag = 'smem constant byte address 0x4 - core index']
  #allocation1 [shape = 'u32[144,128]{1,0:T(1,128)}', space=vmem, size = 0x12000, scoped, tag = 'internal scratch']
  %s0 = inlined_call_operand.vmem [shape: f32[16,32], index: 0, kind: input, shape index: {}]
  %s1 = inlined_call_operand.vmem [shape: f32[2,32], index: 1, kind: input, shape index: {}]
  %s2 = inlined_call_operand.vmem [shape: f32[16,32], index: 2, kind: output, shape index: {}]
  %s3 = sld [smem:[#allocation0]]
  $region41: #{mae_forward.24} parent=0
    _
  %s5 = ssub.s32 1, %s3
  %s6 = scalar_select 0, %s5, %s3
  loop: start=0, step=1, limit=4
  $region2: #{mae_forward.24} parent=0 // loop_pre_header
    _
  $region3: #{mae_forward.24} parent=0 // loop_header
    %s8 = sphi 0, %s12
    %p9 = scmp.ge.s32.totalorder %s8, 4
    %s18 = sphi 0, %s20
    %s21 = sphi 0, %s18
    %s22 = sphi 0, %s21
    %s38 = sphi 0, %s22
    %s42 = sphi 0, %s42
    %s44 = sphi 0, %s42
    %s45 = sphi 0, %s44
    %s59 = sphi 0, %s45
    %s65 = sphi 0, %s67
    %s68 = sphi 0, %s65
    %s69 = sphi 0, %s68
    %s85 = sphi 0, %s69
  $region4: #{mae_forward.24} parent=0 // loop_header_branch
    %11 = sbr.rel (%p9) target = $region8
  $region5: #{mae_forward.24} parent=0 // loop_body
    %s13 = ssub.s32 %s8, 1
    %s14 = ssub.s32 %s8, 2
    %s15 = sadd.s32 %s8, 1
    %s16 = ssub.s32 %s8, %s15
    %p17 = scmp.eq.s32.totalorder %s16, 0
    %s19 = sadd.s32 %s18, 1
    %s20 = scalar_select %p17, %s18, %s19
    %p23 = pneg %p17
    %p24 = scmp.eq.s32.totalorder %s8, 1
    %p25 = por %p23, %p24
    %p26 = scmp.ne.s32.totalorder %s18, %s21
    %p27 = scmp.eq.s32.totalorder %s8, 0
    %p28 = por %p26, %p27
    %p29 = scmp.ne.s32.totalorder %s18, %s21
    %p30 = scmp.eq.s32.totalorder %s13, 1
    %p31 = por %p29, %p30
    %p32 = scmp.ne.s32.totalorder %s21, %s22
    %p33 = scmp.eq.s32.totalorder %s13, 0
    %p34 = por %p32, %p33
    %p35 = scmp.ne.s32.totalorder %s21, %s22
    %p36 = scmp.eq.s32.totalorder %s14, 1
    %p37 = por %p35, %p36
    %p39 = scmp.ne.s32.totalorder %s22, %s38
    %p40 = scmp.eq.s32.totalorder %s14, 0
    %p41 = por %p39, %p40
    %s43 = sadd.s32 %s42, 1
    %p46 = scmp.eq.s32.totalorder %s8, 1
    %p47 = scmp.ne.s32.totalorder %s42, %s44
    %p48 = scmp.eq.s32.totalorder %s8, 0
    %p49 = por %p47, %p48
    %p50 = scmp.ne.s32.totalorder %s42, %s44
    %p51 = scmp.eq.s32.totalorder %s13, 1
    %p52 = por %p50, %p51
    %p53 = scmp.ne.s32.totalorder %s44, %s45
    %p54 = scmp.eq.s32.totalorder %s13, 0
    %p55 = por %p53, %p54
    %p56 = scmp.ne.s32.totalorder %s44, %s45
    %p57 = scmp.eq.s32.totalorder %s14, 1
    %p58 = por %p56, %p57
    %p60 = scmp.ne.s32.totalorder %s45, %s59
    %p61 = scmp.eq.s32.totalorder %s14, 0
    %p62 = por %p60, %p61
    %s63 = ssub.s32 %s8, %s15
    %p64 = scmp.eq.s32.totalorder %s63, 0
    %s66 = sadd.s32 %s65, 1
    %s67 = scalar_select %p64, %s65, %s66
    %p70 = pneg %p64
    %p71 = scmp.eq.s32.totalorder %s8, 1
    %p72 = por %p70, %p71
    %p73 = scmp.ne.s32.totalorder %s65, %s68
    %p74 = scmp.eq.s32.totalorder %s8, 0
    %p75 = por %p73, %p74
    %p76 = scmp.ne.s32.totalorder %s65, %s68
    %p77 = scmp.eq.s32.totalorder %s13, 1
    %p78 = por %p76, %p77
    %p79 = scmp.ne.s32.totalorder %s68, %s69
    %p80 = scmp.eq.s32.totalorder %s13, 0
    %p81 = por %p79, %p80
    %p82 = scmp.ne.s32.totalorder %s68, %s69
    %p83 = scmp.eq.s32.totalorder %s14, 1
    %p84 = por %p82, %p83
    %p86 = scmp.ne.s32.totalorder %s69, %s85
    %p87 = scmp.eq.s32.totalorder %s14, 0
    %p88 = por %p86, %p87
    %p89 = scmp.le.s32.totalorder 1, %s8
    %p90 = scmp.lt.s32.totalorder %s8, 3
    %p91 = pnand %p89, %p90
    %p92 = pneg %p91
    // Predicated region
    $region9: #{mae_forward.24} parent=5 // pred_check
      _
    $region10: #{mae_forward.24} parent=5 // pred_check_branch
      %94 = sbr.rel (%p91) target = $region12
    $region11: #{mae_forward.24} parent=5 // pred_region
      %s95 = ssub.s32 %s8, 1
      // Predicated region
      $region13: #{mae_forward.24} parent=11 // pred_check
        %p96 = pneg %p55
      $region14: #{mae_forward.24} parent=11 // pred_check_branch
        %98 = sbr.rel (%p96) target = $region16
      $region15: #{mae_forward.24} parent=11 // pred_region
        _
      $region16: #{mae_forward.24} parent=11 // pred_fallthru
        _
    $region12: #{mae_forward.24} parent=5 // pred_fallthru
      _
    %p99 = scmp.lt.s32.totalorder %s8, 2
    // Predicated region
    $region17: #{mae_forward.24} parent=5 // pred_check
      %p100 = pneg %p99
    $region18: #{mae_forward.24} parent=5 // pred_check_branch
      %102 = sbr.rel (%p100) target = $region20
    $region19: #{mae_forward.24} parent=5 // pred_region
      // Predicated region
      $region21: #{mae_forward.24} parent=19 // pred_check
        %p103 = pneg %p28
      $region22: #{mae_forward.24} parent=19 // pred_check_branch
        %105 = sbr.rel (%p103) target = $region24
      $region23: #{mae_forward.24} parent=19 // pred_region
        %p106 = scmp.lt.s32.totalorder %s8, 1
        %s107 = scalar_select %p106, %s8, 1
        %s108 = smul.addr %s107, 8
        %s109 = scalar_lea.vmem %s0, %s108
      $region24: #{mae_forward.24} parent=19 // pred_fallthru
        _
    $region20: #{mae_forward.24} parent=5 // pred_fallthru
      _
    %p110 = scmp.le.s32.totalorder 1, %s8
    %p111 = scmp.lt.s32.totalorder %s8, 3
    %p112 = pnand %p110, %p111
    %p113 = pneg %p112
    // Predicated region
    $region25: #{mae_forward.24} parent=5 // pred_check
      _
    $region26: #{mae_forward.24} parent=5 // pred_check_branch
      %115 = sbr.rel (%p112) target = $region28
    $region27: #{mae_forward.24} parent=5 // pred_region
      %s116 = ssub.s32 %s8, 1
      %p117 = scmp.lt.s32.totalorder %s13, 1
      %s118 = scalar_select %p117, %s13, 1
      %s119 = smul.addr %s118, 8
      %s120 = scalar_lea.vmem %s0, %s119
      %p121 = pneg %p34
      %p122 = pneg %p31
      %p123 = pneg %p55
      %p124 = pneg %p52
      %p125 = pneg %p81
      %p126 = pneg %p78
      %p127 = scmp.lt.s32.totalorder %s13, 1
      %s128 = scalar_select %p127, %s13, 1
      %s129 = smul.addr %s128, 8
      %s130 = scalar_lea.vmem %s2, %s129
      %p131 = scmp.lt.s32.totalorder %s13, 1
      %s132 = scalar_select %p131, %s13, 1
      %s133 = smul.addr %s132, 8
      %s134 = scalar_lea.vmem %s0, %s133
      %p135 = scmp.lt.s32.totalorder %s13, 1
      %s136 = scalar_select %p135, %s13, 1
      %s137 = smul.addr %s136, 8
      %s138 = scalar_lea.vmem %s2, %s137
      %v139 = vld [vmem:[%s134] sm:$0xff]
      %v140 = vld [vmem:[%s1] sm:$0x1]
      %v141 = vld [vmem:[%s1 + $0x1] sm:$0x1]
      %vm142 = vcmask 261120
      %v143 = vsel %vm142, %v139, 0.0
      %144 = vadd.xlane.f32.xlu0 %v143
      %v145 = vpop.xlane.xlu0 %144
      %v146 = vrcp.pop 32.0
      %v147 = vmul.f32 %v145, %v146
      %v148 = vsub.f32 %v139, %v147
      %v149 = vmul.f32 %v148, %v148
      %v150 = vsel %vm142, %v149, 0.0
      %151 = vadd.xlane.f32.xlu0 %v150
      %v152 = vpop.xlane.xlu0 %151
      %v153 = vmul.f32 %v152, %v146
      %v154 = vadd.f32 %v153, 1e-05
      %v155 = vrsqrt.pop %v154
      %v156 = vmul.f32 %v148, %v155
      %v157 = vlaneseq
      %v158 = vshrl.u32 %v157, 7
      %v159 = vsub.s32 0, %v158
      %v160 = vrot.slane %v140, %v159
      %v161 = vmul.f32 %v156, %v160
      %v162 = vlaneseq
      %v163 = vshrl.u32 %v162, 7
      %v164 = vsub.s32 0, %v163
      %v165 = vrot.slane %v141, %v164
      %v166 = vadd.f32 %v161, %v165
      %167 = vst.msk [vmem:[%s138] sm:$0xff] %vm142, %v166
      %p168 = scmp.lt.s32.totalorder %s13, 1
      %s169 = scalar_select %p168, %s13, 1
      %s170 = smul.addr %s169, 8
      %s171 = scalar_lea.vmem %s2, %s170
      // Predicated region
      $region29: #{mae_forward.24} parent=27 // pred_check
        %p172 = pneg %p78
      $region30: #{mae_forward.24} parent=27 // pred_check_branch
        %174 = sbr.rel (%p172) target = $region32
      $region31: #{mae_forward.24} parent=27 // pred_region
        _
      $region32: #{mae_forward.24} parent=27 // pred_fallthru
        _
    $region28: #{mae_forward.24} parent=5 // pred_fallthru
      _
    %p175 = scmp.le.s32.totalorder 2, %s8
    // Predicated region
    $region33: #{mae_forward.24} parent=5 // pred_check
      %p176 = pneg %p175
    $region34: #{mae_forward.24} parent=5 // pred_check_branch
      %178 = sbr.rel (%p176) target = $region36
    $region35: #{mae_forward.24} parent=5 // pred_region
      %s179 = ssub.s32 %s8, 2
      // Predicated region
      $region37: #{mae_forward.24} parent=35 // pred_check
        %p180 = pneg %p84
      $region38: #{mae_forward.24} parent=35 // pred_check_branch
        %182 = sbr.rel (%p180) target = $region40
      $region39: #{mae_forward.24} parent=35 // pred_region
        %p183 = scmp.lt.s32.totalorder %s14, 1
        %s184 = scalar_select %p183, %s14, 1
        %s185 = smul.addr %s184, 8
        %s186 = scalar_lea.vmem %s2, %s185
      $region40: #{mae_forward.24} parent=35 // pred_fallthru
        _
    $region36: #{mae_forward.24} parent=5 // pred_fallthru
      _
  $region6: #{mae_forward.24} parent=0 // loop_footer
    %s12 = sadd.s32 1, %s8
  $region7: #{mae_forward.24} parent=0 // loop_footer_branch
    %7 = sbr.rel target = $region3
  $region8: #{mae_forward.24} parent=0 // loop_exit
    _

// kernel: mae_forward.18
$region0: #{mae_forward.18}
  #allocation0 [shape = 'u32[]', space=smem, size = 0x4, offset = 0x4, fixed_abs, tag = 'smem constant byte address 0x4 - core index']
  #allocation1 [shape = 'u32[144,128]{1,0:T(1,128)}', space=vmem, size = 0x12000, scoped, tag = 'internal scratch']
  %s0 = inlined_call_operand.vmem [shape: f32[16,32], index: 0, kind: input, shape index: {}]
  %s1 = inlined_call_operand.vmem [shape: f32[2,32], index: 1, kind: input, shape index: {}]
  %s2 = inlined_call_operand.vmem [shape: bf16[32,96], index: 2, kind: input, shape index: {}]
  %s3 = inlined_call_operand.vmem [shape: f32[1,96], index: 3, kind: input, shape index: {}]
  %s4 = inlined_call_operand.vmem [shape: f32[16,96], index: 4, kind: output, shape index: {}]
  %s5 = sld [smem:[#allocation0]]
  $region49: #{mae_forward.18} parent=0
    _
  %s7 = ssub.s32 1, %s5
  %s8 = scalar_select 0, %s7, %s5
  loop: start=0, step=1, limit=4
  $region2: #{mae_forward.18} parent=0 // loop_pre_header
    _
  $region3: #{mae_forward.18} parent=0 // loop_header
    %s10 = sphi 0, %s14
    %p11 = scmp.ge.s32.totalorder %s10, 4
    %s20 = sphi 0, %s22
    %s23 = sphi 0, %s20
    %s24 = sphi 0, %s23
    %s40 = sphi 0, %s24
    %s44 = sphi 0, %s44
    %s46 = sphi 0, %s44
    %s47 = sphi 0, %s46
    %s61 = sphi 0, %s47
    %s65 = sphi 0, %s65
    %s67 = sphi 0, %s65
    %s68 = sphi 0, %s67
    %s82 = sphi 0, %s68
    %s86 = sphi 0, %s86
    %s88 = sphi 0, %s86
    %s89 = sphi 0, %s88
    %s103 = sphi 0, %s89
    %s109 = sphi 0, %s111
    %s112 = sphi 0, %s109
    %s113 = sphi 0, %s112
    %s129 = sphi 0, %s113
  $region4: #{mae_forward.18} parent=0 // loop_header_branch
    %13 = sbr.rel (%p11) target = $region8
  $region5: #{mae_forward.18} parent=0 // loop_body
    %s15 = ssub.s32 %s10, 1
    %s16 = ssub.s32 %s10, 2
    %s17 = sadd.s32 %s10, 1
    %s18 = ssub.s32 %s10, %s17
    %p19 = scmp.eq.s32.totalorder %s18, 0
    %s21 = sadd.s32 %s20, 1
    %s22 = scalar_select %p19, %s20, %s21
    %p25 = pneg %p19
    %p26 = scmp.eq.s32.totalorder %s10, 1
    %p27 = por %p25, %p26
    %p28 = scmp.ne.s32.totalorder %s20, %s23
    %p29 = scmp.eq.s32.totalorder %s10, 0
    %p30 = por %p28, %p29
    %p31 = scmp.ne.s32.totalorder %s20, %s23
    %p32 = scmp.eq.s32.totalorder %s15, 1
    %p33 = por %p31, %p32
    %p34 = scmp.ne.s32.totalorder %s23, %s24
    %p35 = scmp.eq.s32.totalorder %s15, 0
    %p36 = por %p34, %p35
    %p37 = scmp.ne.s32.totalorder %s23, %s24
    %p38 = scmp.eq.s32.totalorder %s16, 1
    %p39 = por %p37, %p38
    %p41 = scmp.ne.s32.totalorder %s24, %s40
    %p42 = scmp.eq.s32.totalorder %s16, 0
    %p43 = por %p41, %p42
    %s45 = sadd.s32 %s44, 1
    %p48 = scmp.eq.s32.totalorder %s10, 1
    %p49 = scmp.ne.s32.totalorder %s44, %s46
    %p50 = scmp.eq.s32.totalorder %s10, 0
    %p51 = por %p49, %p50
    %p52 = scmp.ne.s32.totalorder %s44, %s46
    %p53 = scmp.eq.s32.totalorder %s15, 1
    %p54 = por %p52, %p53
    %p55 = scmp.ne.s32.totalorder %s46, %s47
    %p56 = scmp.eq.s32.totalorder %s15, 0
    %p57 = por %p55, %p56
    %p58 = scmp.ne.s32.totalorder %s46, %s47
    %p59 = scmp.eq.s32.totalorder %s16, 1
    %p60 = por %p58, %p59
    %p62 = scmp.ne.s32.totalorder %s47, %s61
    %p63 = scmp.eq.s32.totalorder %s16, 0
    %p64 = por %p62, %p63
    %s66 = sadd.s32 %s65, 1
    %p69 = scmp.eq.s32.totalorder %s10, 1
    %p70 = scmp.ne.s32.totalorder %s65, %s67
    %p71 = scmp.eq.s32.totalorder %s10, 0
    %p72 = por %p70, %p71
    %p73 = scmp.ne.s32.totalorder %s65, %s67
    %p74 = scmp.eq.s32.totalorder %s15, 1
    %p75 = por %p73, %p74
    %p76 = scmp.ne.s32.totalorder %s67, %s68
    %p77 = scmp.eq.s32.totalorder %s15, 0
    %p78 = por %p76, %p77
    %p79 = scmp.ne.s32.totalorder %s67, %s68
    %p80 = scmp.eq.s32.totalorder %s16, 1
    %p81 = por %p79, %p80
    %p83 = scmp.ne.s32.totalorder %s68, %s82
    %p84 = scmp.eq.s32.totalorder %s16, 0
    %p85 = por %p83, %p84
    %s87 = sadd.s32 %s86, 1
    %p90 = scmp.eq.s32.totalorder %s10, 1
    %p91 = scmp.ne.s32.totalorder %s86, %s88
    %p92 = scmp.eq.s32.totalorder %s10, 0
    %p93 = por %p91, %p92
    %p94 = scmp.ne.s32.totalorder %s86, %s88
    %p95 = scmp.eq.s32.totalorder %s15, 1
    %p96 = por %p94, %p95
    %p97 = scmp.ne.s32.totalorder %s88, %s89
    %p98 = scmp.eq.s32.totalorder %s15, 0
    %p99 = por %p97, %p98
    %p100 = scmp.ne.s32.totalorder %s88, %s89
    %p101 = scmp.eq.s32.totalorder %s16, 1
    %p102 = por %p100, %p101
    %p104 = scmp.ne.s32.totalorder %s89, %s103
    %p105 = scmp.eq.s32.totalorder %s16, 0
    %p106 = por %p104, %p105
    %s107 = ssub.s32 %s10, %s17
    %p108 = scmp.eq.s32.totalorder %s107, 0
    %s110 = sadd.s32 %s109, 1
    %s111 = scalar_select %p108, %s109, %s110
    %p114 = pneg %p108
    %p115 = scmp.eq.s32.totalorder %s10, 1
    %p116 = por %p114, %p115
    %p117 = scmp.ne.s32.totalorder %s109, %s112
    %p118 = scmp.eq.s32.totalorder %s10, 0
    %p119 = por %p117, %p118
    %p120 = scmp.ne.s32.totalorder %s109, %s112
    %p121 = scmp.eq.s32.totalorder %s15, 1
    %p122 = por %p120, %p121
    %p123 = scmp.ne.s32.totalorder %s112, %s113
    %p124 = scmp.eq.s32.totalorder %s15, 0
    %p125 = por %p123, %p124
    %p126 = scmp.ne.s32.totalorder %s112, %s113
    %p127 = scmp.eq.s32.totalorder %s16, 1
    %p128 = por %p126, %p127
    %p130 = scmp.ne.s32.totalorder %s113, %s129
    %p131 = scmp.eq.s32.totalorder %s16, 0
    %p132 = por %p130, %p131
    %p133 = scmp.le.s32.totalorder 1, %s10
    %p134 = scmp.lt.s32.totalorder %s10, 3
    %p135 = pnand %p133, %p134
    %p136 = pneg %p135
    // Predicated region
    $region9: #{mae_forward.18} parent=5 // pred_check
      _
    $region10: #{mae_forward.18} parent=5 // pred_check_branch
      %138 = sbr.rel (%p135) target = $region12
    $region11: #{mae_forward.18} parent=5 // pred_region
      %s139 = ssub.s32 %s10, 1
      // Predicated region
      $region13: #{mae_forward.18} parent=11 // pred_check
        %p140 = pneg %p57
      $region14: #{mae_forward.18} parent=11 // pred_check_branch
        %142 = sbr.rel (%p140) target = $region16
      $region15: #{mae_forward.18} parent=11 // pred_region
        _
      $region16: #{mae_forward.18} parent=11 // pred_fallthru
        _
      // Predicated region
      $region17: #{mae_forward.18} parent=11 // pred_check
        %p143 = pneg %p78
      $region18: #{mae_forward.18} parent=11 // pred_check_branch
        %145 = sbr.rel (%p143) target = $region20
      $region19: #{mae_forward.18} parent=11 // pred_region
        _
      $region20: #{mae_forward.18} parent=11 // pred_fallthru
        _
      // Predicated region
      $region21: #{mae_forward.18} parent=11 // pred_check
        %p146 = pneg %p99
      $region22: #{mae_forward.18} parent=11 // pred_check_branch
        %148 = sbr.rel (%p146) target = $region24
      $region23: #{mae_forward.18} parent=11 // pred_region
        _
      $region24: #{mae_forward.18} parent=11 // pred_fallthru
        _
    $region12: #{mae_forward.18} parent=5 // pred_fallthru
      _
    %p149 = scmp.lt.s32.totalorder %s10, 2
    // Predicated region
    $region25: #{mae_forward.18} parent=5 // pred_check
      %p150 = pneg %p149
    $region26: #{mae_forward.18} parent=5 // pred_check_branch
      %152 = sbr.rel (%p150) target = $region28
    $region27: #{mae_forward.18} parent=5 // pred_region
      // Predicated region
      $region29: #{mae_forward.18} parent=27 // pred_check
        %p153 = pneg %p30
      $region30: #{mae_forward.18} parent=27 // pred_check_branch
        %155 = sbr.rel (%p153) target = $region32
      $region31: #{mae_forward.18} parent=27 // pred_region
        %p156 = scmp.lt.s32.totalorder %s10, 1
        %s157 = scalar_select %p156, %s10, 1
        %s158 = smul.addr %s157, 8
        %s159 = scalar_lea.vmem %s0, %s158
      $region32: #{mae_forward.18} parent=27 // pred_fallthru
        _
    $region28: #{mae_forward.18} parent=5 // pred_fallthru
      _
    %p160 = scmp.le.s32.totalorder 1, %s10
    %p161 = scmp.lt.s32.totalorder %s10, 3
    %p162 = pnand %p160, %p161
    %p163 = pneg %p162
    // Predicated region
    $region33: #{mae_forward.18} parent=5 // pred_check
      _
    $region34: #{mae_forward.18} parent=5 // pred_check_branch
      %165 = sbr.rel (%p162) target = $region36
    $region35: #{mae_forward.18} parent=5 // pred_region
      %s166 = ssub.s32 %s10, 1
      %p167 = scmp.lt.s32.totalorder %s15, 1
      %s168 = scalar_select %p167, %s15, 1
      %s169 = smul.addr %s168, 8
      %s170 = scalar_lea.vmem %s0, %s169
      %p171 = pneg %p36
      %p172 = pneg %p33
      %p173 = pneg %p57
      %p174 = pneg %p54
      %p175 = pneg %p78
      %p176 = pneg %p75
      %p177 = pneg %p99
      %p178 = pneg %p96
      %p179 = pneg %p125
      %p180 = pneg %p122
      %p181 = scmp.lt.s32.totalorder %s15, 1
      %s182 = scalar_select %p181, %s15, 1
      %s183 = smul.addr %s182, 8
      %s184 = scalar_lea.vmem %s4, %s183
      %p185 = scmp.lt.s32.totalorder %s15, 1
      %s186 = scalar_select %p185, %s15, 1
      %s187 = smul.addr %s186, 8
      %s188 = scalar_lea.vmem %s0, %s187
      %p189 = scmp.lt.s32.totalorder %s15, 1
      %s190 = scalar_select %p189, %s15, 1
      %s191 = smul.addr %s190, 8
      %s192 = scalar_lea.vmem %s4, %s191
      %v194 = vld [vmem:[%s188] sm:$0xff]
      %v195 = vld [vmem:[%s1] sm:$0x1]
      %v196 = vld [vmem:[%s1 + $0x1] sm:$0x1]
      %vm197 = vcmask 261120
      %v198 = vsel %vm197, %v194, 0.0
      %199 = vadd.xlane.f32.xlu0 %v198
      %v200 = vpop.xlane.xlu0 %199
      %v201 = vrcp.pop 32.0
      %v202 = vmul.f32 %v200, %v201
      %v203 = vsub.f32 %v194, %v202
      %v204 = vmul.f32 %v203, %v203
      %v205 = vsel %vm197, %v204, 0.0
      %206 = vadd.xlane.f32.xlu0 %v205
      %v207 = vpop.xlane.xlu0 %206
      %v208 = vmul.f32 %v207, %v201
      %v209 = vadd.f32 %v208, 1e-05
      %v210 = vrsqrt.pop %v209
      %v211 = vmul.f32 %v203, %v210
      %v212 = vlaneseq
      %v213 = vshrl.u32 %v212, 7
      %v214 = vsub.s32 0, %v213
      %v215 = vrot.slane %v195, %v214
      %v216 = vmul.f32 %v211, %v215
      %v217 = vlaneseq
      %v218 = vshrl.u32 %v217, 7
      %v219 = vsub.s32 0, %v218
      %v220 = vrot.slane %v196, %v219
      %v221 = vadd.f32 %v216, %v220
      %v222 = vpack.c.bf16 %v221, %v221
      %v223 = vld [vmem:[%s2] sm:$0xf]
      %v224 = vld [vmem:[%s2 + $0x4] sm:$0xf]
      %v225 = vld [vmem:[%s2 + $0x8] sm:$0xf]
      %v226 = vld [vmem:[%s2 + $0xc] sm:$0xf]
      %v227 = vld [vmem:[%s3] sm:$0x1]
      %v229 = vlaneseq
      %v230 = vshrl.u32 %v229, 7
      %v231 = vsub.s32 0, %v230
      %v232 = vrot.slane %v227, %v231
      %v238 = vunpack.c.l.b16 %v223
      %v239 = vunpack.c.l.b16 %v224
      %v240 = vunpack.c.l.b16 %v225
      %v241 = vunpack.c.l.b16 %v226
      %v242 = vpack.c.b16 %v239, %v238
      %v243 = vpack.c.b16 %v241, %v240
      %v247 = vsel %vm197, %v222, 0
      %249 = vmatprep.subr.bf16.mxu0 0
      %250 = vmatpush1.bf16.msra.mxu0 %v242
      %251 = vmatprep.subr.bf16.mxu0 0
      %252 = vmatpush1.bf16.msra.mxu0 %v243
      %253 = vmatprep.subr.bf16.mxu0 0
      %254 = vmatpush1.bf16.msra.mxu0 0
      %255 = vmatprep.subr.bf16.mxu0 0
      %256 = vmatpush1.bf16.msra.mxu0 0
      %257 = vmatprep.subr.bf16.mxu0 0
      %258 = vmatpush1.bf16.msra.mxu0 0
      %259 = vmatprep.subr.bf16.mxu0 0
      %260 = vmatpush1.bf16.msra.mxu0 0
      %261 = vmatprep.subr.bf16.mxu0 0
      %262 = vmatpush1.bf16.msra.mxu0 0
      %263 = vmatprep.subr.bf16.mxu0 0
      %264 = vmatpush1.bf16.msra.mxu0 0
      %265 = vmatprep.subr.bf16.mxu0 0
      %266 = vmatpush1.bf16.msra.mxu0 0
      %267 = vmatprep.subr.bf16.mxu0 0
      %268 = vmatpush1.bf16.msra.mxu0 0
      %269 = vmatprep.subr.bf16.mxu0 0
      %270 = vmatpush1.bf16.msra.mxu0 0
      %271 = vmatprep.subr.bf16.mxu0 0
      %272 = vmatpush1.bf16.msra.mxu0 0
      %273 = vmatprep.subr.bf16.mxu0 0
      %274 = vmatpush1.bf16.msra.mxu0 0
      %275 = vmatprep.subr.bf16.mxu0 0
      %276 = vmatpush1.bf16.msra.mxu0 0
      %277 = vmatprep.subr.bf16.mxu0 0
      %278 = vmatpush1.bf16.msra.mxu0 0
      %279 = vmatprep.subr.bf16.mxu0 0
      %280 = vmatpush1.bf16.msra.mxu0 0
      %281 = vmatprep.mubr.bf16.mxu0 0
      %282 = vmatmul.mubr.bf16.gmra.mrb[0].mxu0 %v247
      %v283 = vpop.f32.mrb[0].mxu0
      %v284 = vadd.f32 %v232, %v283
      %v285 = vpop.f32.mrb[0].mxu0
      %v286 = vpop.f32.mrb[0].mxu0
      %v287 = vpop.f32.mrb[0].mxu0
      %288 = vdwg.mxu0
      %vm289 = vcmask 785408
      %290 = vst.msk [vmem:[%s192] sm:$0xff] %vm289, %v284
      %p291 = scmp.lt.s32.totalorder %s15, 1
      %s292 = scalar_select %p291, %s15, 1
      %s293 = smul.addr %s292, 8
      %s294 = scalar_lea.vmem %s4, %s293
      // Predicated region
      $region37: #{mae_forward.18} parent=35 // pred_check
        %p295 = pneg %p122
      $region38: #{mae_forward.18} parent=35 // pred_check_branch
        %297 = sbr.rel (%p295) target = $region40
      $region39: #{mae_forward.18} parent=35 // pred_region
        _
      $region40: #{mae_forward.18} parent=35 // pred_fallthru
        _
    $region36: #{mae_forward.18} parent=5 // pred_fallthru
      _
    %p298 = scmp.le.s32.totalorder 2, %s10
    // Predicated region
    $region41: #{mae_forward.18} parent=5 // pred_check
      %p299 = pneg %p298
    $region42: #{mae_forward.18} parent=5 // pred_check_branch
      %301 = sbr.rel (%p299) target = $region44
    $region43: #{mae_forward.18} parent=5 // pred_region
      %s302 = ssub.s32 %s10, 2
      // Predicated region
      $region45: #{mae_forward.18} parent=43 // pred_check
        %p303 = pneg %p128
      $region46: #{mae_forward.18} parent=43 // pred_check_branch
        %305 = sbr.rel (%p303) target = $region48
      $region47: #{mae_forward.18} parent=43 // pred_region
        %p306 = scmp.lt.s32.totalorder %s16, 1
        %s307 = scalar_select %p306, %s16, 1
        %s308 = smul.addr %s307, 8
        %s309 = scalar_lea.vmem %s4, %s308
      $region48: #{mae_forward.18} parent=43 // pred_fallthru
        _
    $region44: #{mae_forward.18} parent=5 // pred_fallthru
      _
  $region6: #{mae_forward.18} parent=0 // loop_footer
    %s14 = sadd.s32 1, %s10
  $region7: #{mae_forward.18} parent=0 // loop_footer_branch
    %9 = sbr.rel target = $region3
  $region8: #{mae_forward.18} parent=0 // loop_exit
    _

// kernel: mae_forward.25
$region0: #{mae_forward.25}
  #allocation0 [shape = 'u32[]', space=smem, size = 0x4, offset = 0x4, fixed_abs, tag = 'smem constant byte address 0x4 - core index']
  #allocation1 [shape = 'u32[144,128]{1,0:T(1,128)}', space=vmem, size = 0x12000, scoped, tag = 'internal scratch']
  %s0 = inlined_call_operand.vmem [shape: f32[16,32], index: 0, kind: input, shape index: {}]
  %s1 = inlined_call_operand.vmem [shape: bf16[32,32], index: 1, kind: input, shape index: {}]
  %s2 = inlined_call_operand.vmem [shape: f32[1,32], index: 2, kind: input, shape index: {}]
  %s3 = inlined_call_operand.vmem [shape: f32[16,32], index: 3, kind: output, shape index: {}]
  %s4 = sld [smem:[#allocation0]]
  $region45: #{mae_forward.25} parent=0
    _
  %s6 = ssub.s32 1, %s4
  %s7 = scalar_select 0, %s6, %s4
  loop: start=0, step=1, limit=4
  $region2: #{mae_forward.25} parent=0 // loop_pre_header
    _
  $region3: #{mae_forward.25} parent=0 // loop_header
    %s9 = sphi 0, %s13
    %p10 = scmp.ge.s32.totalorder %s9, 4
    %s19 = sphi 0, %s21
    %s22 = sphi 0, %s19
    %s23 = sphi 0, %s22
    %s39 = sphi 0, %s23
    %s43 = sphi 0, %s43
    %s45 = sphi 0, %s43
    %s46 = sphi 0, %s45
    %s60 = sphi 0, %s46
    %s64 = sphi 0, %s64
    %s66 = sphi 0, %s64
    %s67 = sphi 0, %s66
    %s81 = sphi 0, %s67
    %s87 = sphi 0, %s89
    %s90 = sphi 0, %s87
    %s91 = sphi 0, %s90
    %s107 = sphi 0, %s91
  $region4: #{mae_forward.25} parent=0 // loop_header_branch
    %12 = sbr.rel (%p10) target = $region8
  $region5: #{mae_forward.25} parent=0 // loop_body
    %s14 = ssub.s32 %s9, 1
    %s15 = ssub.s32 %s9, 2
    %s16 = sadd.s32 %s9, 1
    %s17 = ssub.s32 %s9, %s16
    %p18 = scmp.eq.s32.totalorder %s17, 0
    %s20 = sadd.s32 %s19, 1
    %s21 = scalar_select %p18, %s19, %s20
    %p24 = pneg %p18
    %p25 = scmp.eq.s32.totalorder %s9, 1
    %p26 = por %p24, %p25
    %p27 = scmp.ne.s32.totalorder %s19, %s22
    %p28 = scmp.eq.s32.totalorder %s9, 0
    %p29 = por %p27, %p28
    %p30 = scmp.ne.s32.totalorder %s19, %s22
    %p31 = scmp.eq.s32.totalorder %s14, 1
    %p32 = por %p30, %p31
    %p33 = scmp.ne.s32.totalorder %s22, %s23
    %p34 = scmp.eq.s32.totalorder %s14, 0
    %p35 = por %p33, %p34
    %p36 = scmp.ne.s32.totalorder %s22, %s23
    %p37 = scmp.eq.s32.totalorder %s15, 1
    %p38 = por %p36, %p37
    %p40 = scmp.ne.s32.totalorder %s23, %s39
    %p41 = scmp.eq.s32.totalorder %s15, 0
    %p42 = por %p40, %p41
    %s44 = sadd.s32 %s43, 1
    %p47 = scmp.eq.s32.totalorder %s9, 1
    %p48 = scmp.ne.s32.totalorder %s43, %s45
    %p49 = scmp.eq.s32.totalorder %s9, 0
    %p50 = por %p48, %p49
    %p51 = scmp.ne.s32.totalorder %s43, %s45
    %p52 = scmp.eq.s32.totalorder %s14, 1
    %p53 = por %p51, %p52
    %p54 = scmp.ne.s32.totalorder %s45, %s46
    %p55 = scmp.eq.s32.totalorder %s14, 0
    %p56 = por %p54, %p55
    %p57 = scmp.ne.s32.totalorder %s45, %s46
    %p58 = scmp.eq.s32.totalorder %s15, 1
    %p59 = por %p57, %p58
    %p61 = scmp.ne.s32.totalorder %s46, %s60
    %p62 = scmp.eq.s32.totalorder %s15, 0
    %p63 = por %p61, %p62
    %s65 = sadd.s32 %s64, 1
    %p68 = scmp.eq.s32.totalorder %s9, 1
    %p69 = scmp.ne.s32.totalorder %s64, %s66
    %p70 = scmp.eq.s32.totalorder %s9, 0
    %p71 = por %p69, %p70
    %p72 = scmp.ne.s32.totalorder %s64, %s66
    %p73 = scmp.eq.s32.totalorder %s14, 1
    %p74 = por %p72, %p73
    %p75 = scmp.ne.s32.totalorder %s66, %s67
    %p76 = scmp.eq.s32.totalorder %s14, 0
    %p77 = por %p75, %p76
    %p78 = scmp.ne.s32.totalorder %s66, %s67
    %p79 = scmp.eq.s32.totalorder %s15, 1
    %p80 = por %p78, %p79
    %p82 = scmp.ne.s32.totalorder %s67, %s81
    %p83 = scmp.eq.s32.totalorder %s15, 0
    %p84 = por %p82, %p83
    %s85 = ssub.s32 %s9, %s16
    %p86 = scmp.eq.s32.totalorder %s85, 0
    %s88 = sadd.s32 %s87, 1
    %s89 = scalar_select %p86, %s87, %s88
    %p92 = pneg %p86
    %p93 = scmp.eq.s32.totalorder %s9, 1
    %p94 = por %p92, %p93
    %p95 = scmp.ne.s32.totalorder %s87, %s90
    %p96 = scmp.eq.s32.totalorder %s9, 0
    %p97 = por %p95, %p96
    %p98 = scmp.ne.s32.totalorder %s87, %s90
    %p99 = scmp.eq.s32.totalorder %s14, 1
    %p100 = por %p98, %p99
    %p101 = scmp.ne.s32.totalorder %s90, %s91
    %p102 = scmp.eq.s32.totalorder %s14, 0
    %p103 = por %p101, %p102
    %p104 = scmp.ne.s32.totalorder %s90, %s91
    %p105 = scmp.eq.s32.totalorder %s15, 1
    %p106 = por %p104, %p105
    %p108 = scmp.ne.s32.totalorder %s91, %s107
    %p109 = scmp.eq.s32.totalorder %s15, 0
    %p110 = por %p108, %p109
    %p111 = scmp.le.s32.totalorder 1, %s9
    %p112 = scmp.lt.s32.totalorder %s9, 3
    %p113 = pnand %p111, %p112
    %p114 = pneg %p113
    // Predicated region
    $region9: #{mae_forward.25} parent=5 // pred_check
      _
    $region10: #{mae_forward.25} parent=5 // pred_check_branch
      %116 = sbr.rel (%p113) target = $region12
    $region11: #{mae_forward.25} parent=5 // pred_region
      %s117 = ssub.s32 %s9, 1
      // Predicated region
      $region13: #{mae_forward.25} parent=11 // pred_check
        %p118 = pneg %p56
      $region14: #{mae_forward.25} parent=11 // pred_check_branch
        %120 = sbr.rel (%p118) target = $region16
      $region15: #{mae_forward.25} parent=11 // pred_region
        _
      $region16: #{mae_forward.25} parent=11 // pred_fallthru
        _
      // Predicated region
      $region17: #{mae_forward.25} parent=11 // pred_check
        %p121 = pneg %p77
      $region18: #{mae_forward.25} parent=11 // pred_check_branch
        %123 = sbr.rel (%p121) target = $region20
      $region19: #{mae_forward.25} parent=11 // pred_region
        _
      $region20: #{mae_forward.25} parent=11 // pred_fallthru
        _
    $region12: #{mae_forward.25} parent=5 // pred_fallthru
      _
    %p124 = scmp.lt.s32.totalorder %s9, 2
    // Predicated region
    $region21: #{mae_forward.25} parent=5 // pred_check
      %p125 = pneg %p124
    $region22: #{mae_forward.25} parent=5 // pred_check_branch
      %127 = sbr.rel (%p125) target = $region24
    $region23: #{mae_forward.25} parent=5 // pred_region
      // Predicated region
      $region25: #{mae_forward.25} parent=23 // pred_check
        %p128 = pneg %p29
      $region26: #{mae_forward.25} parent=23 // pred_check_branch
        %130 = sbr.rel (%p128) target = $region28
      $region27: #{mae_forward.25} parent=23 // pred_region
        %p131 = scmp.lt.s32.totalorder %s9, 1
        %s132 = scalar_select %p131, %s9, 1
        %s133 = smul.addr %s132, 8
        %s134 = scalar_lea.vmem %s0, %s133
      $region28: #{mae_forward.25} parent=23 // pred_fallthru
        _
    $region24: #{mae_forward.25} parent=5 // pred_fallthru
      _
    %p135 = scmp.le.s32.totalorder 1, %s9
    %p136 = scmp.lt.s32.totalorder %s9, 3
    %p137 = pnand %p135, %p136
    %p138 = pneg %p137
    // Predicated region
    $region29: #{mae_forward.25} parent=5 // pred_check
      _
    $region30: #{mae_forward.25} parent=5 // pred_check_branch
      %140 = sbr.rel (%p137) target = $region32
    $region31: #{mae_forward.25} parent=5 // pred_region
      %s141 = ssub.s32 %s9, 1
      %p142 = scmp.lt.s32.totalorder %s14, 1
      %s143 = scalar_select %p142, %s14, 1
      %s144 = smul.addr %s143, 8
      %s145 = scalar_lea.vmem %s0, %s144
      %p146 = pneg %p35
      %p147 = pneg %p32
      %p148 = pneg %p56
      %p149 = pneg %p53
      %p150 = pneg %p77
      %p151 = pneg %p74
      %p152 = pneg %p103
      %p153 = pneg %p100
      %p154 = scmp.lt.s32.totalorder %s14, 1
      %s155 = scalar_select %p154, %s14, 1
      %s156 = smul.addr %s155, 8
      %s157 = scalar_lea.vmem %s3, %s156
      %p158 = scmp.lt.s32.totalorder %s14, 1
      %s159 = scalar_select %p158, %s14, 1
      %s160 = smul.addr %s159, 8
      %s161 = scalar_lea.vmem %s0, %s160
      %p162 = scmp.lt.s32.totalorder %s14, 1
      %s163 = scalar_select %p162, %s14, 1
      %s164 = smul.addr %s163, 8
      %s165 = scalar_lea.vmem %s3, %s164
      %v167 = vld [vmem:[%s161] sm:$0xff]
      %v168 = vpack.c.bf16 %v167, %v167
      %v169 = vld [vmem:[%s1] sm:$0xf]
      %v170 = vld [vmem:[%s1 + $0x4] sm:$0xf]
      %v171 = vld [vmem:[%s1 + $0x8] sm:$0xf]
      %v172 = vld [vmem:[%s1 + $0xc] sm:$0xf]
      %v173 = vld [vmem:[%s2] sm:$0x1]
      %v175 = vlaneseq
      %v176 = vshrl.u32 %v175, 7
      %v177 = vsub.s32 0, %v176
      %v178 = vrot.slane %v173, %v177
      %v184 = vunpack.c.l.b16 %v169
      %v185 = vunpack.c.l.b16 %v170
      %v186 = vunpack.c.l.b16 %v171
      %v187 = vunpack.c.l.b16 %v172
      %v188 = vpack.c.b16 %v185, %v184
      %v189 = vpack.c.b16 %v187, %v186
      %vm192 = vcmask 261120
      %v194 = vsel %vm192, %v168, 0
      %196 = vmatprep.subr.bf16.mxu0 0
      %197 = vmatpush1.bf16.msra.mxu0 %v188
      %198 = vmatprep.subr.bf16.mxu0 0
      %199 = vmatpush1.bf16.msra.mxu0 %v189
      %200 = vmatprep.subr.bf16.mxu0 0
      %201 = vmatpush1.bf16.msra.mxu0 0
      %202 = vmatprep.subr.bf16.mxu0 0
      %203 = vmatpush1.bf16.msra.mxu0 0
      %204 = vmatprep.subr.bf16.mxu0 0
      %205 = vmatpush1.bf16.msra.mxu0 0
      %206 = vmatprep.subr.bf16.mxu0 0
      %207 = vmatpush1.bf16.msra.mxu0 0
      %208 = vmatprep.subr.bf16.mxu0 0
      %209 = vmatpush1.bf16.msra.mxu0 0
      %210 = vmatprep.subr.bf16.mxu0 0
      %211 = vmatpush1.bf16.msra.mxu0 0
      %212 = vmatprep.subr.bf16.mxu0 0
      %213 = vmatpush1.bf16.msra.mxu0 0
      %214 = vmatprep.subr.bf16.mxu0 0
      %215 = vmatpush1.bf16.msra.mxu0 0
      %216 = vmatprep.subr.bf16.mxu0 0
      %217 = vmatpush1.bf16.msra.mxu0 0
      %218 = vmatprep.subr.bf16.mxu0 0
      %219 = vmatpush1.bf16.msra.mxu0 0
      %220 = vmatprep.subr.bf16.mxu0 0
      %221 = vmatpush1.bf16.msra.mxu0 0
      %222 = vmatprep.subr.bf16.mxu0 0
      %223 = vmatpush1.bf16.msra.mxu0 0
      %224 = vmatprep.subr.bf16.mxu0 0
      %225 = vmatpush1.bf16.msra.mxu0 0
      %226 = vmatprep.subr.bf16.mxu0 0
      %227 = vmatpush1.bf16.msra.mxu0 0
      %228 = vmatprep.mubr.bf16.mxu0 0
      %229 = vmatmul.mubr.bf16.gmra.mrb[0].mxu0 %v194
      %v230 = vpop.f32.mrb[0].mxu0
      %v231 = vadd.f32 %v178, %v230
      %v232 = vpop.f32.mrb[0].mxu0
      %v233 = vpop.f32.mrb[0].mxu0
      %v234 = vpop.f32.mrb[0].mxu0
      %235 = vdwg.mxu0
      %236 = vst.msk [vmem:[%s165] sm:$0xff] %vm192, %v231
      %p237 = scmp.lt.s32.totalorder %s14, 1
      %s238 = scalar_select %p237, %s14, 1
      %s239 = smul.addr %s238, 8
      %s240 = scalar_lea.vmem %s3, %s239
      // Predicated region
      $region33: #{mae_forward.25} parent=31 // pred_check
        %p241 = pneg %p100
      $region34: #{mae_forward.25} parent=31 // pred_check_branch
        %243 = sbr.rel (%p241) target = $region36
      $region35: #{mae_forward.25} parent=31 // pred_region
        _
      $region36: #{mae_forward.25} parent=31 // pred_fallthru
        _
    $region32: #{mae_forward.25} parent=5 // pred_fallthru
      _
    %p244 = scmp.le.s32.totalorder 2, %s9
    // Predicated region
    $region37: #{mae_forward.25} parent=5 // pred_check
      %p245 = pneg %p244
    $region38: #{mae_forward.25} parent=5 // pred_check_branch
      %247 = sbr.rel (%p245) target = $region40
    $region39: #{mae_forward.25} parent=5 // pred_region
      %s248 = ssub.s32 %s9, 2
      // Predicated region
      $region41: #{mae_forward.25} parent=39 // pred_check
        %p249 = pneg %p106
      $region42: #{mae_forward.25} parent=39 // pred_check_branch
        %251 = sbr.rel (%p249) target = $region44
      $region43: #{mae_forward.25} parent=39 // pred_region
        %p252 = scmp.lt.s32.totalorder %s15, 1
        %s253 = scalar_select %p252, %s15, 1
        %s254 = smul.addr %s253, 8
        %s255 = scalar_lea.vmem %s3, %s254
      $region44: #{mae_forward.25} parent=39 // pred_fallthru
        _
    $region40: #{mae_forward.25} parent=5 // pred_fallthru
      _
  $region6: #{mae_forward.25} parent=0 // loop_footer
    %s13 = sadd.s32 1, %s9
  $region7: #{mae_forward.25} parent=0 // loop_footer_branch
    %8 = sbr.rel target = $region3
  $region8: #{mae_forward.25} parent=0 // loop_exit
    _

// kernel: mae_forward.19
$region0: #{mae_forward.19}
  #allocation0 [shape = 'u32[]', space=smem, size = 0x4, offset = 0x4, fixed_abs, tag = 'smem constant byte address 0x4 - core index']
  #allocation1 [shape = 'u32[144,128]{1,0:T(1,128)}', space=vmem, size = 0x12000, scoped, tag = 'internal scratch']
  %s0 = inlined_call_operand.vmem [shape: f32[2,4,5,8], index: 0, kind: input, shape index: {}]
  %s1 = inlined_call_operand.vmem [shape: f32[2,4,5,8], index: 1, kind: input, shape index: {}]
  %s2 = inlined_call_operand.vmem [shape: f32[2,4,5,8], index: 2, kind: input, shape index: {}]
  %s3 = inlined_call_operand.vmem [shape: f32[2,4,5,8], index: 3, kind: output, shape index: {}]
  %s4 = sld [smem:[#allocation0]]
  $region45: #{mae_forward.19} parent=0
    _
  %s6 = ssub.s32 1, %s4
  %s7 = scalar_select 0, %s6, %s4
  loop: start=0, step=1, limit=4
  $region2: #{mae_forward.19} parent=0 // loop_pre_header
    _
  $region3: #{mae_forward.19} parent=0 // loop_header
    %s9 = sphi 0, %s13
    %p10 = scmp.ge.s32.totalorder %s9, 4
    %s19 = sphi 0, %s21
    %s22 = sphi 0, %s19
    %s23 = sphi 0, %s22
    %s39 = sphi 0, %s23
    %s45 = sphi 0, %s47
    %s48 = sphi 0, %s45
    %s49 = sphi 0, %s48
    %s65 = sphi 0, %s49
    %s71 = sphi 0, %s73
    %s74 = sphi 0, %s71
    %s75 = sphi 0, %s74
    %s91 = sphi 0, %s75
    %s97 = sphi 0, %s99
    %s100 = sphi 0, %s97
    %s101 = sphi 0, %s100
    %s117 = sphi 0, %s101
  $region4: #{mae_forward.19} parent=0 // loop_header_branch
    %12 = sbr.rel (%p10) target = $region8
  $region5: #{mae_forward.19} parent=0 // loop_body
    %s14 = ssub.s32 %s9, 1
    %s15 = ssub.s32 %s9, 2
    %s16 = sadd.s32 %s9, 1
    %s17 = ssub.s32 %s9, %s16
    %p18 = scmp.eq.s32.totalorder %s17, 0
    %s20 = sadd.s32 %s19, 1
    %s21 = scalar_select %p18, %s19, %s20
    %p24 = pneg %p18
    %p25 = scmp.eq.s32.totalorder %s9, 1
    %p26 = por %p24, %p25
    %p27 = scmp.ne.s32.totalorder %s19, %s22
    %p28 = scmp.eq.s32.totalorder %s9, 0
    %p29 = por %p27, %p28
    %p30 = scmp.ne.s32.totalorder %s19, %s22
    %p31 = scmp.eq.s32.totalorder %s14, 1
    %p32 = por %p30, %p31
    %p33 = scmp.ne.s32.totalorder %s22, %s23
    %p34 = scmp.eq.s32.totalorder %s14, 0
    %p35 = por %p33, %p34
    %p36 = scmp.ne.s32.totalorder %s22, %s23
    %p37 = scmp.eq.s32.totalorder %s15, 1
    %p38 = por %p36, %p37
    %p40 = scmp.ne.s32.totalorder %s23, %s39
    %p41 = scmp.eq.s32.totalorder %s15, 0
    %p42 = por %p40, %p41
    %s43 = ssub.s32 %s9, %s16
    %p44 = scmp.eq.s32.totalorder %s43, 0
    %s46 = sadd.s32 %s45, 1
    %s47 = scalar_select %p44, %s45, %s46
    %p50 = pneg %p44
    %p51 = scmp.eq.s32.totalorder %s9, 1
    %p52 = por %p50, %p51
    %p53 = scmp.ne.s32.totalorder %s45, %s48
    %p54 = scmp.eq.s32.totalorder %s9, 0
    %p55 = por %p53, %p54
    %p56 = scmp.ne.s32.totalorder %s45, %s48
    %p57 = scmp.eq.s32.totalorder %s14, 1
    %p58 = por %p56, %p57
    %p59 = scmp.ne.s32.totalorder %s48, %s49
    %p60 = scmp.eq.s32.totalorder %s14, 0
    %p61 = por %p59, %p60
    %p62 = scmp.ne.s32.totalorder %s48, %s49
    %p63 = scmp.eq.s32.totalorder %s15, 1
    %p64 = por %p62, %p63
    %p66 = scmp.ne.s32.totalorder %s49, %s65
    %p67 = scmp.eq.s32.totalorder %s15, 0
    %p68 = por %p66, %p67
    %s69 = ssub.s32 %s9, %s16
    %p70 = scmp.eq.s32.totalorder %s69, 0
    %s72 = sadd.s32 %s71, 1
    %s73 = scalar_select %p70, %s71, %s72
    %p76 = pneg %p70
    %p77 = scmp.eq.s32.totalorder %s9, 1
    %p78 = por %p76, %p77
    %p79 = scmp.ne.s32.totalorder %s71, %s74
    %p80 = scmp.eq.s32.totalorder %s9, 0
    %p81 = por %p79, %p80
    %p82 = scmp.ne.s32.totalorder %s71, %s74
    %p83 = scmp.eq.s32.totalorder %s14, 1
    %p84 = por %p82, %p83
    %p85 = scmp.ne.s32.totalorder %s74, %s75
    %p86 = scmp.eq.s32.totalorder %s14, 0
    %p87 = por %p85, %p86
    %p88 = scmp.ne.s32.totalorder %s74, %s75
    %p89 = scmp.eq.s32.totalorder %s15, 1
    %p90 = por %p88, %p89
    %p92 = scmp.ne.s32.totalorder %s75, %s91
    %p93 = scmp.eq.s32.totalorder %s15, 0
    %p94 = por %p92, %p93
    %s95 = ssub.s32 %s9, %s16
    %p96 = scmp.eq.s32.totalorder %s95, 0
    %s98 = sadd.s32 %s97, 1
    %s99 = scalar_select %p96, %s97, %s98
    %p102 = pneg %p96
    %p103 = scmp.eq.s32.totalorder %s9, 1
    %p104 = por %p102, %p103
    %p105 = scmp.ne.s32.totalorder %s97, %s100
    %p106 = scmp.eq.s32.totalorder %s9, 0
    %p107 = por %p105, %p106
    %p108 = scmp.ne.s32.totalorder %s97, %s100
    %p109 = scmp.eq.s32.totalorder %s14, 1
    %p110 = por %p108, %p109
    %p111 = scmp.ne.s32.totalorder %s100, %s101
    %p112 = scmp.eq.s32.totalorder %s14, 0
    %p113 = por %p111, %p112
    %p114 = scmp.ne.s32.totalorder %s100, %s101
    %p115 = scmp.eq.s32.totalorder %s15, 1
    %p116 = por %p114, %p115
    %p118 = scmp.ne.s32.totalorder %s101, %s117
    %p119 = scmp.eq.s32.totalorder %s15, 0
    %p120 = por %p118, %p119
    %p121 = scmp.le.s32.totalorder 1, %s9
    %p122 = scmp.lt.s32.totalorder %s9, 3
    %p123 = pnand %p121, %p122
    %p124 = pneg %p123
    // Predicated region
    $region9: #{mae_forward.19} parent=5 // pred_check
      _
    $region10: #{mae_forward.19} parent=5 // pred_check_branch
      %126 = sbr.rel (%p123) target = $region12
    $region11: #{mae_forward.19} parent=5 // pred_region
      %s127 = ssub.s32 %s9, 1
    $region12: #{mae_forward.19} parent=5 // pred_fallthru
      _
    %p128 = scmp.lt.s32.totalorder %s9, 2
    // Predicated region
    $region13: #{mae_forward.19} parent=5 // pred_check
      %p129 = pneg %p128
    $region14: #{mae_forward.19} parent=5 // pred_check_branch
      %131 = sbr.rel (%p129) target = $region16
    $region15: #{mae_forward.19} parent=5 // pred_region
      // Predicated region
      $region17: #{mae_forward.19} parent=15 // pred_check
        %p132 = pneg %p29
      $region18: #{mae_forward.19} parent=15 // pred_check_branch
        %134 = sbr.rel (%p132) target = $region20
      $region19: #{mae_forward.19} parent=15 // pred_region
        %p135 = scmp.lt.s32.totalorder %s9, 1
        %s136 = scalar_select %p135, %s9, 1
        %s137 = smul.addr %s136, 4
        %s138 = smul.addr %s137, 8
        %s139 = scalar_lea.vmem %s0, %s138
      $region20: #{mae_forward.19} parent=15 // pred_fallthru
        _
      // Predicated region
      $region21: #{mae_forward.19} parent=15 // pred_check
        %p140 = pneg %p55
      $region22: #{mae_forward.19} parent=15 // pred_check_branch
        %142 = sbr.rel (%p140) target = $region24
      $region23: #{mae_forward.19} parent=15 // pred_region
        %p143 = scmp.lt.s32.totalorder %s9, 1
        %s144 = scalar_select %p143, %s9, 1
        %s145 = smul.addr %s144, 4
        %s146 = smul.addr %s145, 8
        %s147 = scalar_lea.vmem %s1, %s146
      $region24: #{mae_forward.19} parent=15 // pred_fallthru
        _
      // Predicated region
      $region25: #{mae_forward.19} parent=15 // pred_check
        %p148 = pneg %p81
      $region26: #{mae_forward.19} parent=15 // pred_check_branch
        %150 = sbr.rel (%p148) target = $region28
      $region27: #{mae_forward.19} parent=15 // pred_region
        %p151 = scmp.lt.s32.totalorder %s9, 1
        %s152 = scalar_select %p151, %s9, 1
        %s153 = smul.addr %s152, 4
        %s154 = smul.addr %s153, 8
        %s155 = scalar_lea.vmem %s2, %s154
      $region28: #{mae_forward.19} parent=15 // pred_fallthru
        _
    $region16: #{mae_forward.19} parent=5 // pred_fallthru
      _
    %p156 = scmp.le.s32.totalorder 1, %s9
    %p157 = scmp.lt.s32.totalorder %s9, 3
    %p158 = pnand %p156, %p157
    %p159 = pneg %p158
    // Predicated region
    $region29: #{mae_forward.19} parent=5 // pred_check
      _
    $region30: #{mae_forward.19} parent=5 // pred_check_branch
      %161 = sbr.rel (%p158) target = $region32
    $region31: #{mae_forward.19} parent=5 // pred_region
      %s162 = ssub.s32 %s9, 1
      %p163 = scmp.lt.s32.totalorder %s14, 1
      %s164 = scalar_select %p163, %s14, 1
      %s165 = smul.addr %s164, 4
      %s166 = smul.addr %s165, 8
      %s167 = scalar_lea.vmem %s0, %s166
      %p168 = pneg %p35
      %p169 = pneg %p32
      %p170 = scmp.lt.s32.totalorder %s14, 1
      %s171 = scalar_select %p170, %s14, 1
      %s172 = smul.addr %s171, 4
      %s173 = smul.addr %s172, 8
      %s174 = scalar_lea.vmem %s1, %s173
      %p175 = pneg %p61
      %p176 = pneg %p58
      %p177 = scmp.lt.s32.totalorder %s14, 1
      %s178 = scalar_select %p177, %s14, 1
      %s179 = smul.addr %s178, 4
      %s180 = smul.addr %s179, 8
      %s181 = scalar_lea.vmem %s2, %s180
      %p182 = pneg %p87
      %p183 = pneg %p84
      %p184 = pneg %p113
      %p185 = pneg %p110
      %p186 = scmp.lt.s32.totalorder %s14, 1
      %s187 = scalar_select %p186, %s14, 1
      %s188 = smul.addr %s187, 4
      %s189 = smul.addr %s188, 8
      %s190 = scalar_lea.vmem %s3, %s189
      %p191 = scmp.lt.s32.totalorder %s14, 1
      %s192 = scalar_select %p191, %s14, 1
      %s193 = smul.addr %s192, 4
      %s194 = smul.addr %s193, 8
      %s195 = scalar_lea.vmem %s0, %s194
      %p196 = scmp.lt.s32.totalorder %s14, 1
      %s197 = scalar_select %p196, %s14, 1
      %s198 = smul.addr %s197, 4
      %s199 = smul.addr %s198, 8
      %s200 = scalar_lea.vmem %s1, %s199
      %p201 = scmp.lt.s32.totalorder %s14, 1
      %s202 = scalar_select %p201, %s14, 1
      %s203 = smul.addr %s202, 4
      %s204 = smul.addr %s203, 8
      %s205 = scalar_lea.vmem %s2, %s204
      %p206 = scmp.lt.s32.totalorder %s14, 1
      %s207 = scalar_select %p206, %s14, 1
      %s208 = smul.addr %s207, 4
      %s209 = smul.addr %s208, 8
      %s210 = scalar_lea.vmem %s3, %s209
      %v212 = vld [vmem:[%s195] sm:$0x1f]
      %v213 = vld [vmem:[%s195 + $0x8] sm:$0x1f]
      %v214 = vld [vmem:[%s195 + $0x10] sm:$0x1f]
      %v215 = vld [vmem:[%s195 + $0x18] sm:$0x1f]
      %v216 = vpack.c.bf16 %v212, %v212
      %v217 = vpack.c.bf16 %v213, %v213
      %v218 = vpack.c.bf16 %v214, %v214
      %v219 = vpack.c.bf16 %v215, %v215
      %v220 = vld [vmem:[%s200] sm:$0x1f]
      %v221 = vld [vmem:[%s200 + $0x8] sm:$0x1f]
      %v222 = vld [vmem:[%s200 + $0x10] sm:$0x1f]
      %v223 = vld [vmem:[%s200 + $0x18] sm:$0x1f]
      %v224 = vpack.c.bf16 %v220, %v220
      %v225 = vpack.c.bf16 %v221, %v221
      %v226 = vpack.c.bf16 %v222, %v222
      %v227 = vpack.c.bf16 %v223, %v223
      %v228 = vld [vmem:[%s205] sm:$0x1f]
      %v229 = vld [vmem:[%s205 + $0x8] sm:$0x1f]
      %v230 = vld [vmem:[%s205 + $0x10] sm:$0x1f]
      %v231 = vld [vmem:[%s205 + $0x18] sm:$0x1f]
      %v232 = vpack.c.bf16 %v228, %v228
      %v233 = vpack.c.bf16 %v229, %v229
      %v234 = vpack.c.bf16 %v230, %v230
      %v235 = vpack.c.bf16 %v231, %v231
      %vm236 = vcmask 64512
      %v238 = vsel %vm236, %v216, 0
      %v241 = vsel %vm236, %v224, 0
      %243 = vmatprep.subr.bf16.mxu0 0
      %244 = vmatpush1.bf16.xpose.msra.mxu0 %v241
      %245 = vmatprep.subr.bf16.mxu0 0
      %246 = vmatpush1.bf16.xpose.msra.mxu0 0
      %247 = vmatprep.subr.bf16.mxu0 0
      %248 = vmatpush1.bf16.xpose.msra.mxu0 0
      %249 = vmatprep.subr.bf16.mxu0 0
      %250 = vmatpush1.bf16.xpose.msra.mxu0 0
      %251 = vmatprep.subr.bf16.mxu0 0
      %252 = vmatpush1.bf16.xpose.msra.mxu0 0
      %253 = vmatprep.subr.bf16.mxu0 0
      %254 = vmatpush1.bf16.xpose.msra.mxu0 0
      %255 = vmatprep.subr.bf16.mxu0 0
      %256 = vmatpush1.bf16.xpose.msra.mxu0 0
      %257 = vmatprep.subr.bf16.mxu0 0
      %258 = vmatpush1.bf16.xpose.msra.mxu0 0
      %259 = vmatprep.subr.bf16.mxu0 0
      %260 = vmatpush1.bf16.xpose.msra.mxu0 0
      %261 = vmatprep.subr.bf16.mxu0 0
      %262 = vmatpush1.bf16.xpose.msra.mxu0 0
      %263 = vmatprep.subr.bf16.mxu0 0
      %264 = vmatpush1.bf16.xpose.msra.mxu0 0
      %265 = vmatprep.subr.bf16.mxu0 0
      %266 = vmatpush1.bf16.xpose.msra.mxu0 0
      %267 = vmatprep.subr.bf16.mxu0 0
      %268 = vmatpush1.bf16.xpose.msra.mxu0 0
      %269 = vmatprep.subr.bf16.mxu0 0
      %270 = vmatpush1.bf16.xpose.msra.mxu0 0
      %271 = vmatprep.subr.bf16.mxu0 0
      %272 = vmatpush1.bf16.xpose.msra.mxu0 0
      %273 = vmatprep.subr.bf16.mxu0 0
      %274 = vmatpush1.bf16.xpose.msra.mxu0 0
      %275 = vmatprep.mubr.bf16.mxu0 0
      %276 = vmatmul.mubr.bf16.gmra.mrb[0].mxu0 %v238
      %v277 = vpop.f32.mrb[0].mxu0
      %v278 = vadd.f32 0.0, %v277
      %v279 = vpop.f32.mrb[0].mxu0
      %v280 = vpop.f32.mrb[0].mxu0
      %v281 = vpop.f32.mrb[0].mxu0
      %282 = vdwg.mxu0
      %v284 = vsel %vm236, %v217, 0
      %v287 = vsel %vm236, %v225, 0
      %289 = vmatprep.subr.bf16.mxu0 0
      %290 = vmatpush1.bf16.xpose.msra.mxu0 %v287
      %291 = vmatprep.subr.bf16.mxu0 0
      %292 = vmatpush1.bf16.xpose.msra.mxu0 0
      %293 = vmatprep.subr.bf16.mxu0 0
      %294 = vmatpush1.bf16.xpose.msra.mxu0 0
      %295 = vmatprep.subr.bf16.mxu0 0
      %296 = vmatpush1.bf16.xpose.msra.mxu0 0
      %297 = vmatprep.subr.bf16.mxu0 0
      %298 = vmatpush1.bf16.xpose.msra.mxu0 0
      %299 = vmatprep.subr.bf16.mxu0 0
      %300 = vmatpush1.bf16.xpose.msra.mxu0 0
      %301 = vmatprep.subr.bf16.mxu0 0
      %302 = vmatpush1.bf16.xpose.msra.mxu0 0
      %303 = vmatprep.subr.bf16.mxu0 0
      %304 = vmatpush1.bf16.xpose.msra.mxu0 0
      %305 = vmatprep.subr.bf16.mxu0 0
      %306 = vmatpush1.bf16.xpose.msra.mxu0 0
      %307 = vmatprep.subr.bf16.mxu0 0
      %308 = vmatpush1.bf16.xpose.msra.mxu0 0
      %309 = vmatprep.subr.bf16.mxu0 0
      %310 = vmatpush1.bf16.xpose.msra.mxu0 0
      %311 = vmatprep.subr.bf16.mxu0 0
      %312 = vmatpush1.bf16.xpose.msra.mxu0 0
      %313 = vmatprep.subr.bf16.mxu0 0
      %314 = vmatpush1.bf16.xpose.msra.mxu0 0
      %315 = vmatprep.subr.bf16.mxu0 0
      %316 = vmatpush1.bf16.xpose.msra.mxu0 0
      %317 = vmatprep.subr.bf16.mxu0 0
      %318 = vmatpush1.bf16.xpose.msra.mxu0 0
      %319 = vmatprep.subr.bf16.mxu0 0
      %320 = vmatpush1.bf16.xpose.msra.mxu0 0
      %321 = vmatprep.mubr.bf16.mxu0 0
      %322 = vmatmul.mubr.bf16.gmra.mrb[0].mxu0 %v284
      %v323 = vpop.f32.mrb[0].mxu0
      %v324 = vadd.f32 0.0, %v323
      %v325 = vpop.f32.mrb[0].mxu0
      %v326 = vpop.f32.mrb[0].mxu0
      %v327 = vpop.f32.mrb[0].mxu0
      %328 = vdwg.mxu0
      %v330 = vsel %vm236, %v218, 0
      %v333 = vsel %vm236, %v226, 0
      %335 = vmatprep.subr.bf16.mxu0 0
      %336 = vmatpush1.bf16.xpose.msra.mxu0 %v333
      %337 = vmatprep.subr.bf16.mxu0 0
      %338 = vmatpush1.bf16.xpose.msra.mxu0 0
      %339 = vmatprep.subr.bf16.mxu0 0
      %340 = vmatpush1.bf16.xpose.msra.mxu0 0
      %341 = vmatprep.subr.bf16.mxu0 0
      %342 = vmatpush1.bf16.xpose.msra.mxu0 0
      %343 = vmatprep.subr.bf16.mxu0 0
      %344 = vmatpush1.bf16.xpose.msra.mxu0 0
      %345 = vmatprep.subr.bf16.mxu0 0
      %346 = vmatpush1.bf16.xpose.msra.mxu0 0
      %347 = vmatprep.subr.bf16.mxu0 0
      %348 = vmatpush1.bf16.xpose.msra.mxu0 0
      %349 = vmatprep.subr.bf16.mxu0 0
      %350 = vmatpush1.bf16.xpose.msra.mxu0 0
      %351 = vmatprep.subr.bf16.mxu0 0
      %352 = vmatpush1.bf16.xpose.msra.mxu0 0
      %353 = vmatprep.subr.bf16.mxu0 0
      %354 = vmatpush1.bf16.xpose.msra.mxu0 0
      %355 = vmatprep.subr.bf16.mxu0 0
      %356 = vmatpush1.bf16.xpose.msra.mxu0 0
      %357 = vmatprep.subr.bf16.mxu0 0
      %358 = vmatpush1.bf16.xpose.msra.mxu0 0
      %359 = vmatprep.subr.bf16.mxu0 0
      %360 = vmatpush1.bf16.xpose.msra.mxu0 0
      %361 = vmatprep.subr.bf16.mxu0 0
      %362 = vmatpush1.bf16.xpose.msra.mxu0 0
      %363 = vmatprep.subr.bf16.mxu0 0
      %364 = vmatpush1.bf16.xpose.msra.mxu0 0
      %365 = vmatprep.subr.bf16.mxu0 0
      %366 = vmatpush1.bf16.xpose.msra.mxu0 0
      %367 = vmatprep.mubr.bf16.mxu0 0
      %368 = vmatmul.mubr.bf16.gmra.mrb[0].mxu0 %v330
      %v369 = vpop.f32.mrb[0].mxu0
      %v370 = vadd.f32 0.0, %v369
      %v371 = vpop.f32.mrb[0].mxu0
      %v372 = vpop.f32.mrb[0].mxu0
      %v373 = vpop.f32.mrb[0].mxu0
      %374 = vdwg.mxu0
      %v376 = vsel %vm236, %v219, 0
      %v379 = vsel %vm236, %v227, 0
      %381 = vmatprep.subr.bf16.mxu0 0
      %382 = vmatpush1.bf16.xpose.msra.mxu0 %v379
      %383 = vmatprep.subr.bf16.mxu0 0
      %384 = vmatpush1.bf16.xpose.msra.mxu0 0
      %385 = vmatprep.subr.bf16.mxu0 0
      %386 = vmatpush1.bf16.xpose.msra.mxu0 0
      %387 = vmatprep.subr.bf16.mxu0 0
      %388 = vmatpush1.bf16.xpose.msra.mxu0 0
      %389 = vmatprep.subr.bf16.mxu0 0
      %390 = vmatpush1.bf16.xpose.msra.mxu0 0
      %391 = vmatprep.subr.bf16.mxu0 0
      %392 = vmatpush1.bf16.xpose.msra.mxu0 0
      %393 = vmatprep.subr.bf16.mxu0 0
      %394 = vmatpush1.bf16.xpose.msra.mxu0 0
      %395 = vmatprep.subr.bf16.mxu0 0
      %396 = vmatpush1.bf16.xpose.msra.mxu0 0
      %397 = vmatprep.subr.bf16.mxu0 0
      %398 = vmatpush1.bf16.xpose.msra.mxu0 0
      %399 = vmatprep.subr.bf16.mxu0 0
      %400 = vmatpush1.bf16.xpose.msra.mxu0 0
      %401 = vmatprep.subr.bf16.mxu0 0
      %402 = vmatpush1.bf16.xpose.msra.mxu0 0
      %403 = vmatprep.subr.bf16.mxu0 0
      %404 = vmatpush1.bf16.xpose.msra.mxu0 0
      %405 = vmatprep.subr.bf16.mxu0 0
      %406 = vmatpush1.bf16.xpose.msra.mxu0 0
      %407 = vmatprep.subr.bf16.mxu0 0
      %408 = vmatpush1.bf16.xpose.msra.mxu0 0
      %409 = vmatprep.subr.bf16.mxu0 0
      %410 = vmatpush1.bf16.xpose.msra.mxu0 0
      %411 = vmatprep.subr.bf16.mxu0 0
      %412 = vmatpush1.bf16.xpose.msra.mxu0 0
      %413 = vmatprep.mubr.bf16.mxu0 0
      %414 = vmatmul.mubr.bf16.gmra.mrb[0].mxu0 %v376
      %v415 = vpop.f32.mrb[0].mxu0
      %v416 = vadd.f32 0.0, %v415
      %v417 = vpop.f32.mrb[0].mxu0
      %v418 = vpop.f32.mrb[0].mxu0
      %v419 = vpop.f32.mrb[0].mxu0
      %420 = vdwg.mxu0
      %v421 = vmul.f32 %v278, 0.35355338
      %v422 = vmul.f32 %v324, 0.35355338
      %v423 = vmul.f32 %v370, 0.35355338
      %v424 = vmul.f32 %v416, 0.35355338
      %vm425 = vcmask 36864
      %v426 = vsel %vm425, %v421, -inf
      %427 = vmax.xlane.f32.xlu0 %v426
      %v428 = vpop.xlane.xlu0 %427
      %v429 = vsel %vm425, %v422, -inf
      %430 = vmax.xlane.f32.xlu0 %v429
      %v431 = vpop.xlane.xlu0 %430
      %v432 = vsel %vm425, %v423, -inf
      %433 = vmax.xlane.f32.xlu0 %v432
      %v434 = vpop.xlane.xlu0 %433
      %v435 = vsel %vm425, %v424, -inf
      %436 = vmax.xlane.f32.xlu0 %v435
      %v437 = vpop.xlane.xlu0 %436
      %v438 = vsub.f32 %v421, %v428
      %v439 = vsub.f32 %v422, %v431
      %v440 = vsub.f32 %v423, %v434
      %v441 = vsub.f32 %v424, %v437
      %v442 = vmul.f32 %v438, 1.442695
      %v443 = vpow.pop %v442
      %v444 = vmul.f32 %v439, 1.442695
      %v445 = vpow.pop %v444
      %v446 = vmul.f32 %v440, 1.442695
      %v447 = vpow.pop %v446
      %v448 = vmul.f32 %v441, 1.442695
      %v449 = vpow.pop %v448
      %v450 = vsel %vm425, %v443, 0.0
      %451 = vadd.xlane.f32.xlu0 %v450
      %v452 = vpop.xlane.xlu0 %451
      %v453 = vsel %vm425, %v445, 0.0
      %454 = vadd.xlane.f32.xlu0 %v453
      %v455 = vpop.xlane.xlu0 %454
      %v456 = vsel %vm425, %v447, 0.0
      %457 = vadd.xlane.f32.xlu0 %v456
      %v458 = vpop.xlane.xlu0 %457
      %v459 = vsel %vm425, %v449, 0.0
      %460 = vadd.xlane.f32.xlu0 %v459
      %v461 = vpop.xlane.xlu0 %460
      %v462 = vrcp.pop %v452
      %v463 = vrcp.pop %v455
      %v464 = vrcp.pop %v458
      %v465 = vrcp.pop %v461
      %v466 = vmul.f32 %v443, %v462
      %v467 = vmul.f32 %v445, %v463
      %v468 = vmul.f32 %v447, %v464
      %v469 = vmul.f32 %v449, %v465
      %v470 = vpack.c.bf16 %v466, %v466
      %v471 = vpack.c.bf16 %v467, %v467
      %v472 = vpack.c.bf16 %v468, %v468
      %v473 = vpack.c.bf16 %v469, %v469
      %vm474 = vcmask 39936
      %v476 = vsel %vm474, %v470, 0
      %vm478 = vcmask 1041408
      %vm479 = vcmask 1042432
      %v480 = vsel %vm478, 4294967295, 65535
      %v481 = vsel %vm479, %v480, 0
      %v483 = vand.u32 %v232, %v481
      %485 = vmatprep.subr.bf16.mxu0 0
      %486 = vmatpush1.bf16.msra.mxu0 %v483
      %487 = vmatprep.subr.bf16.mxu0 0
      %488 = vmatpush1.bf16.msra.mxu0 0
      %489 = vmatprep.subr.bf16.mxu0 0
      %490 = vmatpush1.bf16.msra.mxu0 0
      %491 = vmatprep.subr.bf16.mxu0 0
      %492 = vmatpush1.bf16.msra.mxu0 0
      %493 = vmatprep.subr.bf16.mxu0 0
      %494 = vmatpush1.bf16.msra.mxu0 0
      %495 = vmatprep.subr.bf16.mxu0 0
      %496 = vmatpush1.bf16.msra.mxu0 0
      %497 = vmatprep.subr.bf16.mxu0 0
      %498 = vmatpush1.bf16.msra.mxu0 0
      %499 = vmatprep.subr.bf16.mxu0 0
      %500 = vmatpush1.bf16.msra.mxu0 0
      %501 = vmatprep.subr.bf16.mxu0 0
      %502 = vmatpush1.bf16.msra.mxu0 0
      %503 = vmatprep.subr.bf16.mxu0 0
      %504 = vmatpush1.bf16.msra.mxu0 0
      %505 = vmatprep.subr.bf16.mxu0 0
      %506 = vmatpush1.bf16.msra.mxu0 0
      %507 = vmatprep.subr.bf16.mxu0 0
      %508 = vmatpush1.bf16.msra.mxu0 0
      %509 = vmatprep.subr.bf16.mxu0 0
      %510 = vmatpush1.bf16.msra.mxu0 0
      %511 = vmatprep.subr.bf16.mxu0 0
      %512 = vmatpush1.bf16.msra.mxu0 0
      %513 = vmatprep.subr.bf16.mxu0 0
      %514 = vmatpush1.bf16.msra.mxu0 0
      %515 = vmatprep.subr.bf16.mxu0 0
      %516 = vmatpush1.bf16.msra.mxu0 0
      %517 = vmatprep.mubr.bf16.mxu0 0
      %518 = vmatmul.mubr.bf16.gmra.mrb[0].mxu0 %v476
      %v519 = vpop.f32.mrb[0].mxu0
      %v520 = vadd.f32 0.0, %v519
      %v521 = vpop.f32.mrb[0].mxu0
      %v522 = vpop.f32.mrb[0].mxu0
      %v523 = vpop.f32.mrb[0].mxu0
      %524 = vdwg.mxu0
      %v526 = vsel %vm474, %v471, 0
      %v529 = vand.u32 %v233, %v481
      %531 = vmatprep.subr.bf16.mxu0 0
      %532 = vmatpush1.bf16.msra.mxu0 %v529
      %533 = vmatprep.subr.bf16.mxu0 0
      %534 = vmatpush1.bf16.msra.mxu0 0
      %535 = vmatprep.subr.bf16.mxu0 0
      %536 = vmatpush1.bf16.msra.mxu0 0
      %537 = vmatprep.subr.bf16.mxu0 0
      %538 = vmatpush1.bf16.msra.mxu0 0
      %539 = vmatprep.subr.bf16.mxu0 0
      %540 = vmatpush1.bf16.msra.mxu0 0
      %541 = vmatprep.subr.bf16.mxu0 0
      %542 = vmatpush1.bf16.msra.mxu0 0
      %543 = vmatprep.subr.bf16.mxu0 0
      %544 = vmatpush1.bf16.msra.mxu0 0
      %545 = vmatprep.subr.bf16.mxu0 0
      %546 = vmatpush1.bf16.msra.mxu0 0
      %547 = vmatprep.subr.bf16.mxu0 0
      %548 = vmatpush1.bf16.msra.mxu0 0
      %549 = vmatprep.subr.bf16.mxu0 0
      %550 = vmatpush1.bf16.msra.mxu0 0
      %551 = vmatprep.subr.bf16.mxu0 0
      %552 = vmatpush1.bf16.msra.mxu0 0
      %553 = vmatprep.subr.bf16.mxu0 0
      %554 = vmatpush1.bf16.msra.mxu0 0
      %555 = vmatprep.subr.bf16.mxu0 0
      %556 = vmatpush1.bf16.msra.mxu0 0
      %557 = vmatprep.subr.bf16.mxu0 0
      %558 = vmatpush1.bf16.msra.mxu0 0
      %559 = vmatprep.subr.bf16.mxu0 0
      %560 = vmatpush1.bf16.msra.mxu0 0
      %561 = vmatprep.subr.bf16.mxu0 0
      %562 = vmatpush1.bf16.msra.mxu0 0
      %563 = vmatprep.mubr.bf16.mxu0 0
      %564 = vmatmul.mubr.bf16.gmra.mrb[0].mxu0 %v526
      %v565 = vpop.f32.mrb[0].mxu0
      %v566 = vadd.f32 0.0, %v565
      %v567 = vpop.f32.mrb[0].mxu0
      %v568 = vpop.f32.mrb[0].mxu0
      %v569 = vpop.f32.mrb[0].mxu0
      %570 = vdwg.mxu0
      %v572 = vsel %vm474, %v472, 0
      %v575 = vand.u32 %v234, %v481
      %577 = vmatprep.subr.bf16.mxu0 0
      %578 = vmatpush1.bf16.msra.mxu0 %v575
      %579 = vmatprep.subr.bf16.mxu0 0
      %580 = vmatpush1.bf16.msra.mxu0 0
      %581 = vmatprep.subr.bf16.mxu0 0
      %582 = vmatpush1.bf16.msra.mxu0 0
      %583 = vmatprep.subr.bf16.mxu0 0
      %584 = vmatpush1.bf16.msra.mxu0 0
      %585 = vmatprep.subr.bf16.mxu0 0
      %586 = vmatpush1.bf16.msra.mxu0 0
      %587 = vmatprep.subr.bf16.mxu0 0
      %588 = vmatpush1.bf16.msra.mxu0 0
      %589 = vmatprep.subr.bf16.mxu0 0
      %590 = vmatpush1.bf16.msra.mxu0 0
      %591 = vmatprep.subr.bf16.mxu0 0
      %592 = vmatpush1.bf16.msra.mxu0 0
      %593 = vmatprep.subr.bf16.mxu0 0
      %594 = vmatpush1.bf16.msra.mxu0 0
      %595 = vmatprep.subr.bf16.mxu0 0
      %596 = vmatpush1.bf16.msra.mxu0 0
      %597 = vmatprep.subr.bf16.mxu0 0
      %598 = vmatpush1.bf16.msra.mxu0 0
      %599 = vmatprep.subr.bf16.mxu0 0
      %600 = vmatpush1.bf16.msra.mxu0 0
      %601 = vmatprep.subr.bf16.mxu0 0
      %602 = vmatpush1.bf16.msra.mxu0 0
      %603 = vmatprep.subr.bf16.mxu0 0
      %604 = vmatpush1.bf16.msra.mxu0 0
      %605 = vmatprep.subr.bf16.mxu0 0
      %606 = vmatpush1.bf16.msra.mxu0 0
      %607 = vmatprep.subr.bf16.mxu0 0
      %608 = vmatpush1.bf16.msra.mxu0 0
      %609 = vmatprep.mubr.bf16.mxu0 0
      %610 = vmatmul.mubr.bf16.gmra.mrb[0].mxu0 %v572
      %v611 = vpop.f32.mrb[0].mxu0
      %v612 = vadd.f32 0.0, %v611
      %v613 = vpop.f32.mrb[0].mxu0
      %v614 = vpop.f32.mrb[0].mxu0
      %v615 = vpop.f32.mrb[0].mxu0
      %616 = vdwg.mxu0
      %v618 = vsel %vm474, %v473, 0
      %v621 = vand.u32 %v235, %v481
      %623 = vmatprep.subr.bf16.mxu0 0
      %624 = vmatpush1.bf16.msra.mxu0 %v621
      %625 = vmatprep.subr.bf16.mxu0 0
      %626 = vmatpush1.bf16.msra.mxu0 0
      %627 = vmatprep.subr.bf16.mxu0 0
      %628 = vmatpush1.bf16.msra.mxu0 0
      %629 = vmatprep.subr.bf16.mxu0 0
      %630 = vmatpush1.bf16.msra.mxu0 0
      %631 = vmatprep.subr.bf16.mxu0 0
      %632 = vmatpush1.bf16.msra.mxu0 0
      %633 = vmatprep.subr.bf16.mxu0 0
      %634 = vmatpush1.bf16.msra.mxu0 0
      %635 = vmatprep.subr.bf16.mxu0 0
      %636 = vmatpush1.bf16.msra.mxu0 0
      %637 = vmatprep.subr.bf16.mxu0 0
      %638 = vmatpush1.bf16.msra.mxu0 0
      %639 = vmatprep.subr.bf16.mxu0 0
      %640 = vmatpush1.bf16.msra.mxu0 0
      %641 = vmatprep.subr.bf16.mxu0 0
      %642 = vmatpush1.bf16.msra.mxu0 0
      %643 = vmatprep.subr.bf16.mxu0 0
      %644 = vmatpush1.bf16.msra.mxu0 0
      %645 = vmatprep.subr.bf16.mxu0 0
      %646 = vmatpush1.bf16.msra.mxu0 0
      %647 = vmatprep.subr.bf16.mxu0 0
      %648 = vmatpush1.bf16.msra.mxu0 0
      %649 = vmatprep.subr.bf16.mxu0 0
      %650 = vmatpush1.bf16.msra.mxu0 0
      %651 = vmatprep.subr.bf16.mxu0 0
      %652 = vmatpush1.bf16.msra.mxu0 0
      %653 = vmatprep.subr.bf16.mxu0 0
      %654 = vmatpush1.bf16.msra.mxu0 0
      %655 = vmatprep.mubr.bf16.mxu0 0
      %656 = vmatmul.mubr.bf16.gmra.mrb[0].mxu0 %v618
      %v657 = vpop.f32.mrb[0].mxu0
      %v658 = vadd.f32 0.0, %v657
      %v659 = vpop.f32.mrb[0].mxu0
      %v660 = vpop.f32.mrb[0].mxu0
      %v661 = vpop.f32.mrb[0].mxu0
      %662 = vdwg.mxu0
      %vm663 = vcmask 61440
      %664 = vst.msk [vmem:[%s210] sm:$0x1f] %vm663, %v520
      %665 = vst.msk [vmem:[%s210 + $0x8] sm:$0x1f] %vm663, %v566
      %666 = vst.msk [vmem:[%s210 + $0x10] sm:$0x1f] %vm663, %v612
      %667 = vst.msk [vmem:[%s210 + $0x18] sm:$0x1f] %vm663, %v658
      %p668 = scmp.lt.s32.totalorder %s14, 1
      %s669 = scalar_select %p668, %s14, 1
      %s670 = smul.addr %s669, 4
      %s671 = smul.addr %s670, 8
      %s672 = scalar_lea.vmem %s3, %s671
      // Predicated region
      $region33: #{mae_forward.19} parent=31 // pred_check
        %p673 = pneg %p110
      $region34: #{mae_forward.19} parent=31 // pred_check_branch
        %675 = sbr.rel (%p673) target = $region36
      $region35: #{mae_forward.19} parent=31 // pred_region
        _
      $region36: #{mae_forward.19} parent=31 // pred_fallthru
        _
    $region32: #{mae_forward.19} parent=5 // pred_fallthru
      _
    %p676 = scmp.le.s32.totalorder 2, %s9
    // Predicated region
    $region37: #{mae_forward.19} parent=5 // pred_check
      %p677 = pneg %p676
    $region38: #{mae_forward.19} parent=5 // pred_check_branch
      %679 = sbr.rel (%p677) target = $region40
    $region39: #{mae_forward.19} parent=5 // pred_region
      %s680 = ssub.s32 %s9, 2
      // Predicated region
      $region41: #{mae_forward.19} parent=39 // pred_check
        %p681 = pneg %p116
      $region42: #{mae_forward.19} parent=39 // pred_check_branch
        %683 = sbr.rel (%p681) target = $region44
      $region43: #{mae_forward.19} parent=39 // pred_region
        %p684 = scmp.lt.s32.totalorder %s15, 1
        %s685 = scalar_select %p684, %s15, 1
        %s686 = smul.addr %s685, 4
        %s687 = smul.addr %s686, 8
        %s688 = scalar_lea.vmem %s3, %s687
      $region44: #{mae_forward.19} parent=39 // pred_fallthru
        _
    $region40: #{mae_forward.19} parent=5 // pred_fallthru
      _
  $region6: #{mae_forward.19} parent=0 // loop_footer
    %s13 = sadd.s32 1, %s9
  $region7: #{mae_forward.19} parent=0 // loop_footer_branch
    %8 = sbr.rel target = $region3
  $region8: #{mae_forward.19} parent=0 // loop_exit
    _

// kernel: mae_forward.20
$region0: #{mae_forward.20}
  #allocation0 [shape = 'u32[]', space=smem, size = 0x4, offset = 0x4, fixed_abs, tag = 'smem constant byte address 0x4 - core index']
  #allocation1 [shape = 'u32[144,128]{1,0:T(1,128)}', space=vmem, size = 0x12000, scoped, tag = 'internal scratch']
  %s0 = inlined_call_operand.vmem [shape: f32[16,32], index: 0, kind: input, shape index: {}]
  %s1 = inlined_call_operand.vmem [shape: f32[16,32], index: 1, kind: input, shape index: {}]
  %s2 = inlined_call_operand.vmem [shape: bf16[32,32], index: 2, kind: input, shape index: {}]
  %s3 = inlined_call_operand.vmem [shape: f32[4,32], index: 3, kind: input, shape index: {}]
  %s4 = inlined_call_operand.vmem [shape: bf16[32,64], index: 4, kind: input, shape index: {}]
  %s5 = inlined_call_operand.vmem [shape: f32[1,64], index: 5, kind: input, shape index: {}]
  %s6 = inlined_call_operand.vmem [shape: bf16[64,32], index: 6, kind: input, shape index: {}]
  %s7 = inlined_call_operand.vmem [shape: f32[16,32], index: 7, kind: output, shape index: {}]
  %s8 = sld [smem:[#allocation0]]
  $region61: #{mae_forward.20} parent=0
    _
  %s10 = ssub.s32 1, %s8
  %s11 = scalar_select 0, %s10, %s8
  loop: start=0, step=1, limit=4
  $region2: #{mae_forward.20} parent=0 // loop_pre_header
    _
  $region3: #{mae_forward.20} parent=0 // loop_header
    %s13 = sphi 0, %s17
    %p14 = scmp.ge.s32.totalorder %s13, 4
    %s23 = sphi 0, %s25
    %s26 = sphi 0, %s23
    %s27 = sphi 0, %s26
    %s43 = sphi 0, %s27
    %s49 = sphi 0, %s51
    %s52 = sphi 0, %s49
    %s53 = sphi 0, %s52
    %s69 = sphi 0, %s53
    %s73 = sphi 0, %s73
    %s75 = sphi 0, %s73
    %s76 = sphi 0, %s75
    %s90 = sphi 0, %s76
    %s94 = sphi 0, %s94
    %s96 = sphi 0, %s94
    %s97 = sphi 0, %s96
    %s111 = sphi 0, %s97
    %s115 = sphi 0, %s115
    %s117 = sphi 0, %s115
    %s118 = sphi 0, %s117
    %s132 = sphi 0, %s118
    %s136 = sphi 0, %s136
    %s138 = sphi 0, %s136
    %s139 = sphi 0, %s138
    %s153 = sphi 0, %s139
    %s157 = sphi 0, %s157
    %s159 = sphi 0, %s157
    %s160 = sphi 0, %s159
    %s174 = sphi 0, %s160
    %s180 = sphi 0, %s182
    %s183 = sphi 0, %s180
    %s184 = sphi 0, %s183
    %s200 = sphi 0, %s184
  $region4: #{mae_forward.20} parent=0 // loop_header_branch
    %16 = sbr.rel (%p14) target = $region8
  $region5: #{mae_forward.20} parent=0 // loop_body
    %s18 = ssub.s32 %s13, 1
    %s19 = ssub.s32 %s13, 2
    %s20 = sadd.s32 %s13, 1
    %s21 = ssub.s32 %s13, %s20
    %p22 = scmp.eq.s32.totalorder %s21, 0
    %s24 = sadd.s32 %s23, 1
    %s25 = scalar_select %p22, %s23, %s24
    %p28 = pneg %p22
    %p29 = scmp.eq.s32.totalorder %s13, 1
    %p30 = por %p28, %p29
    %p31 = scmp.ne.s32.totalorder %s23, %s26
    %p32 = scmp.eq.s32.totalorder %s13, 0
    %p33 = por %p31, %p32
    %p34 = scmp.ne.s32.totalorder %s23, %s26
    %p35 = scmp.eq.s32.totalorder %s18, 1
    %p36 = por %p34, %p35
    %p37 = scmp.ne.s32.totalorder %s26, %s27
    %p38 = scmp.eq.s32.totalorder %s18, 0
    %p39 = por %p37, %p38
    %p40 = scmp.ne.s32.totalorder %s26, %s27
    %p41 = scmp.eq.s32.totalorder %s19, 1
    %p42 = por %p40, %p41
    %p44 = scmp.ne.s32.totalorder %s27, %s43
    %p45 = scmp.eq.s32.totalorder %s19, 0
    %p46 = por %p44, %p45
    %s47 = ssub.s32 %s13, %s20
    %p48 = scmp.eq.s32.totalorder %s47, 0
    %s50 = sadd.s32 %s49, 1
    %s51 = scalar_select %p48, %s49, %s50
    %p54 = pneg %p48
    %p55 = scmp.eq.s32.totalorder %s13, 1
    %p56 = por %p54, %p55
    %p57 = scmp.ne.s32.totalorder %s49, %s52
    %p58 = scmp.eq.s32.totalorder %s13, 0
    %p59 = por %p57, %p58
    %p60 = scmp.ne.s32.totalorder %s49, %s52
    %p61 = scmp.eq.s32.totalorder %s18, 1
    %p62 = por %p60, %p61
    %p63 = scmp.ne.s32.totalorder %s52, %s53
    %p64 = scmp.eq.s32.totalorder %s18, 0
    %p65 = por %p63, %p64
    %p66 = scmp.ne.s32.totalorder %s52, %s53
    %p67 = scmp.eq.s32.totalorder %s19, 1
    %p68 = por %p66, %p67
    %p70 = scmp.ne.s32.totalorder %s53, %s69
    %p71 = scmp.eq.s32.totalorder %s19, 0
    %p72 = por %p70, %p71
    %s74 = sadd.s32 %s73, 1
    %p77 = scmp.eq.s32.totalorder %s13, 1
    %p78 = scmp.ne.s32.totalorder %s73, %s75
    %p79 = scmp.eq.s32.totalorder %s13, 0
    %p80 = por %p78, %p79
    %p81 = scmp.ne.s32.totalorder %s73, %s75
    %p82 = scmp.eq.s32.totalorder %s18, 1
    %p83 = por %p81, %p82
    %p84 = scmp.ne.s32.totalorder %s75, %s76
    %p85 = scmp.eq.s32.totalorder %s18, 0
    %p86 = por %p84, %p85
    %p87 = scmp.ne.s32.totalorder %s75, %s76
    %p88 = scmp.eq.s32.totalorder %s19, 1
    %p89 = por %p87, %p88
    %p91 = scmp.ne.s32.totalorder %s76, %s90
    %p92 = scmp.eq.s32.totalorder %s19, 0
    %p93 = por %p91, %p92
    %s95 = sadd.s32 %s94, 1
    %p98 = scmp.eq.s32.totalorder %s13, 1
    %p99 = scmp.ne.s32.totalorder %s94, %s96
    %p100 = scmp.eq.s32.totalorder %s13, 0
    %p101 = por %p99, %p100
    %p102 = scmp.ne.s32.totalorder %s94, %s96
    %p103 = scmp.eq.s32.totalorder %s18, 1
    %p104 = por %p102, %p103
    %p105 = scmp.ne.s32.totalorder %s96, %s97
    %p106 = scmp.eq.s32.totalorder %s18, 0
    %p107 = por %p105, %p106
    %p108 = scmp.ne.s32.totalorder %s96, %s97
    %p109 = scmp.eq.s32.totalorder %s19, 1
    %p110 = por %p108, %p109
    %p112 = scmp.ne.s32.totalorder %s97, %s111
    %p113 = scmp.eq.s32.totalorder %s19, 0
    %p114 = por %p112, %p113
    %s116 = sadd.s32 %s115, 1
    %p119 = scmp.eq.s32.totalorder %s13, 1
    %p120 = scmp.ne.s32.totalorder %s115, %s117
    %p121 = scmp.eq.s32.totalorder %s13, 0
    %p122 = por %p120, %p121
    %p123 = scmp.ne.s32.totalorder %s115, %s117
    %p124 = scmp.eq.s32.totalorder %s18, 1
    %p125 = por %p123, %p124
    %p126 = scmp.ne.s32.totalorder %s117, %s118
    %p127 = scmp.eq.s32.totalorder %s18, 0
    %p128 = por %p126, %p127
    %p129 = scmp.ne.s32.totalorder %s117, %s118
    %p130 = scmp.eq.s32.totalorder %s19, 1
    %p131 = por %p129, %p130
    %p133 = scmp.ne.s32.totalorder %s118, %s132
    %p134 = scmp.eq.s32.totalorder %s19, 0
    %p135 = por %p133, %p134
    %s137 = sadd.s32 %s136, 1
    %p140 = scmp.eq.s32.totalorder %s13, 1
    %p141 = scmp.ne.s32.totalorder %s136, %s138
    %p142 = scmp.eq.s32.totalorder %s13, 0
    %p143 = por %p141, %p142
    %p144 = scmp.ne.s32.totalorder %s136, %s138
    %p145 = scmp.eq.s32.totalorder %s18, 1
    %p146 = por %p144, %p145
    %p147 = scmp.ne.s32.totalorder %s138, %s139
    %p148 = scmp.eq.s32.totalorder %s18, 0
    %p149 = por %p147, %p148
    %p150 = scmp.ne.s32.totalorder %s138, %s139
    %p151 = scmp.eq.s32.totalorder %s19, 1
    %p152 = por %p150, %p151
    %p154 = scmp.ne.s32.totalorder %s139, %s153
    %p155 = scmp.eq.s32.totalorder %s19, 0
    %p156 = por %p154, %p155
    %s158 = sadd.s32 %s157, 1
    %p161 = scmp.eq.s32.totalorder %s13, 1
    %p162 = scmp.ne.s32.totalorder %s157, %s159
    %p163 = scmp.eq.s32.totalorder %s13, 0
    %p164 = por %p162, %p163
    %p165 = scmp.ne.s32.totalorder %s157, %s159
    %p166 = scmp.eq.s32.totalorder %s18, 1
    %p167 = por %p165, %p166
    %p168 = scmp.ne.s32.totalorder %s159, %s160
    %p169 = scmp.eq.s32.totalorder %s18, 0
    %p170 = por %p168, %p169
    %p171 = scmp.ne.s32.totalorder %s159, %s160
    %p172 = scmp.eq.s32.totalorder %s19, 1
    %p173 = por %p171, %p172
    %p175 = scmp.ne.s32.totalorder %s160, %s174
    %p176 = scmp.eq.s32.totalorder %s19, 0
    %p177 = por %p175, %p176
    %s178 = ssub.s32 %s13, %s20
    %p179 = scmp.eq.s32.totalorder %s178, 0
    %s181 = sadd.s32 %s180, 1
    %s182 = scalar_select %p179, %s180, %s181
    %p185 = pneg %p179
    %p186 = scmp.eq.s32.totalorder %s13, 1
    %p187 = por %p185, %p186
    %p188 = scmp.ne.s32.totalorder %s180, %s183
    %p189 = scmp.eq.s32.totalorder %s13, 0
    %p190 = por %p188, %p189
    %p191 = scmp.ne.s32.totalorder %s180, %s183
    %p192 = scmp.eq.s32.totalorder %s18, 1
    %p193 = por %p191, %p192
    %p194 = scmp.ne.s32.totalorder %s183, %s184
    %p195 = scmp.eq.s32.totalorder %s18, 0
    %p196 = por %p194, %p195
    %p197 = scmp.ne.s32.totalorder %s183, %s184
    %p198 = scmp.eq.s32.totalorder %s19, 1
    %p199 = por %p197, %p198
    %p201 = scmp.ne.s32.totalorder %s184, %s200
    %p202 = scmp.eq.s32.totalorder %s19, 0
    %p203 = por %p201, %p202
    %p204 = scmp.le.s32.totalorder 1, %s13
    %p205 = scmp.lt.s32.totalorder %s13, 3
    %p206 = pnand %p204, %p205
    %p207 = pneg %p206
    // Predicated region
    $region9: #{mae_forward.20} parent=5 // pred_check
      _
    $region10: #{mae_forward.20} parent=5 // pred_check_branch
      %209 = sbr.rel (%p206) target = $region12
    $region11: #{mae_forward.20} parent=5 // pred_region
      %s210 = ssub.s32 %s13, 1
      // Predicated region
      $region13: #{mae_forward.20} parent=11 // pred_check
        %p211 = pneg %p86
      $region14: #{mae_forward.20} parent=11 // pred_check_branch
        %213 = sbr.rel (%p211) target = $region16
      $region15: #{mae_forward.20} parent=11 // pred_region
        _
      $region16: #{mae_forward.20} parent=11 // pred_fallthru
        _
      // Predicated region
      $region17: #{mae_forward.20} parent=11 // pred_check
        %p214 = pneg %p107
      $region18: #{mae_forward.20} parent=11 // pred_check_branch
        %216 = sbr.rel (%p214) target = $region20
      $region19: #{mae_forward.20} parent=11 // pred_region
        _
      $region20: #{mae_forward.20} parent=11 // pred_fallthru
        _
      // Predicated region
      $region21: #{mae_forward.20} parent=11 // pred_check
        %p217 = pneg %p128
      $region22: #{mae_forward.20} parent=11 // pred_check_branch
        %219 = sbr.rel (%p217) target = $region24
      $region23: #{mae_forward.20} parent=11 // pred_region
        _
      $region24: #{mae_forward.20} parent=11 // pred_fallthru
        _
      // Predicated region
      $region25: #{mae_forward.20} parent=11 // pred_check
        %p220 = pneg %p149
      $region26: #{mae_forward.20} parent=11 // pred_check_branch
        %222 = sbr.rel (%p220) target = $region28
      $region27: #{mae_forward.20} parent=11 // pred_region
        _
      $region28: #{mae_forward.20} parent=11 // pred_fallthru
        _
      // Predicated region
      $region29: #{mae_forward.20} parent=11 // pred_check
        %p223 = pneg %p170
      $region30: #{mae_forward.20} parent=11 // pred_check_branch
        %225 = sbr.rel (%p223) target = $region32
      $region31: #{mae_forward.20} parent=11 // pred_region
        _
      $region32: #{mae_forward.20} parent=11 // pred_fallthru
        _
    $region12: #{mae_forward.20} parent=5 // pred_fallthru
      _
    %p226 = scmp.lt.s32.totalorder %s13, 2
    // Predicated region
    $region33: #{mae_forward.20} parent=5 // pred_check
      %p227 = pneg %p226
    $region34: #{mae_forward.20} parent=5 // pred_check_branch
      %229 = sbr.rel (%p227) target = $region36
    $region35: #{mae_forward.20} parent=5 // pred_region
      // Predicated region
      $region37: #{mae_forward.20} parent=35 // pred_check
        %p230 = pneg %p33
      $region38: #{mae_forward.20} parent=35 // pred_check_branch
        %232 = sbr.rel (%p230) target = $region40
      $region39: #{mae_forward.20} parent=35 // pred_region
        %p233 = scmp.lt.s32.totalorder %s13, 1
        %s234 = scalar_select %p233, %s13, 1
        %s235 = smul.addr %s234, 8
        %s236 = scalar_lea.vmem %s0, %s235
      $region40: #{mae_forward.20} parent=35 // pred_fallthru
        _
      // Predicated region
      $region41: #{mae_forward.20} parent=35 // pred_check
        %p237 = pneg %p59
      $region42: #{mae_forward.20} parent=35 // pred_check_branch
        %239 = sbr.rel (%p237) target = $region44
      $region43: #{mae_forward.20} parent=35 // pred_region
        %p240 = scmp.lt.s32.totalorder %s13, 1
        %s241 = scalar_select %p240, %s13, 1
        %s242 = smul.addr %s241, 8
        %s243 = scalar_lea.vmem %s1, %s242
      $region44: #{mae_forward.20} parent=35 // pred_fallthru
        _
    $region36: #{mae_forward.20} parent=5 // pred_fallthru
      _
    %p244 = scmp.le.s32.totalorder 1, %s13
    %p245 = scmp.lt.s32.totalorder %s13, 3
    %p246 = pnand %p244, %p245
    %p247 = pneg %p246
    // Predicated region
    $region45: #{mae_forward.20} parent=5 // pred_check
      _
    $region46: #{mae_forward.20} parent=5 // pred_check_branch
      %249 = sbr.rel (%p246) target = $region48
    $region47: #{mae_forward.20} parent=5 // pred_region
      %s250 = ssub.s32 %s13, 1
      %p251 = scmp.lt.s32.totalorder %s18, 1
      %s252 = scalar_select %p251, %s18, 1
      %s253 = smul.addr %s252, 8
      %s254 = scalar_lea.vmem %s0, %s253
      %p255 = pneg %p39
      %p256 = pneg %p36
      %p257 = scmp.lt.s32.totalorder %s18, 1
      %s258 = scalar_select %p257, %s18, 1
      %s259 = smul.addr %s258, 8
      %s260 = scalar_lea.vmem %s1, %s259
      %p261 = pneg %p65
      %p262 = pneg %p62
      %p263 = pneg %p86
      %p264 = pneg %p83
      %p265 = pneg %p107
      %p266 = pneg %p104
      %p267 = pneg %p128
      %p268 = pneg %p125
      %p269 = pneg %p149
      %p270 = pneg %p146
      %p271 = pneg %p170
      %p272 = pneg %p167
      %p273 = pneg %p196
      %p274 = pneg %p193
      %p275 = scmp.lt.s32.totalorder %s18, 1
      %s276 = scalar_select %p275, %s18, 1
      %s277 = smul.addr %s276, 8
      %s278 = scalar_lea.vmem %s7, %s277
      %p279 = scmp.lt.s32.totalorder %s18, 1
      %s280 = scalar_select %p279, %s18, 1
      %s281 = smul.addr %s280, 8
      %s282 = scalar_lea.vmem %s0, %s281
      %p283 = scmp.lt.s32.totalorder %s18, 1
      %s284 = scalar_select %p283, %s18, 1
      %s285 = smul.addr %s284, 8
      %s286 = scalar_lea.vmem %s1, %s285
      %p287 = scmp.lt.s32.totalorder %s18, 1
      %s288 = scalar_select %p287, %s18, 1
      %s289 = smul.addr %s288, 8
      %s290 = scalar_lea.vmem %s7, %s289
      %v292 = vld [vmem:[%s3] sm:$0x1]
      %v293 = vld [vmem:[%s3 + $0x1] sm:$0x1]
      %v294 = vld [vmem:[%s3 + $0x2] sm:$0x1]
      %v295 = vld [vmem:[%s3 + $0x3] sm:$0x1]
      %v296 = vld [vmem:[%s282] sm:$0xff]
      %v297 = vld [vmem:[%s286] sm:$0xff]
      %v298 = vpack.c.bf16 %v297, %v297
      %v299 = vld [vmem:[%s2] sm:$0xf]
      %v300 = vld [vmem:[%s2 + $0x4] sm:$0xf]
      %v301 = vld [vmem:[%s2 + $0x8] sm:$0xf]
      %v302 = vld [vmem:[%s2 + $0xc] sm:$0xf]
      %v307 = vunpack.c.l.b16 %v299
      %v308 = vunpack.c.l.b16 %v300
      %v309 = vunpack.c.l.b16 %v301
      %v310 = vunpack.c.l.b16 %v302
      %v311 = vpack.c.b16 %v308, %v307
      %v312 = vpack.c.b16 %v310, %v309
      %vm315 = vcmask 261120
      %v317 = vsel %vm315, %v298, 0
      %319 = vmatprep.subr.bf16.mxu0 0
      %320 = vmatpush1.bf16.msra.mxu0 %v311
      %321 = vmatprep.subr.bf16.mxu0 0
      %322 = vmatpush1.bf16.msra.mxu0 %v312
      %323 = vmatprep.subr.bf16.mxu0 0
      %324 = vmatpush1.bf16.msra.mxu0 0
      %325 = vmatprep.subr.bf16.mxu0 0
      %326 = vmatpush1.bf16.msra.mxu0 0
      %327 = vmatprep.subr.bf16.mxu0 0
      %328 = vmatpush1.bf16.msra.mxu0 0
      %329 = vmatprep.subr.bf16.mxu0 0
      %330 = vmatpush1.bf16.msra.mxu0 0
      %331 = vmatprep.subr.bf16.mxu0 0
      %332 = vmatpush1.bf16.msra.mxu0 0
      %333 = vmatprep.subr.bf16.mxu0 0
      %334 = vmatpush1.bf16.msra.mxu0 0
      %335 = vmatprep.subr.bf16.mxu0 0
      %336 = vmatpush1.bf16.msra.mxu0 0
      %337 = vmatprep.subr.bf16.mxu0 0
      %338 = vmatpush1.bf16.msra.mxu0 0
      %339 = vmatprep.subr.bf16.mxu0 0
      %340 = vmatpush1.bf16.msra.mxu0 0
      %341 = vmatprep.subr.bf16.mxu0 0
      %342 = vmatpush1.bf16.msra.mxu0 0
      %343 = vmatprep.subr.bf16.mxu0 0
      %344 = vmatpush1.bf16.msra.mxu0 0
      %345 = vmatprep.subr.bf16.mxu0 0
      %346 = vmatpush1.bf16.msra.mxu0 0
      %347 = vmatprep.subr.bf16.mxu0 0
      %348 = vmatpush1.bf16.msra.mxu0 0
      %349 = vmatprep.subr.bf16.mxu0 0
      %350 = vmatpush1.bf16.msra.mxu0 0
      %351 = vmatprep.mubr.bf16.mxu0 0
      %352 = vmatmul.mubr.bf16.gmra.mrb[0].mxu0 %v317
      %v353 = vpop.f32.mrb[0].mxu0
      %v354 = vadd.f32 0.0, %v353
      %v355 = vpop.f32.mrb[0].mxu0
      %v356 = vpop.f32.mrb[0].mxu0
      %v357 = vpop.f32.mrb[0].mxu0
      %358 = vdwg.mxu0
      %v359 = vadd.f32 %v296, %v354
      %v360 = vlaneseq
      %v361 = vshrl.u32 %v360, 7
      %v362 = vsub.s32 0, %v361
      %v363 = vrot.slane %v292, %v362
      %v364 = vadd.f32 %v359, %v363
      %v365 = vsel %vm315, %v364, 0.0
      %366 = vadd.xlane.f32.xlu0 %v365
      %v367 = vpop.xlane.xlu0 %366
      %v368 = vrcp.pop 32.0
      %v369 = vmul.f32 %v367, %v368
      %v370 = vsub.f32 %v364, %v369
      %v371 = vmul.f32 %v370, %v370
      %v372 = vsel %vm315, %v371, 0.0
      %373 = vadd.xlane.f32.xlu0 %v372
      %v374 = vpop.xlane.xlu0 %373
      %v375 = vmul.f32 %v374, %v368
      %v376 = vadd.f32 %v375, 1e-05
      %v377 = vrsqrt.pop %v376
      %v378 = vmul.f32 %v370, %v377
      %v379 = vlaneseq
      %v380 = vshrl.u32 %v379, 7
      %v381 = vsub.s32 0, %v380
      %v382 = vrot.slane %v293, %v381
      %v383 = vmul.f32 %v378, %v382
      %v384 = vlaneseq
      %v385 = vshrl.u32 %v384, 7
      %v386 = vsub.s32 0, %v385
      %v387 = vrot.slane %v294, %v386
      %v388 = vadd.f32 %v383, %v387
      %v389 = vpack.c.bf16 %v388, %v388
      %v390 = vld [vmem:[%s4] sm:$0xf]
      %v391 = vld [vmem:[%s4 + $0x4] sm:$0xf]
      %v392 = vld [vmem:[%s4 + $0x8] sm:$0xf]
      %v393 = vld [vmem:[%s4 + $0xc] sm:$0xf]
      %v394 = vld [vmem:[%s5] sm:$0x1]
      %v396 = vlaneseq
      %v397 = vshrl.u32 %v396, 7
      %v398 = vsub.s32 0, %v397
      %v399 = vrot.slane %v394, %v398
      %v405 = vunpack.c.l.b16 %v390
      %v406 = vunpack.c.l.b16 %v391
      %v407 = vunpack.c.l.b16 %v392
      %v408 = vunpack.c.l.b16 %v393
      %v409 = vpack.c.b16 %v406, %v405
      %v410 = vpack.c.b16 %v408, %v407
      %v414 = vsel %vm315, %v389, 0
      %416 = vmatprep.subr.bf16.mxu0 0
      %417 = vmatpush1.bf16.msra.mxu0 %v409
      %418 = vmatprep.subr.bf16.mxu0 0
      %419 = vmatpush1.bf16.msra.mxu0 %v410
      %420 = vmatprep.subr.bf16.mxu0 0
      %421 = vmatpush1.bf16.msra.mxu0 0
      %422 = vmatprep.subr.bf16.mxu0 0
      %423 = vmatpush1.bf16.msra.mxu0 0
      %424 = vmatprep.subr.bf16.mxu0 0
      %425 = vmatpush1.bf16.msra.mxu0 0
      %426 = vmatprep.subr.bf16.mxu0 0
      %427 = vmatpush1.bf16.msra.mxu0 0
      %428 = vmatprep.subr.bf16.mxu0 0
      %429 = vmatpush1.bf16.msra.mxu0 0
      %430 = vmatprep.subr.bf16.mxu0 0
      %431 = vmatpush1.bf16.msra.mxu0 0
      %432 = vmatprep.subr.bf16.mxu0 0
      %433 = vmatpush1.bf16.msra.mxu0 0
      %434 = vmatprep.subr.bf16.mxu0 0
      %435 = vmatpush1.bf16.msra.mxu0 0
      %436 = vmatprep.subr.bf16.mxu0 0
      %437 = vmatpush1.bf16.msra.mxu0 0
      %438 = vmatprep.subr.bf16.mxu0 0
      %439 = vmatpush1.bf16.msra.mxu0 0
      %440 = vmatprep.subr.bf16.mxu0 0
      %441 = vmatpush1.bf16.msra.mxu0 0
      %442 = vmatprep.subr.bf16.mxu0 0
      %443 = vmatpush1.bf16.msra.mxu0 0
      %444 = vmatprep.subr.bf16.mxu0 0
      %445 = vmatpush1.bf16.msra.mxu0 0
      %446 = vmatprep.subr.bf16.mxu0 0
      %447 = vmatpush1.bf16.msra.mxu0 0
      %448 = vmatprep.mubr.bf16.mxu0 0
      %449 = vmatmul.mubr.bf16.gmra.mrb[0].mxu0 %v414
      %v450 = vpop.f32.mrb[0].mxu0
      %v451 = vadd.f32 %v399, %v450
      %v452 = vpop.f32.mrb[0].mxu0
      %v453 = vpop.f32.mrb[0].mxu0
      %v454 = vpop.f32.mrb[0].mxu0
      %455 = vdwg.mxu0
      %v456 = vmul.f32 %v451, %v451
      %v457 = vmul.f32 %v451, %v456
      %v458 = vmul.f32 %v457, 0.044715
      %v459 = vadd.f32 %v451, %v458
      %v460 = vmul.f32 %v459, 0.7978846
      %v461 = vtanh.pop %v460
      %v462 = vadd.f32 %v461, 1.0
      %v463 = vmul.f32 %v462, 0.5
      %v464 = vmul.f32 %v451, %v463
      %v465 = vpack.c.bf16 %v464, %v464
      %v466 = vld [vmem:[%s6] sm:$0xf]
      %v467 = vld [vmem:[%s6 + $0x4] sm:$0xf]
      %v468 = vld [vmem:[%s6 + $0x8] sm:$0xf]
      %v469 = vld [vmem:[%s6 + $0xc] sm:$0xf]
      %v470 = vld [vmem:[%s6 + $0x10] sm:$0xf]
      %v471 = vld [vmem:[%s6 + $0x14] sm:$0xf]
      %v472 = vld [vmem:[%s6 + $0x18] sm:$0xf]
      %v473 = vld [vmem:[%s6 + $0x1c] sm:$0xf]
      %v482 = vunpack.c.l.b16 %v466
      %v483 = vunpack.c.l.b16 %v467
      %v484 = vunpack.c.l.b16 %v468
      %v485 = vunpack.c.l.b16 %v469
      %v486 = vunpack.c.l.b16 %v470
      %v487 = vunpack.c.l.b16 %v471
      %v488 = vunpack.c.l.b16 %v472
      %v489 = vunpack.c.l.b16 %v473
      %v490 = vpack.c.b16 %v483, %v482
      %v491 = vpack.c.b16 %v485, %v484
      %v492 = vpack.c.b16 %v487, %v486
      %v493 = vpack.c.b16 %v489, %v488
      %vm498 = vcmask 523264
      %v500 = vsel %vm498, %v465, 0
      %502 = vmatprep.subr.bf16.mxu0 0
      %503 = vmatpush1.bf16.msra.mxu0 %v490
      %504 = vmatprep.subr.bf16.mxu0 0
      %505 = vmatpush1.bf16.msra.mxu0 %v491
      %506 = vmatprep.subr.bf16.mxu0 0
      %507 = vmatpush1.bf16.msra.mxu0 %v492
      %508 = vmatprep.subr.bf16.mxu0 0
      %509 = vmatpush1.bf16.msra.mxu0 %v493
      %510 = vmatprep.subr.bf16.mxu0 0
      %511 = vmatpush1.bf16.msra.mxu0 0
      %512 = vmatprep.subr.bf16.mxu0 0
      %513 = vmatpush1.bf16.msra.mxu0 0
      %514 = vmatprep.subr.bf16.mxu0 0
      %515 = vmatpush1.bf16.msra.mxu0 0
      %516 = vmatprep.subr.bf16.mxu0 0
      %517 = vmatpush1.bf16.msra.mxu0 0
      %518 = vmatprep.subr.bf16.mxu0 0
      %519 = vmatpush1.bf16.msra.mxu0 0
      %520 = vmatprep.subr.bf16.mxu0 0
      %521 = vmatpush1.bf16.msra.mxu0 0
      %522 = vmatprep.subr.bf16.mxu0 0
      %523 = vmatpush1.bf16.msra.mxu0 0
      %524 = vmatprep.subr.bf16.mxu0 0
      %525 = vmatpush1.bf16.msra.mxu0 0
      %526 = vmatprep.subr.bf16.mxu0 0
      %527 = vmatpush1.bf16.msra.mxu0 0
      %528 = vmatprep.subr.bf16.mxu0 0
      %529 = vmatpush1.bf16.msra.mxu0 0
      %530 = vmatprep.subr.bf16.mxu0 0
      %531 = vmatpush1.bf16.msra.mxu0 0
      %532 = vmatprep.subr.bf16.mxu0 0
      %533 = vmatpush1.bf16.msra.mxu0 0
      %534 = vmatprep.mubr.bf16.mxu0 0
      %535 = vmatmul.mubr.bf16.gmra.mrb[0].mxu0 %v500
      %v536 = vpop.f32.mrb[0].mxu0
      %v537 = vadd.f32 0.0, %v536
      %v538 = vpop.f32.mrb[0].mxu0
      %v539 = vpop.f32.mrb[0].mxu0
      %v540 = vpop.f32.mrb[0].mxu0
      %541 = vdwg.mxu0
      %v542 = vadd.f32 %v364, %v537
      %v543 = vlaneseq
      %v544 = vshrl.u32 %v543, 7
      %v545 = vsub.s32 0, %v544
      %v546 = vrot.slane %v295, %v545
      %v547 = vadd.f32 %v542, %v546
      %548 = vst.msk [vmem:[%s290] sm:$0xff] %vm315, %v547
      %p549 = scmp.lt.s32.totalorder %s18, 1
      %s550 = scalar_select %p549, %s18, 1
      %s551 = smul.addr %s550, 8
      %s552 = scalar_lea.vmem %s7, %s551
      // Predicated region
      $region49: #{mae_forward.20} parent=47 // pred_check
        %p553 = pneg %p193
      $region50: #{mae_forward.20} parent=47 // pred_check_branch
        %555 = sbr.rel (%p553) target = $region52
      $region51: #{mae_forward.20} parent=47 // pred_region
        _
      $region52: #{mae_forward.20} parent=47 // pred_fallthru
        _
    $region48: #{mae_forward.20} parent=5 // pred_fallthru
      _
    %p556 = scmp.le.s32.totalorder 2, %s13
    // Predicated region
    $region53: #{mae_forward.20} parent=5 // pred_check
      %p557 = pneg %p556
    $region54: #{mae_forward.20} parent=5 // pred_check_branch
      %559 = sbr.rel (%p557) target = $region56
    $region55: #{mae_forward.20} parent=5 // pred_region
      %s560 = ssub.s32 %s13, 2
      // Predicated region
      $region57: #{mae_forward.20} parent=55 // pred_check
        %p561 = pneg %p199
      $region58: #{mae_forward.20} parent=55 // pred_check_branch
        %563 = sbr.rel (%p561) target = $region60
      $region59: #{mae_forward.20} parent=55 // pred_region
        %p564 = scmp.lt.s32.totalorder %s19, 1
        %s565 = scalar_select %p564, %s19, 1
        %s566 = smul.addr %s565, 8
        %s567 = scalar_lea.vmem %s7, %s566
      $region60: #{mae_forward.20} parent=55 // pred_fallthru
        _
    $region56: #{mae_forward.20} parent=5 // pred_fallthru
      _
  $region6: #{mae_forward.20} parent=0 // loop_footer
    %s17 = sadd.s32 1, %s13
  $region7: #{mae_forward.20} parent=0 // loop_footer_branch
    %12 = sbr.rel target = $region3
  $region8: #{mae_forward.20} parent=0 // loop_exit
    _

// kernel: mae_forward.26
$region0: #{mae_forward.26}
  #allocation0 [shape = 'u32[]', space=smem, size = 0x4, offset = 0x4, fixed_abs, tag = 'smem constant byte address 0x4 - core index']
  #allocation1 [shape = 'u32[144,128]{1,0:T(1,128)}', space=vmem, size = 0x12000, scoped, tag = 'internal scratch']
  %s0 = inlined_call_operand.vmem [shape: f32[48,32], index: 0, kind: input, shape index: {}]
  %s1 = inlined_call_operand.vmem [shape: f32[2,32], index: 1, kind: input, shape index: {}]
  %s2 = inlined_call_operand.vmem [shape: bf16[32,96], index: 2, kind: input, shape index: {}]
  %s3 = inlined_call_operand.vmem [shape: f32[1,96], index: 3, kind: input, shape index: {}]
  %s4 = inlined_call_operand.vmem [shape: f32[48,96], index: 4, kind: output, shape index: {}]
  %s5 = sld [smem:[#allocation0]]
  $region49: #{mae_forward.26} parent=0
    _
  %s7 = ssub.s32 1, %s5
  %s8 = scalar_select 0, %s7, %s5
  loop: start=0, step=1, limit=4
  $region2: #{mae_forward.26} parent=0 // loop_pre_header
    _
  $region3: #{mae_forward.26} parent=0 // loop_header
    %s10 = sphi 0, %s14
    %p11 = scmp.ge.s32.totalorder %s10, 4
    %s20 = sphi 0, %s22
    %s23 = sphi 0, %s20
    %s24 = sphi 0, %s23
    %s40 = sphi 0, %s24
    %s44 = sphi 0, %s44
    %s46 = sphi 0, %s44
    %s47 = sphi 0, %s46
    %s61 = sphi 0, %s47
    %s65 = sphi 0, %s65
    %s67 = sphi 0, %s65
    %s68 = sphi 0, %s67
    %s82 = sphi 0, %s68
    %s86 = sphi 0, %s86
    %s88 = sphi 0, %s86
    %s89 = sphi 0, %s88
    %s103 = sphi 0, %s89
    %s109 = sphi 0, %s111
    %s112 = sphi 0, %s109
    %s113 = sphi 0, %s112
    %s129 = sphi 0, %s113
  $region4: #{mae_forward.26} parent=0 // loop_header_branch
    %13 = sbr.rel (%p11) target = $region8
  $region5: #{mae_forward.26} parent=0 // loop_body
    %s15 = ssub.s32 %s10, 1
    %s16 = ssub.s32 %s10, 2
    %s17 = sadd.s32 %s10, 1
    %s18 = ssub.s32 %s10, %s17
    %p19 = scmp.eq.s32.totalorder %s18, 0
    %s21 = sadd.s32 %s20, 1
    %s22 = scalar_select %p19, %s20, %s21
    %p25 = pneg %p19
    %p26 = scmp.eq.s32.totalorder %s10, 1
    %p27 = por %p25, %p26
    %p28 = scmp.ne.s32.totalorder %s20, %s23
    %p29 = scmp.eq.s32.totalorder %s10, 0
    %p30 = por %p28, %p29
    %p31 = scmp.ne.s32.totalorder %s20, %s23
    %p32 = scmp.eq.s32.totalorder %s15, 1
    %p33 = por %p31, %p32
    %p34 = scmp.ne.s32.totalorder %s23, %s24
    %p35 = scmp.eq.s32.totalorder %s15, 0
    %p36 = por %p34, %p35
    %p37 = scmp.ne.s32.totalorder %s23, %s24
    %p38 = scmp.eq.s32.totalorder %s16, 1
    %p39 = por %p37, %p38
    %p41 = scmp.ne.s32.totalorder %s24, %s40
    %p42 = scmp.eq.s32.totalorder %s16, 0
    %p43 = por %p41, %p42
    %s45 = sadd.s32 %s44, 1
    %p48 = scmp.eq.s32.totalorder %s10, 1
    %p49 = scmp.ne.s32.totalorder %s44, %s46
    %p50 = scmp.eq.s32.totalorder %s10, 0
    %p51 = por %p49, %p50
    %p52 = scmp.ne.s32.totalorder %s44, %s46
    %p53 = scmp.eq.s32.totalorder %s15, 1
    %p54 = por %p52, %p53
    %p55 = scmp.ne.s32.totalorder %s46, %s47
    %p56 = scmp.eq.s32.totalorder %s15, 0
    %p57 = por %p55, %p56
    %p58 = scmp.ne.s32.totalorder %s46, %s47
    %p59 = scmp.eq.s32.totalorder %s16, 1
    %p60 = por %p58, %p59
    %p62 = scmp.ne.s32.totalorder %s47, %s61
    %p63 = scmp.eq.s32.totalorder %s16, 0
    %p64 = por %p62, %p63
    %s66 = sadd.s32 %s65, 1
    %p69 = scmp.eq.s32.totalorder %s10, 1
    %p70 = scmp.ne.s32.totalorder %s65, %s67
    %p71 = scmp.eq.s32.totalorder %s10, 0
    %p72 = por %p70, %p71
    %p73 = scmp.ne.s32.totalorder %s65, %s67
    %p74 = scmp.eq.s32.totalorder %s15, 1
    %p75 = por %p73, %p74
    %p76 = scmp.ne.s32.totalorder %s67, %s68
    %p77 = scmp.eq.s32.totalorder %s15, 0
    %p78 = por %p76, %p77
    %p79 = scmp.ne.s32.totalorder %s67, %s68
    %p80 = scmp.eq.s32.totalorder %s16, 1
    %p81 = por %p79, %p80
    %p83 = scmp.ne.s32.totalorder %s68, %s82
    %p84 = scmp.eq.s32.totalorder %s16, 0
    %p85 = por %p83, %p84
    %s87 = sadd.s32 %s86, 1
    %p90 = scmp.eq.s32.totalorder %s10, 1
    %p91 = scmp.ne.s32.totalorder %s86, %s88
    %p92 = scmp.eq.s32.totalorder %s10, 0
    %p93 = por %p91, %p92
    %p94 = scmp.ne.s32.totalorder %s86, %s88
    %p95 = scmp.eq.s32.totalorder %s15, 1
    %p96 = por %p94, %p95
    %p97 = scmp.ne.s32.totalorder %s88, %s89
    %p98 = scmp.eq.s32.totalorder %s15, 0
    %p99 = por %p97, %p98
    %p100 = scmp.ne.s32.totalorder %s88, %s89
    %p101 = scmp.eq.s32.totalorder %s16, 1
    %p102 = por %p100, %p101
    %p104 = scmp.ne.s32.totalorder %s89, %s103
    %p105 = scmp.eq.s32.totalorder %s16, 0
    %p106 = por %p104, %p105
    %s107 = ssub.s32 %s10, %s17
    %p108 = scmp.eq.s32.totalorder %s107, 0
    %s110 = sadd.s32 %s109, 1
    %s111 = scalar_select %p108, %s109, %s110
    %p114 = pneg %p108
    %p115 = scmp.eq.s32.totalorder %s10, 1
    %p116 = por %p114, %p115
    %p117 = scmp.ne.s32.totalorder %s109, %s112
    %p118 = scmp.eq.s32.totalorder %s10, 0
    %p119 = por %p117, %p118
    %p120 = scmp.ne.s32.totalorder %s109, %s112
    %p121 = scmp.eq.s32.totalorder %s15, 1
    %p122 = por %p120, %p121
    %p123 = scmp.ne.s32.totalorder %s112, %s113
    %p124 = scmp.eq.s32.totalorder %s15, 0
    %p125 = por %p123, %p124
    %p126 = scmp.ne.s32.totalorder %s112, %s113
    %p127 = scmp.eq.s32.totalorder %s16, 1
    %p128 = por %p126, %p127
    %p130 = scmp.ne.s32.totalorder %s113, %s129
    %p131 = scmp.eq.s32.totalorder %s16, 0
    %p132 = por %p130, %p131
    %p133 = scmp.le.s32.totalorder 1, %s10
    %p134 = scmp.lt.s32.totalorder %s10, 3
    %p135 = pnand %p133, %p134
    %p136 = pneg %p135
    // Predicated region
    $region9: #{mae_forward.26} parent=5 // pred_check
      _
    $region10: #{mae_forward.26} parent=5 // pred_check_branch
      %138 = sbr.rel (%p135) target = $region12
    $region11: #{mae_forward.26} parent=5 // pred_region
      %s139 = ssub.s32 %s10, 1
      // Predicated region
      $region13: #{mae_forward.26} parent=11 // pred_check
        %p140 = pneg %p57
      $region14: #{mae_forward.26} parent=11 // pred_check_branch
        %142 = sbr.rel (%p140) target = $region16
      $region15: #{mae_forward.26} parent=11 // pred_region
        _
      $region16: #{mae_forward.26} parent=11 // pred_fallthru
        _
      // Predicated region
      $region17: #{mae_forward.26} parent=11 // pred_check
        %p143 = pneg %p78
      $region18: #{mae_forward.26} parent=11 // pred_check_branch
        %145 = sbr.rel (%p143) target = $region20
      $region19: #{mae_forward.26} parent=11 // pred_region
        _
      $region20: #{mae_forward.26} parent=11 // pred_fallthru
        _
      // Predicated region
      $region21: #{mae_forward.26} parent=11 // pred_check
        %p146 = pneg %p99
      $region22: #{mae_forward.26} parent=11 // pred_check_branch
        %148 = sbr.rel (%p146) target = $region24
      $region23: #{mae_forward.26} parent=11 // pred_region
        _
      $region24: #{mae_forward.26} parent=11 // pred_fallthru
        _
    $region12: #{mae_forward.26} parent=5 // pred_fallthru
      _
    %p149 = scmp.lt.s32.totalorder %s10, 2
    // Predicated region
    $region25: #{mae_forward.26} parent=5 // pred_check
      %p150 = pneg %p149
    $region26: #{mae_forward.26} parent=5 // pred_check_branch
      %152 = sbr.rel (%p150) target = $region28
    $region27: #{mae_forward.26} parent=5 // pred_region
      // Predicated region
      $region29: #{mae_forward.26} parent=27 // pred_check
        %p153 = pneg %p30
      $region30: #{mae_forward.26} parent=27 // pred_check_branch
        %155 = sbr.rel (%p153) target = $region32
      $region31: #{mae_forward.26} parent=27 // pred_region
        %s156 = smul.u32 3, %s10
        %p157 = scmp.lt.s32.totalorder %s156, 5
        %s158 = scalar_select %p157, %s156, 5
        %s159 = smul.addr %s158, 8
        %s160 = scalar_lea.vmem %s0, %s159
        %s161 = smul.u32 3, %s10
      $region32: #{mae_forward.26} parent=27 // pred_fallthru
        _
    $region28: #{mae_forward.26} parent=5 // pred_fallthru
      _
    %p162 = scmp.le.s32.totalorder 1, %s10
    %p163 = scmp.lt.s32.totalorder %s10, 3
    %p164 = pnand %p162, %p163
    %p165 = pneg %p164
    // Predicated region
    $region33: #{mae_forward.26} parent=5 // pred_check
      _
    $region34: #{mae_forward.26} parent=5 // pred_check_branch
      %167 = sbr.rel (%p164) target = $region36
    $region35: #{mae_forward.26} parent=5 // pred_region
      %s168 = ssub.s32 %s10, 1
      %s169 = smul.u32 3, %s15
      %p170 = scmp.lt.s32.totalorder %s169, 5
      %s171 = scalar_select %p170, %s169, 5
      %s172 = smul.addr %s171, 8
      %s173 = scalar_lea.vmem %s0, %s172
      %p174 = pneg %p36
      %p175 = pneg %p33
      %p176 = pneg %p57
      %p177 = pneg %p54
      %p178 = pneg %p78
      %p179 = pneg %p75
      %p180 = pneg %p99
      %p181 = pneg %p96
      %p182 = pneg %p125
      %p183 = pneg %p122
      %s184 = smul.u32 3, %s15
      %p185 = scmp.lt.s32.totalorder %s184, 5
      %s186 = scalar_select %p185, %s184, 5
      %s187 = smul.addr %s186, 8
      %s188 = scalar_lea.vmem %s4, %s187
      %s189 = smul.u32 3, %s15
      %p190 = scmp.lt.s32.totalorder %s189, 5
      %s191 = scalar_select %p190, %s189, 5
      %s192 = smul.addr %s191, 8
      %s193 = scalar_lea.vmem %s0, %s192
      %s194 = smul.u32 3, %s15
      %s195 = smul.u32 3, %s15
      %p196 = scmp.lt.s32.totalorder %s195, 5
      %s197 = scalar_select %p196, %s195, 5
      %s198 = smul.addr %s197, 8
      %s199 = scalar_lea.vmem %s4, %s198
      %s200 = smul.u32 3, %s15
      %v202 = vld [vmem:[%s193] sm:$0xff]
      %v203 = vld [vmem:[%s193 + $0x8] sm:$0xff]
      %v204 = vld [vmem:[%s193 + $0x10] sm:$0xff]
      %v205 = vld [vmem:[%s1] sm:$0x1]
      %v206 = vld [vmem:[%s1 + $0x1] sm:$0x1]
      %vm207 = vcmask 261120
      %v208 = vsel %vm207, %v202, 0.0
      %209 = vadd.xlane.f32.xlu0 %v208
      %v210 = vpop.xlane.xlu0 %209
      %v211 = vsel %vm207, %v203, 0.0
      %212 = vadd.xlane.f32.xlu0 %v211
      %v213 = vpop.xlane.xlu0 %212
      %v214 = vsel %vm207, %v204, 0.0
      %215 = vadd.xlane.f32.xlu0 %v214
      %v216 = vpop.xlane.xlu0 %215
      %v217 = vrcp.pop 32.0
      %v218 = vmul.f32 %v210, %v217
      %v219 = vmul.f32 %v213, %v217
      %v220 = vmul.f32 %v216, %v217
      %v221 = vsub.f32 %v202, %v218
      %v222 = vsub.f32 %v203, %v219
      %v223 = vsub.f32 %v204, %v220
      %v224 = vmul.f32 %v221, %v221
      %v225 = vmul.f32 %v222, %v222
      %v226 = vmul.f32 %v223, %v223
      %v227 = vsel %vm207, %v224, 0.0
      %228 = vadd.xlane.f32.xlu0 %v227
      %v229 = vpop.xlane.xlu0 %228
      %v230 = vsel %vm207, %v225, 0.0
      %231 = vadd.xlane.f32.xlu0 %v230
      %v232 = vpop.xlane.xlu0 %231
      %v233 = vsel %vm207, %v226, 0.0
      %234 = vadd.xlane.f32.xlu0 %v233
      %v235 = vpop.xlane.xlu0 %234
      %v236 = vmul.f32 %v229, %v217
      %v237 = vmul.f32 %v232, %v217
      %v238 = vmul.f32 %v235, %v217
      %v239 = vadd.f32 %v236, 1e-05
      %v240 = vadd.f32 %v237, 1e-05
      %v241 = vadd.f32 %v238, 1e-05
      %v242 = vrsqrt.pop %v239
      %v243 = vrsqrt.pop %v240
      %v244 = vrsqrt.pop %v241
      %v245 = vmul.f32 %v221, %v242
      %v246 = vmul.f32 %v222, %v243
      %v247 = vmul.f32 %v223, %v244
      %v248 = vlaneseq
      %v249 = vshrl.u32 %v248, 7
      %v250 = vsub.s32 0, %v249
      %v251 = vrot.slane %v205, %v250
      %v252 = vmul.f32 %v245, %v251
      %v253 = vmul.f32 %v246, %v251
      %v254 = vmul.f32 %v247, %v251
      %v255 = vlaneseq
      %v256 = vshrl.u32 %v255, 7
      %v257 = vsub.s32 0, %v256
      %v258 = vrot.slane %v206, %v257
      %v259 = vadd.f32 %v252, %v258
      %v260 = vadd.f32 %v253, %v258
      %v261 = vadd.f32 %v254, %v258
      %v262 = vpack.c.bf16 %v260, %v259
      %v263 = vpack.c.bf16 %v261, %v261
      %v264 = vld [vmem:[%s2] sm:$0xf]
      %v265 = vld [vmem:[%s2 + $0x4] sm:$0xf]
      %v266 = vld [vmem:[%s2 + $0x8] sm:$0xf]
      %v267 = vld [vmem:[%s2 + $0xc] sm:$0xf]
      %v268 = vld [vmem:[%s3] sm:$0x1]
      %v270 = vlaneseq
      %v271 = vshrl.u32 %v270, 7
      %v272 = vsub.s32 0, %v271
      %v273 = vrot.slane %v268, %v272
      %v279 = vunpack.c.l.b16 %v264
      %v280 = vunpack.c.l.b16 %v265
      %v281 = vunpack.c.l.b16 %v266
      %v282 = vunpack.c.l.b16 %v267
      %v283 = vpack.c.b16 %v280, %v279
      %v284 = vpack.c.b16 %v282, %v281
      %v288 = vsel %vm207, %v262, 0
      %v291 = vsel %vm207, %v263, 0
      %293 = vmatprep.subr.bf16.mxu0 0
      %294 = vmatpush1.bf16.msra.mxu0 %v283
      %295 = vmatprep.subr.bf16.mxu0 0
      %296 = vmatpush1.bf16.msra.mxu0 %v284
      %297 = vmatprep.subr.bf16.mxu0 0
      %298 = vmatpush1.bf16.msra.mxu0 0
      %299 = vmatprep.subr.bf16.mxu0 0
      %300 = vmatpush1.bf16.msra.mxu0 0
      %301 = vmatprep.subr.bf16.mxu0 0
      %302 = vmatpush1.bf16.msra.mxu0 0
      %303 = vmatprep.subr.bf16.mxu0 0
      %304 = vmatpush1.bf16.msra.mxu0 0
      %305 = vmatprep.subr.bf16.mxu0 0
      %306 = vmatpush1.bf16.msra.mxu0 0
      %307 = vmatprep.subr.bf16.mxu0 0
      %308 = vmatpush1.bf16.msra.mxu0 0
      %309 = vmatprep.subr.bf16.mxu0 0
      %310 = vmatpush1.bf16.msra.mxu0 0
      %311 = vmatprep.subr.bf16.mxu0 0
      %312 = vmatpush1.bf16.msra.mxu0 0
      %313 = vmatprep.subr.bf16.mxu0 0
      %314 = vmatpush1.bf16.msra.mxu0 0
      %315 = vmatprep.subr.bf16.mxu0 0
      %316 = vmatpush1.bf16.msra.mxu0 0
      %317 = vmatprep.subr.bf16.mxu0 0
      %318 = vmatpush1.bf16.msra.mxu0 0
      %319 = vmatprep.subr.bf16.mxu0 0
      %320 = vmatpush1.bf16.msra.mxu0 0
      %321 = vmatprep.subr.bf16.mxu0 0
      %322 = vmatpush1.bf16.msra.mxu0 0
      %323 = vmatprep.subr.bf16.mxu0 0
      %324 = vmatpush1.bf16.msra.mxu0 0
      %325 = vmatprep.mubr.bf16.mxu0 0
      %326 = vmatmul.mubr.bf16.gmra.mrb[0].mxu0 %v288
      %v327 = vpop.f32.mrb[0].mxu0
      %v328 = vadd.f32 %v273, %v327
      %v329 = vpop.f32.mrb[0].mxu0
      %v330 = vpop.f32.mrb[0].mxu0
      %v331 = vadd.f32 %v273, %v330
      %v332 = vpop.f32.mrb[0].mxu0
      %333 = vmatprep.mubr.bf16.mxu0 0
      %334 = vmatmul.mubr.bf16.gmra.mrb[0].mxu0 %v291
      %v335 = vpop.f32.mrb[0].mxu0
      %v336 = vadd.f32 %v273, %v335
      %v337 = vpop.f32.mrb[0].mxu0
      %v338 = vpop.f32.mrb[0].mxu0
      %v339 = vpop.f32.mrb[0].mxu0
      %340 = vdwg.mxu0
      %vm341 = vcmask 785408
      %342 = vst.msk [vmem:[%s199] sm:$0xff] %vm341, %v328
      %343 = vst.msk [vmem:[%s199 + $0x8] sm:$0xff] %vm341, %v331
      %344 = vst.msk [vmem:[%s199 + $0x10] sm:$0xff] %vm341, %v336
      %s345 = smul.u32 3, %s15
      %p346 = scmp.lt.s32.totalorder %s345, 5
      %s347 = scalar_select %p346, %s345, 5
      %s348 = smul.addr %s347, 8
      %s349 = scalar_lea.vmem %s4, %s348
      // Predicated region
      $region37: #{mae_forward.26} parent=35 // pred_check
        %p350 = pneg %p122
      $region38: #{mae_forward.26} parent=35 // pred_check_branch
        %352 = sbr.rel (%p350) target = $region40
      $region39: #{mae_forward.26} parent=35 // pred_region
        %s353 = smul.u32 3, %s15
      $region40: #{mae_forward.26} parent=35 // pred_fallthru
        _
    $region36: #{mae_forward.26} parent=5 // pred_fallthru
      _
    %p354 = scmp.le.s32.totalorder 2, %s10
    // Predicated region
    $region41: #{mae_forward.26} parent=5 // pred_check
      %p355 = pneg %p354
    $region42: #{mae_forward.26} parent=5 // pred_check_branch
      %357 = sbr.rel (%p355) target = $region44
    $region43: #{mae_forward.26} parent=5 // pred_region
      %s358 = ssub.s32 %s10, 2
      // Predicated region
      $region45: #{mae_forward.26} parent=43 // pred_check
        %p359 = pneg %p128
      $region46: #{mae_forward.26} parent=43 // pred_check_branch
        %361 = sbr.rel (%p359) target = $region48
      $region47: #{mae_forward.26} parent=43 // pred_region
        %s362 = smul.u32 3, %s16
        %p363 = scmp.lt.s32.totalorder %s362, 5
        %s364 = scalar_select %p363, %s362, 5
        %s365 = smul.addr %s364, 8
        %s366 = scalar_lea.vmem %s4, %s365
      $region48: #{mae_forward.26} parent=43 // pred_fallthru
        _
    $region44: #{mae_forward.26} parent=5 // pred_fallthru
      _
  $region6: #{mae_forward.26} parent=0 // loop_footer
    %s14 = sadd.s32 1, %s10
  $region7: #{mae_forward.26} parent=0 // loop_footer_branch
    %9 = sbr.rel target = $region3
  $region8: #{mae_forward.26} parent=0 // loop_exit
    _

// kernel: mae_forward.27
$region0: #{mae_forward.27}
  #allocation0 [shape = 'u32[]', space=smem, size = 0x4, offset = 0x4, fixed_abs, tag = 'smem constant byte address 0x4 - core index']
  #allocation1 [shape = 'u32[144,128]{1,0:T(1,128)}', space=vmem, size = 0x12000, scoped, tag = 'internal scratch']
  %s0 = inlined_call_operand.vmem [shape: f32[2,4,17,8], index: 0, kind: input, shape index: {}]
  %s1 = inlined_call_operand.vmem [shape: f32[2,4,17,8], index: 1, kind: input, shape index: {}]
  %s2 = inlined_call_operand.vmem [shape: f32[2,4,17,8], index: 2, kind: input, shape index: {}]
  %s3 = inlined_call_operand.vmem [shape: f32[2,4,17,8], index: 3, kind: output, shape index: {}]
  %s4 = sld [smem:[#allocation0]]
  $region45: #{mae_forward.27} parent=0
    _
  %s6 = ssub.s32 1, %s4
  %s7 = scalar_select 0, %s6, %s4
  loop: start=0, step=1, limit=4
  $region2: #{mae_forward.27} parent=0 // loop_pre_header
    _
  $region3: #{mae_forward.27} parent=0 // loop_header
    %s9 = sphi 0, %s13
    %p10 = scmp.ge.s32.totalorder %s9, 4
    %s19 = sphi 0, %s21
    %s22 = sphi 0, %s19
    %s23 = sphi 0, %s22
    %s39 = sphi 0, %s23
    %s45 = sphi 0, %s47
    %s48 = sphi 0, %s45
    %s49 = sphi 0, %s48
    %s65 = sphi 0, %s49
    %s71 = sphi 0, %s73
    %s74 = sphi 0, %s71
    %s75 = sphi 0, %s74
    %s91 = sphi 0, %s75
    %s97 = sphi 0, %s99
    %s100 = sphi 0, %s97
    %s101 = sphi 0, %s100
    %s117 = sphi 0, %s101
  $region4: #{mae_forward.27} parent=0 // loop_header_branch
    %12 = sbr.rel (%p10) target = $region8
  $region5: #{mae_forward.27} parent=0 // loop_body
    %s14 = ssub.s32 %s9, 1
    %s15 = ssub.s32 %s9, 2
    %s16 = sadd.s32 %s9, 1
    %s17 = ssub.s32 %s9, %s16
    %p18 = scmp.eq.s32.totalorder %s17, 0
    %s20 = sadd.s32 %s19, 1
    %s21 = scalar_select %p18, %s19, %s20
    %p24 = pneg %p18
    %p25 = scmp.eq.s32.totalorder %s9, 1
    %p26 = por %p24, %p25
    %p27 = scmp.ne.s32.totalorder %s19, %s22
    %p28 = scmp.eq.s32.totalorder %s9, 0
    %p29 = por %p27, %p28
    %p30 = scmp.ne.s32.totalorder %s19, %s22
    %p31 = scmp.eq.s32.totalorder %s14, 1
    %p32 = por %p30, %p31
    %p33 = scmp.ne.s32.totalorder %s22, %s23
    %p34 = scmp.eq.s32.totalorder %s14, 0
    %p35 = por %p33, %p34
    %p36 = scmp.ne.s32.totalorder %s22, %s23
    %p37 = scmp.eq.s32.totalorder %s15, 1
    %p38 = por %p36, %p37
    %p40 = scmp.ne.s32.totalorder %s23, %s39
    %p41 = scmp.eq.s32.totalorder %s15, 0
    %p42 = por %p40, %p41
    %s43 = ssub.s32 %s9, %s16
    %p44 = scmp.eq.s32.totalorder %s43, 0
    %s46 = sadd.s32 %s45, 1
    %s47 = scalar_select %p44, %s45, %s46
    %p50 = pneg %p44
    %p51 = scmp.eq.s32.totalorder %s9, 1
    %p52 = por %p50, %p51
    %p53 = scmp.ne.s32.totalorder %s45, %s48
    %p54 = scmp.eq.s32.totalorder %s9, 0
    %p55 = por %p53, %p54
    %p56 = scmp.ne.s32.totalorder %s45, %s48
    %p57 = scmp.eq.s32.totalorder %s14, 1
    %p58 = por %p56, %p57
    %p59 = scmp.ne.s32.totalorder %s48, %s49
    %p60 = scmp.eq.s32.totalorder %s14, 0
    %p61 = por %p59, %p60
    %p62 = scmp.ne.s32.totalorder %s48, %s49
    %p63 = scmp.eq.s32.totalorder %s15, 1
    %p64 = por %p62, %p63
    %p66 = scmp.ne.s32.totalorder %s49, %s65
    %p67 = scmp.eq.s32.totalorder %s15, 0
    %p68 = por %p66, %p67
    %s69 = ssub.s32 %s9, %s16
    %p70 = scmp.eq.s32.totalorder %s69, 0
    %s72 = sadd.s32 %s71, 1
    %s73 = scalar_select %p70, %s71, %s72
    %p76 = pneg %p70
    %p77 = scmp.eq.s32.totalorder %s9, 1
    %p78 = por %p76, %p77
    %p79 = scmp.ne.s32.totalorder %s71, %s74
    %p80 = scmp.eq.s32.totalorder %s9, 0
    %p81 = por %p79, %p80
    %p82 = scmp.ne.s32.totalorder %s71, %s74
    %p83 = scmp.eq.s32.totalorder %s14, 1
    %p84 = por %p82, %p83
    %p85 = scmp.ne.s32.totalorder %s74, %s75
    %p86 = scmp.eq.s32.totalorder %s14, 0
    %p87 = por %p85, %p86
    %p88 = scmp.ne.s32.totalorder %s74, %s75
    %p89 = scmp.eq.s32.totalorder %s15, 1
    %p90 = por %p88, %p89
    %p92 = scmp.ne.s32.totalorder %s75, %s91
    %p93 = scmp.eq.s32.totalorder %s15, 0
    %p94 = por %p92, %p93
    %s95 = ssub.s32 %s9, %s16
    %p96 = scmp.eq.s32.totalorder %s95, 0
    %s98 = sadd.s32 %s97, 1
    %s99 = scalar_select %p96, %s97, %s98
    %p102 = pneg %p96
    %p103 = scmp.eq.s32.totalorder %s9, 1
    %p104 = por %p102, %p103
    %p105 = scmp.ne.s32.totalorder %s97, %s100
    %p106 = scmp.eq.s32.totalorder %s9, 0
    %p107 = por %p105, %p106
    %p108 = scmp.ne.s32.totalorder %s97, %s100
    %p109 = scmp.eq.s32.totalorder %s14, 1
    %p110 = por %p108, %p109
    %p111 = scmp.ne.s32.totalorder %s100, %s101
    %p112 = scmp.eq.s32.totalorder %s14, 0
    %p113 = por %p111, %p112
    %p114 = scmp.ne.s32.totalorder %s100, %s101
    %p115 = scmp.eq.s32.totalorder %s15, 1
    %p116 = por %p114, %p115
    %p118 = scmp.ne.s32.totalorder %s101, %s117
    %p119 = scmp.eq.s32.totalorder %s15, 0
    %p120 = por %p118, %p119
    %p121 = scmp.le.s32.totalorder 1, %s9
    %p122 = scmp.lt.s32.totalorder %s9, 3
    %p123 = pnand %p121, %p122
    %p124 = pneg %p123
    // Predicated region
    $region9: #{mae_forward.27} parent=5 // pred_check
      _
    $region10: #{mae_forward.27} parent=5 // pred_check_branch
      %126 = sbr.rel (%p123) target = $region12
    $region11: #{mae_forward.27} parent=5 // pred_region
      %s127 = ssub.s32 %s9, 1
    $region12: #{mae_forward.27} parent=5 // pred_fallthru
      _
    %p128 = scmp.lt.s32.totalorder %s9, 2
    // Predicated region
    $region13: #{mae_forward.27} parent=5 // pred_check
      %p129 = pneg %p128
    $region14: #{mae_forward.27} parent=5 // pred_check_branch
      %131 = sbr.rel (%p129) target = $region16
    $region15: #{mae_forward.27} parent=5 // pred_region
      // Predicated region
      $region17: #{mae_forward.27} parent=15 // pred_check
        %p132 = pneg %p29
      $region18: #{mae_forward.27} parent=15 // pred_check_branch
        %134 = sbr.rel (%p132) target = $region20
      $region19: #{mae_forward.27} parent=15 // pred_region
        %p135 = scmp.lt.s32.totalorder %s9, 1
        %s136 = scalar_select %p135, %s9, 1
        %s137 = smul.addr %s136, 12
        %s138 = smul.addr %s137, 8
        %s139 = scalar_lea.vmem %s0, %s138
      $region20: #{mae_forward.27} parent=15 // pred_fallthru
        _
      // Predicated region
      $region21: #{mae_forward.27} parent=15 // pred_check
        %p140 = pneg %p55
      $region22: #{mae_forward.27} parent=15 // pred_check_branch
        %142 = sbr.rel (%p140) target = $region24
      $region23: #{mae_forward.27} parent=15 // pred_region
        %p143 = scmp.lt.s32.totalorder %s9, 1
        %s144 = scalar_select %p143, %s9, 1
        %s145 = smul.addr %s144, 12
        %s146 = smul.addr %s145, 8
        %s147 = scalar_lea.vmem %s1, %s146
      $region24: #{mae_forward.27} parent=15 // pred_fallthru
        _
      // Predicated region
      $region25: #{mae_forward.27} parent=15 // pred_check
        %p148 = pneg %p81
      $region26: #{mae_forward.27} parent=15 // pred_check_branch
        %150 = sbr.rel (%p148) target = $region28
      $region27: #{mae_forward.27} parent=15 // pred_region
        %p151 = scmp.lt.s32.totalorder %s9, 1
        %s152 = scalar_select %p151, %s9, 1
        %s153 = smul.addr %s152, 12
        %s154 = smul.addr %s153, 8
        %s155 = scalar_lea.vmem %s2, %s154
      $region28: #{mae_forward.27} parent=15 // pred_fallthru
        _
    $region16: #{mae_forward.27} parent=5 // pred_fallthru
      _
    %p156 = scmp.le.s32.totalorder 1, %s9
    %p157 = scmp.lt.s32.totalorder %s9, 3
    %p158 = pnand %p156, %p157
    %p159 = pneg %p158
    // Predicated region
    $region29: #{mae_forward.27} parent=5 // pred_check
      _
    $region30: #{mae_forward.27} parent=5 // pred_check_branch
      %161 = sbr.rel (%p158) target = $region32
    $region31: #{mae_forward.27} parent=5 // pred_region
      %s162 = ssub.s32 %s9, 1
      %p163 = scmp.lt.s32.totalorder %s14, 1
      %s164 = scalar_select %p163, %s14, 1
      %s165 = smul.addr %s164, 12
      %s166 = smul.addr %s165, 8
      %s167 = scalar_lea.vmem %s0, %s166
      %p168 = pneg %p35
      %p169 = pneg %p32
      %p170 = scmp.lt.s32.totalorder %s14, 1
      %s171 = scalar_select %p170, %s14, 1
      %s172 = smul.addr %s171, 12
      %s173 = smul.addr %s172, 8
      %s174 = scalar_lea.vmem %s1, %s173
      %p175 = pneg %p61
      %p176 = pneg %p58
      %p177 = scmp.lt.s32.totalorder %s14, 1
      %s178 = scalar_select %p177, %s14, 1
      %s179 = smul.addr %s178, 12
      %s180 = smul.addr %s179, 8
      %s181 = scalar_lea.vmem %s2, %s180
      %p182 = pneg %p87
      %p183 = pneg %p84
      %p184 = pneg %p113
      %p185 = pneg %p110
      %p186 = scmp.lt.s32.totalorder %s14, 1
      %s187 = scalar_select %p186, %s14, 1
      %s188 = smul.addr %s187, 12
      %s189 = smul.addr %s188, 8
      %s190 = scalar_lea.vmem %s3, %s189
      %p191 = scmp.lt.s32.totalorder %s14, 1
      %s192 = scalar_select %p191, %s14, 1
      %s193 = smul.addr %s192, 12
      %s194 = smul.addr %s193, 8
      %s195 = scalar_lea.vmem %s0, %s194
      %p196 = scmp.lt.s32.totalorder %s14, 1
      %s197 = scalar_select %p196, %s14, 1
      %s198 = smul.addr %s197, 12
      %s199 = smul.addr %s198, 8
      %s200 = scalar_lea.vmem %s1, %s199
      %p201 = scmp.lt.s32.totalorder %s14, 1
      %s202 = scalar_select %p201, %s14, 1
      %s203 = smul.addr %s202, 12
      %s204 = smul.addr %s203, 8
      %s205 = scalar_lea.vmem %s2, %s204
      %p206 = scmp.lt.s32.totalorder %s14, 1
      %s207 = scalar_select %p206, %s14, 1
      %s208 = smul.addr %s207, 12
      %s209 = smul.addr %s208, 8
      %s210 = scalar_lea.vmem %s3, %s209
      %v212 = vld [vmem:[%s195] sm:$0xff]
      %v213 = vld [vmem:[%s195 + $0x8] sm:$0xff]
      %v214 = vld [vmem:[%s195 + $0x10] sm:$0x1]
      %v215 = vld [vmem:[%s195 + $0x18] sm:$0xff]
      %v216 = vld [vmem:[%s195 + $0x20] sm:$0xff]
      %v217 = vld [vmem:[%s195 + $0x28] sm:$0x1]
      %v218 = vld [vmem:[%s195 + $0x30] sm:$0xff]
      %v219 = vld [vmem:[%s195 + $0x38] sm:$0xff]
      %v220 = vld [vmem:[%s195 + $0x40] sm:$0x1]
      %v221 = vld [vmem:[%s195 + $0x48] sm:$0xff]
      %v222 = vld [vmem:[%s195 + $0x50] sm:$0xff]
      %v223 = vld [vmem:[%s195 + $0x58] sm:$0x1]
      %v224 = vpack.c.bf16 %v213, %v212
      %v225 = vpack.c.bf16 %v214, %v214
      %v226 = vpack.c.bf16 %v216, %v215
      %v227 = vpack.c.bf16 %v217, %v217
      %v228 = vpack.c.bf16 %v219, %v218
      %v229 = vpack.c.bf16 %v220, %v220
      %v230 = vpack.c.bf16 %v222, %v221
      %v231 = vpack.c.bf16 %v223, %v223
      %v232 = vld [vmem:[%s200] sm:$0xff]
      %v233 = vld [vmem:[%s200 + $0x8] sm:$0xff]
      %v234 = vld [vmem:[%s200 + $0x10] sm:$0x1]
      %v235 = vld [vmem:[%s200 + $0x18] sm:$0xff]
      %v236 = vld [vmem:[%s200 + $0x20] sm:$0xff]
      %v237 = vld [vmem:[%s200 + $0x28] sm:$0x1]
      %v238 = vld [vmem:[%s200 + $0x30] sm:$0xff]
      %v239 = vld [vmem:[%s200 + $0x38] sm:$0xff]
      %v240 = vld [vmem:[%s200 + $0x40] sm:$0x1]
      %v241 = vld [vmem:[%s200 + $0x48] sm:$0xff]
      %v242 = vld [vmem:[%s200 + $0x50] sm:$0xff]
      %v243 = vld [vmem:[%s200 + $0x58] sm:$0x1]
      %v244 = vpack.c.bf16 %v233, %v232
      %v245 = vpack.c.bf16 %v234, %v234
      %v246 = vpack.c.bf16 %v236, %v235
      %v247 = vpack.c.bf16 %v237, %v237
      %v248 = vpack.c.bf16 %v239, %v238
      %v249 = vpack.c.bf16 %v240, %v240
      %v250 = vpack.c.bf16 %v242, %v241
      %v251 = vpack.c.bf16 %v243, %v243
      %v252 = vld [vmem:[%s205] sm:$0xff]
      %v253 = vld [vmem:[%s205 + $0x8] sm:$0xff]
      %v254 = vld [vmem:[%s205 + $0x10] sm:$0x1]
      %v255 = vld [vmem:[%s205 + $0x18] sm:$0xff]
      %v256 = vld [vmem:[%s205 + $0x20] sm:$0xff]
      %v257 = vld [vmem:[%s205 + $0x28] sm:$0x1]
      %v258 = vld [vmem:[%s205 + $0x30] sm:$0xff]
      %v259 = vld [vmem:[%s205 + $0x38] sm:$0xff]
      %v260 = vld [vmem:[%s205 + $0x40] sm:$0x1]
      %v261 = vld [vmem:[%s205 + $0x48] sm:$0xff]
      %v262 = vld [vmem:[%s205 + $0x50] sm:$0xff]
      %v263 = vld [vmem:[%s205 + $0x58] sm:$0x1]
      %v264 = vpack.c.bf16 %v253, %v252
      %v265 = vpack.c.bf16 %v254, %v254
      %v266 = vpack.c.bf16 %v256, %v255
      %v267 = vpack.c.bf16 %v257, %v257
      %v268 = vpack.c.bf16 %v259, %v258
      %v269 = vpack.c.bf16 %v260, %v260
      %v270 = vpack.c.bf16 %v262, %v261
      %v271 = vpack.c.bf16 %v263, %v263
      %vm272 = vcmask 64512
      %v274 = vsel %vm272, %v224, 0
      %v277 = vsel %vm272, %v225, 0
      %v280 = vsel %vm272, %v244, 0
      %v283 = vsel %vm272, %v245, 0
      %285 = vmatprep.subr.bf16.mxu0 0
      %286 = vmatpush1.bf16.xpose.msra.mxu0 %v280
      %287 = vmatprep.subr.bf16.mxu0 0
      %288 = vmatpush1.bf16.xpose.msra.mxu0 %v283
      %289 = vmatprep.subr.bf16.mxu0 0
      %290 = vmatpush1.bf16.xpose.msra.mxu0 0
      %291 = vmatprep.subr.bf16.mxu0 0
      %292 = vmatpush1.bf16.xpose.msra.mxu0 0
      %293 = vmatprep.subr.bf16.mxu0 0
      %294 = vmatpush1.bf16.xpose.msra.mxu0 0
      %295 = vmatprep.subr.bf16.mxu0 0
      %296 = vmatpush1.bf16.xpose.msra.mxu0 0
      %297 = vmatprep.subr.bf16.mxu0 0
      %298 = vmatpush1.bf16.xpose.msra.mxu0 0
      %299 = vmatprep.subr.bf16.mxu0 0
      %300 = vmatpush1.bf16.xpose.msra.mxu0 0
      %301 = vmatprep.subr.bf16.mxu0 0
      %302 = vmatpush1.bf16.xpose.msra.mxu0 0
      %303 = vmatprep.subr.bf16.mxu0 0
      %304 = vmatpush1.bf16.xpose.msra.mxu0 0
      %305 = vmatprep.subr.bf16.mxu0 0
      %306 = vmatpush1.bf16.xpose.msra.mxu0 0
      %307 = vmatprep.subr.bf16.mxu0 0
      %308 = vmatpush1.bf16.xpose.msra.mxu0 0
      %309 = vmatprep.subr.bf16.mxu0 0
      %310 = vmatpush1.bf16.xpose.msra.mxu0 0
      %311 = vmatprep.subr.bf16.mxu0 0
      %312 = vmatpush1.bf16.xpose.msra.mxu0 0
      %313 = vmatprep.subr.bf16.mxu0 0
      %314 = vmatpush1.bf16.xpose.msra.mxu0 0
      %315 = vmatprep.subr.bf16.mxu0 0
      %316 = vmatpush1.bf16.xpose.msra.mxu0 0
      %317 = vmatprep.mubr.bf16.mxu0 0
      %318 = vmatmul.mubr.bf16.gmra.mrb[0].mxu0 %v274
      %v319 = vpop.f32.mrb[0].mxu0
      %v320 = vadd.f32 0.0, %v319
      %v321 = vpop.f32.mrb[0].mxu0
      %v322 = vpop.f32.mrb[0].mxu0
      %v323 = vadd.f32 0.0, %v322
      %v324 = vpop.f32.mrb[0].mxu0
      %325 = vmatprep.mubr.bf16.mxu0 0
      %326 = vmatmul.mubr.bf16.gmra.mrb[0].mxu0 %v277
      %v327 = vpop.f32.mrb[0].mxu0
      %v328 = vadd.f32 0.0, %v327
      %v329 = vpop.f32.mrb[0].mxu0
      %v330 = vpop.f32.mrb[0].mxu0
      %v331 = vpop.f32.mrb[0].mxu0
      %332 = vdwg.mxu0
      %v334 = vsel %vm272, %v226, 0
      %v337 = vsel %vm272, %v227, 0
      %v340 = vsel %vm272, %v246, 0
      %v343 = vsel %vm272, %v247, 0
      %345 = vmatprep.subr.bf16.mxu0 0
      %346 = vmatpush1.bf16.xpose.msra.mxu0 %v340
      %347 = vmatprep.subr.bf16.mxu0 0
      %348 = vmatpush1.bf16.xpose.msra.mxu0 %v343
      %349 = vmatprep.subr.bf16.mxu0 0
      %350 = vmatpush1.bf16.xpose.msra.mxu0 0
      %351 = vmatprep.subr.bf16.mxu0 0
      %352 = vmatpush1.bf16.xpose.msra.mxu0 0
      %353 = vmatprep.subr.bf16.mxu0 0
      %354 = vmatpush1.bf16.xpose.msra.mxu0 0
      %355 = vmatprep.subr.bf16.mxu0 0
      %356 = vmatpush1.bf16.xpose.msra.mxu0 0
      %357 = vmatprep.subr.bf16.mxu0 0
      %358 = vmatpush1.bf16.xpose.msra.mxu0 0
      %359 = vmatprep.subr.bf16.mxu0 0
      %360 = vmatpush1.bf16.xpose.msra.mxu0 0
      %361 = vmatprep.subr.bf16.mxu0 0
      %362 = vmatpush1.bf16.xpose.msra.mxu0 0
      %363 = vmatprep.subr.bf16.mxu0 0
      %364 = vmatpush1.bf16.xpose.msra.mxu0 0
      %365 = vmatprep.subr.bf16.mxu0 0
      %366 = vmatpush1.bf16.xpose.msra.mxu0 0
      %367 = vmatprep.subr.bf16.mxu0 0
      %368 = vmatpush1.bf16.xpose.msra.mxu0 0
      %369 = vmatprep.subr.bf16.mxu0 0
      %370 = vmatpush1.bf16.xpose.msra.mxu0 0
      %371 = vmatprep.subr.bf16.mxu0 0
      %372 = vmatpush1.bf16.xpose.msra.mxu0 0
      %373 = vmatprep.subr.bf16.mxu0 0
      %374 = vmatpush1.bf16.xpose.msra.mxu0 0
      %375 = vmatprep.subr.bf16.mxu0 0
      %376 = vmatpush1.bf16.xpose.msra.mxu0 0
      %377 = vmatprep.mubr.bf16.mxu0 0
      %378 = vmatmul.mubr.bf16.gmra.mrb[0].mxu0 %v334
      %v379 = vpop.f32.mrb[0].mxu0
      %v380 = vadd.f32 0.0, %v379
      %v381 = vpop.f32.mrb[0].mxu0
      %v382 = vpop.f32.mrb[0].mxu0
      %v383 = vadd.f32 0.0, %v382
      %v384 = vpop.f32.mrb[0].mxu0
      %385 = vmatprep.mubr.bf16.mxu0 0
      %386 = vmatmul.mubr.bf16.gmra.mrb[0].mxu0 %v337
      %v387 = vpop.f32.mrb[0].mxu0
      %v388 = vadd.f32 0.0, %v387
      %v389 = vpop.f32.mrb[0].mxu0
      %v390 = vpop.f32.mrb[0].mxu0
      %v391 = vpop.f32.mrb[0].mxu0
      %392 = vdwg.mxu0
      %v394 = vsel %vm272, %v228, 0
      %v397 = vsel %vm272, %v229, 0
      %v400 = vsel %vm272, %v248, 0
      %v403 = vsel %vm272, %v249, 0
      %405 = vmatprep.subr.bf16.mxu0 0
      %406 = vmatpush1.bf16.xpose.msra.mxu0 %v400
      %407 = vmatprep.subr.bf16.mxu0 0
      %408 = vmatpush1.bf16.xpose.msra.mxu0 %v403
      %409 = vmatprep.subr.bf16.mxu0 0
      %410 = vmatpush1.bf16.xpose.msra.mxu0 0
      %411 = vmatprep.subr.bf16.mxu0 0
      %412 = vmatpush1.bf16.xpose.msra.mxu0 0
      %413 = vmatprep.subr.bf16.mxu0 0
      %414 = vmatpush1.bf16.xpose.msra.mxu0 0
      %415 = vmatprep.subr.bf16.mxu0 0
      %416 = vmatpush1.bf16.xpose.msra.mxu0 0
      %417 = vmatprep.subr.bf16.mxu0 0
      %418 = vmatpush1.bf16.xpose.msra.mxu0 0
      %419 = vmatprep.subr.bf16.mxu0 0
      %420 = vmatpush1.bf16.xpose.msra.mxu0 0
      %421 = vmatprep.subr.bf16.mxu0 0
      %422 = vmatpush1.bf16.xpose.msra.mxu0 0
      %423 = vmatprep.subr.bf16.mxu0 0
      %424 = vmatpush1.bf16.xpose.msra.mxu0 0
      %425 = vmatprep.subr.bf16.mxu0 0
      %426 = vmatpush1.bf16.xpose.msra.mxu0 0
      %427 = vmatprep.subr.bf16.mxu0 0
      %428 = vmatpush1.bf16.xpose.msra.mxu0 0
      %429 = vmatprep.subr.bf16.mxu0 0
      %430 = vmatpush1.bf16.xpose.msra.mxu0 0
      %431 = vmatprep.subr.bf16.mxu0 0
      %432 = vmatpush1.bf16.xpose.msra.mxu0 0
      %433 = vmatprep.subr.bf16.mxu0 0
      %434 = vmatpush1.bf16.xpose.msra.mxu0 0
      %435 = vmatprep.subr.bf16.mxu0 0
      %436 = vmatpush1.bf16.xpose.msra.mxu0 0
      %437 = vmatprep.mubr.bf16.mxu0 0
      %438 = vmatmul.mubr.bf16.gmra.mrb[0].mxu0 %v394
      %v439 = vpop.f32.mrb[0].mxu0
      %v440 = vadd.f32 0.0, %v439
      %v441 = vpop.f32.mrb[0].mxu0
      %v442 = vpop.f32.mrb[0].mxu0
      %v443 = vadd.f32 0.0, %v442
      %v444 = vpop.f32.mrb[0].mxu0
      %445 = vmatprep.mubr.bf16.mxu0 0
      %446 = vmatmul.mubr.bf16.gmra.mrb[0].mxu0 %v397
      %v447 = vpop.f32.mrb[0].mxu0
      %v448 = vadd.f32 0.0, %v447
      %v449 = vpop.f32.mrb[0].mxu0
      %v450 = vpop.f32.mrb[0].mxu0
      %v451 = vpop.f32.mrb[0].mxu0
      %452 = vdwg.mxu0
      %v454 = vsel %vm272, %v230, 0
      %v457 = vsel %vm272, %v231, 0
      %v460 = vsel %vm272, %v250, 0
      %v463 = vsel %vm272, %v251, 0
      %465 = vmatprep.subr.bf16.mxu0 0
      %466 = vmatpush1.bf16.xpose.msra.mxu0 %v460
      %467 = vmatprep.subr.bf16.mxu0 0
      %468 = vmatpush1.bf16.xpose.msra.mxu0 %v463
      %469 = vmatprep.subr.bf16.mxu0 0
      %470 = vmatpush1.bf16.xpose.msra.mxu0 0
      %471 = vmatprep.subr.bf16.mxu0 0
      %472 = vmatpush1.bf16.xpose.msra.mxu0 0
      %473 = vmatprep.subr.bf16.mxu0 0
      %474 = vmatpush1.bf16.xpose.msra.mxu0 0
      %475 = vmatprep.subr.bf16.mxu0 0
      %476 = vmatpush1.bf16.xpose.msra.mxu0 0
      %477 = vmatprep.subr.bf16.mxu0 0
      %478 = vmatpush1.bf16.xpose.msra.mxu0 0
      %479 = vmatprep.subr.bf16.mxu0 0
      %480 = vmatpush1.bf16.xpose.msra.mxu0 0
      %481 = vmatprep.subr.bf16.mxu0 0
      %482 = vmatpush1.bf16.xpose.msra.mxu0 0
      %483 = vmatprep.subr.bf16.mxu0 0
      %484 = vmatpush1.bf16.xpose.msra.mxu0 0
      %485 = vmatprep.subr.bf16.mxu0 0
      %486 = vmatpush1.bf16.xpose.msra.mxu0 0
      %487 = vmatprep.subr.bf16.mxu0 0
      %488 = vmatpush1.bf16.xpose.msra.mxu0 0
      %489 = vmatprep.subr.bf16.mxu0 0
      %490 = vmatpush1.bf16.xpose.msra.mxu0 0
      %491 = vmatprep.subr.bf16.mxu0 0
      %492 = vmatpush1.bf16.xpose.msra.mxu0 0
      %493 = vmatprep.subr.bf16.mxu0 0
      %494 = vmatpush1.bf16.xpose.msra.mxu0 0
      %495 = vmatprep.subr.bf16.mxu0 0
      %496 = vmatpush1.bf16.xpose.msra.mxu0 0
      %497 = vmatprep.mubr.bf16.mxu0 0
      %498 = vmatmul.mubr.bf16.gmra.mrb[0].mxu0 %v454
      %v499 = vpop.f32.mrb[0].mxu0
      %v500 = vadd.f32 0.0, %v499
      %v501 = vpop.f32.mrb[0].mxu0
      %v502 = vpop.f32.mrb[0].mxu0
      %v503 = vadd.f32 0.0, %v502
      %v504 = vpop.f32.mrb[0].mxu0
      %505 = vmatprep.mubr.bf16.mxu0 0
      %506 = vmatmul.mubr.bf16.gmra.mrb[0].mxu0 %v457
      %v507 = vpop.f32.mrb[0].mxu0
      %v508 = vadd.f32 0.0, %v507
      %v509 = vpop.f32.mrb[0].mxu0
      %v510 = vpop.f32.mrb[0].mxu0
      %v511 = vpop.f32.mrb[0].mxu0
      %512 = vdwg.mxu0
      %v513 = vmul.f32 %v320, 0.35355338
      %v514 = vmul.f32 %v323, 0.35355338
      %v515 = vmul.f32 %v328, 0.35355338
      %v516 = vmul.f32 %v380, 0.35355338
      %v517 = vmul.f32 %v383, 0.35355338
      %v518 = vmul.f32 %v388, 0.35355338
      %v519 = vmul.f32 %v440, 0.35355338
      %v520 = vmul.f32 %v443, 0.35355338
      %v521 = vmul.f32 %v448, 0.35355338
      %v522 = vmul.f32 %v500, 0.35355338
      %v523 = vmul.f32 %v503, 0.35355338
      %v524 = vmul.f32 %v508, 0.35355338
      %vm525 = vcmask 138240
      %v526 = vsel %vm525, %v513, -inf
      %527 = vmax.xlane.f32.xlu0 %v526
      %v528 = vpop.xlane.xlu0 %527
      %v529 = vsel %vm525, %v514, -inf
      %530 = vmax.xlane.f32.xlu0 %v529
      %v531 = vpop.xlane.xlu0 %530
      %vm532 = vcmask 131072
      %v533 = vsel %vm532, %v515, -inf
      %534 = vmax.xlane.f32.xlu0 %v533
      %v535 = vpop.xlane.xlu0 %534
      %v536 = vsel %vm525, %v516, -inf
      %537 = vmax.xlane.f32.xlu0 %v536
      %v538 = vpop.xlane.xlu0 %537
      %v539 = vsel %vm525, %v517, -inf
      %540 = vmax.xlane.f32.xlu0 %v539
      %v541 = vpop.xlane.xlu0 %540
      %v542 = vsel %vm532, %v518, -inf
      %543 = vmax.xlane.f32.xlu0 %v542
      %v544 = vpop.xlane.xlu0 %543
      %v545 = vsel %vm525, %v519, -inf
      %546 = vmax.xlane.f32.xlu0 %v545
      %v547 = vpop.xlane.xlu0 %546
      %v548 = vsel %vm525, %v520, -inf
      %549 = vmax.xlane.f32.xlu0 %v548
      %v550 = vpop.xlane.xlu0 %549
      %v551 = vsel %vm532, %v521, -inf
      %552 = vmax.xlane.f32.xlu0 %v551
      %v553 = vpop.xlane.xlu0 %552
      %v554 = vsel %vm525, %v522, -inf
      %555 = vmax.xlane.f32.xlu0 %v554
      %v556 = vpop.xlane.xlu0 %555
      %v557 = vsel %vm525, %v523, -inf
      %558 = vmax.xlane.f32.xlu0 %v557
      %v559 = vpop.xlane.xlu0 %558
      %v560 = vsel %vm532, %v524, -inf
      %561 = vmax.xlane.f32.xlu0 %v560
      %v562 = vpop.xlane.xlu0 %561
      %v563 = vsub.f32 %v513, %v528
      %v564 = vsub.f32 %v514, %v531
      %v565 = vsub.f32 %v515, %v535
      %v566 = vsub.f32 %v516, %v538
      %v567 = vsub.f32 %v517, %v541
      %v568 = vsub.f32 %v518, %v544
      %v569 = vsub.f32 %v519, %v547
      %v570 = vsub.f32 %v520, %v550
      %v571 = vsub.f32 %v521, %v553
      %v572 = vsub.f32 %v522, %v556
      %v573 = vsub.f32 %v523, %v559
      %v574 = vsub.f32 %v524, %v562
      %v575 = vmul.f32 %v563, 1.442695
      %v576 = vpow.pop %v575
      %v577 = vmul.f32 %v564, 1.442695
      %v578 = vpow.pop %v577
      %v579 = vmul.f32 %v565, 1.442695
      %v580 = vpow.pop %v579
      %v581 = vmul.f32 %v566, 1.442695
      %v582 = vpow.pop %v581
      %v583 = vmul.f32 %v567, 1.442695
      %v584 = vpow.pop %v583
      %v585 = vmul.f32 %v568, 1.442695
      %v586 = vpow.pop %v585
      %v587 = vmul.f32 %v569, 1.442695
      %v588 = vpow.pop %v587
      %v589 = vmul.f32 %v570, 1.442695
      %v590 = vpow.pop %v589
      %v591 = vmul.f32 %v571, 1.442695
      %v592 = vpow.pop %v591
      %v593 = vmul.f32 %v572, 1.442695
      %v594 = vpow.pop %v593
      %v595 = vmul.f32 %v573, 1.442695
      %v596 = vpow.pop %v595
      %v597 = vmul.f32 %v574, 1.442695
      %v598 = vpow.pop %v597
      %v599 = vsel %vm525, %v576, 0.0
      %600 = vadd.xlane.f32.xlu0 %v599
      %v601 = vpop.xlane.xlu0 %600
      %v602 = vsel %vm525, %v578, 0.0
      %603 = vadd.xlane.f32.xlu0 %v602
      %v604 = vpop.xlane.xlu0 %603
      %v605 = vsel %vm532, %v580, 0.0
      %606 = vadd.xlane.f32.xlu0 %v605
      %v607 = vpop.xlane.xlu0 %606
      %v608 = vsel %vm525, %v582, 0.0
      %609 = vadd.xlane.f32.xlu0 %v608
      %v610 = vpop.xlane.xlu0 %609
      %v611 = vsel %vm525, %v584, 0.0
      %612 = vadd.xlane.f32.xlu0 %v611
      %v613 = vpop.xlane.xlu0 %612
      %v614 = vsel %vm532, %v586, 0.0
      %615 = vadd.xlane.f32.xlu0 %v614
      %v616 = vpop.xlane.xlu0 %615
      %v617 = vsel %vm525, %v588, 0.0
      %618 = vadd.xlane.f32.xlu0 %v617
      %v619 = vpop.xlane.xlu0 %618
      %v620 = vsel %vm525, %v590, 0.0
      %621 = vadd.xlane.f32.xlu0 %v620
      %v622 = vpop.xlane.xlu0 %621
      %v623 = vsel %vm532, %v592, 0.0
      %624 = vadd.xlane.f32.xlu0 %v623
      %v625 = vpop.xlane.xlu0 %624
      %v626 = vsel %vm525, %v594, 0.0
      %627 = vadd.xlane.f32.xlu0 %v626
      %v628 = vpop.xlane.xlu0 %627
      %v629 = vsel %vm525, %v596, 0.0
      %630 = vadd.xlane.f32.xlu0 %v629
      %v631 = vpop.xlane.xlu0 %630
      %v632 = vsel %vm532, %v598, 0.0
      %633 = vadd.xlane.f32.xlu0 %v632
      %v634 = vpop.xlane.xlu0 %633
      %v635 = vrcp.pop %v601
      %v636 = vrcp.pop %v604
      %v637 = vrcp.pop %v607
      %v638 = vrcp.pop %v610
      %v639 = vrcp.pop %v613
      %v640 = vrcp.pop %v616
      %v641 = vrcp.pop %v619
      %v642 = vrcp.pop %v622
      %v643 = vrcp.pop %v625
      %v644 = vrcp.pop %v628
      %v645 = vrcp.pop %v631
      %v646 = vrcp.pop %v634
      %v647 = vmul.f32 %v576, %v635
      %v648 = vmul.f32 %v578, %v636
      %v649 = vmul.f32 %v580, %v637
      %v650 = vmul.f32 %v582, %v638
      %v651 = vmul.f32 %v584, %v639
      %v652 = vmul.f32 %v586, %v640
      %v653 = vmul.f32 %v588, %v641
      %v654 = vmul.f32 %v590, %v642
      %v655 = vmul.f32 %v592, %v643
      %v656 = vmul.f32 %v594, %v644
      %v657 = vmul.f32 %v596, %v645
      %v658 = vmul.f32 %v598, %v646
      %v659 = vpack.c.bf16 %v648, %v647
      %v660 = vpack.c.bf16 %v649, %v649
      %v661 = vpack.c.bf16 %v651, %v650
      %v662 = vpack.c.bf16 %v652, %v652
      %v663 = vpack.c.bf16 %v654, %v653
      %v664 = vpack.c.bf16 %v655, %v655
      %v665 = vpack.c.bf16 %v657, %v656
      %v666 = vpack.c.bf16 %v658, %v658
      %v668 = vsel %vm525, %v659, 0
      %v671 = vsel %vm525, %v660, 0
      %vm673 = vcmask 1040384
      %v674 = vsel 0, 4294967295, 65535
      %v675 = vsel %vm673, %v674, 0
      %v677 = vand.u32 %v265, %v675
      %679 = vmatprep.subr.bf16.mxu0 0
      %680 = vmatpush1.bf16.msra.mxu0 %v264
      %681 = vmatprep.subr.bf16.mxu0 0
      %682 = vmatpush1.bf16.msra.mxu0 %v677
      %683 = vmatprep.subr.bf16.mxu0 0
      %684 = vmatpush1.bf16.msra.mxu0 0
      %685 = vmatprep.subr.bf16.mxu0 0
      %686 = vmatpush1.bf16.msra.mxu0 0
      %687 = vmatprep.subr.bf16.mxu0 0
      %688 = vmatpush1.bf16.msra.mxu0 0
      %689 = vmatprep.subr.bf16.mxu0 0
      %690 = vmatpush1.bf16.msra.mxu0 0
      %691 = vmatprep.subr.bf16.mxu0 0
      %692 = vmatpush1.bf16.msra.mxu0 0
      %693 = vmatprep.subr.bf16.mxu0 0
      %694 = vmatpush1.bf16.msra.mxu0 0
      %695 = vmatprep.subr.bf16.mxu0 0
      %696 = vmatpush1.bf16.msra.mxu0 0
      %697 = vmatprep.subr.bf16.mxu0 0
      %698 = vmatpush1.bf16.msra.mxu0 0
      %699 = vmatprep.subr.bf16.mxu0 0
      %700 = vmatpush1.bf16.msra.mxu0 0
      %701 = vmatprep.subr.bf16.mxu0 0
      %702 = vmatpush1.bf16.msra.mxu0 0
      %703 = vmatprep.subr.bf16.mxu0 0
      %704 = vmatpush1.bf16.msra.mxu0 0
      %705 = vmatprep.subr.bf16.mxu0 0
      %706 = vmatpush1.bf16.msra.mxu0 0
      %707 = vmatprep.subr.bf16.mxu0 0
      %708 = vmatpush1.bf16.msra.mxu0 0
      %709 = vmatprep.subr.bf16.mxu0 0
      %710 = vmatpush1.bf16.msra.mxu0 0
      %711 = vmatprep.mubr.bf16.mxu0 0
      %712 = vmatmul.mubr.bf16.gmra.mrb[0].mxu0 %v668
      %v713 = vpop.f32.mrb[0].mxu0
      %v714 = vadd.f32 0.0, %v713
      %v715 = vpop.f32.mrb[0].mxu0
      %v716 = vpop.f32.mrb[0].mxu0
      %v717 = vadd.f32 0.0, %v716
      %v718 = vpop.f32.mrb[0].mxu0
      %719 = vmatprep.mubr.bf16.mxu0 0
      %720 = vmatmul.mubr.bf16.gmra.mrb[0].mxu0 %v671
      %v721 = vpop.f32.mrb[0].mxu0
      %v722 = vadd.f32 0.0, %v721
      %v723 = vpop.f32.mrb[0].mxu0
      %v724 = vpop.f32.mrb[0].mxu0
      %v725 = vpop.f32.mrb[0].mxu0
      %726 = vdwg.mxu0
      %v728 = vsel %vm525, %v661, 0
      %v731 = vsel %vm525, %v662, 0
      %v734 = vand.u32 %v267, %v675
      %736 = vmatprep.subr.bf16.mxu0 0
      %737 = vmatpush1.bf16.msra.mxu0 %v266
      %738 = vmatprep.subr.bf16.mxu0 0
      %739 = vmatpush1.bf16.msra.mxu0 %v734
      %740 = vmatprep.subr.bf16.mxu0 0
      %741 = vmatpush1.bf16.msra.mxu0 0
      %742 = vmatprep.subr.bf16.mxu0 0
      %743 = vmatpush1.bf16.msra.mxu0 0
      %744 = vmatprep.subr.bf16.mxu0 0
      %745 = vmatpush1.bf16.msra.mxu0 0
      %746 = vmatprep.subr.bf16.mxu0 0
      %747 = vmatpush1.bf16.msra.mxu0 0
      %748 = vmatprep.subr.bf16.mxu0 0
      %749 = vmatpush1.bf16.msra.mxu0 0
      %750 = vmatprep.subr.bf16.mxu0 0
      %751 = vmatpush1.bf16.msra.mxu0 0
      %752 = vmatprep.subr.bf16.mxu0 0
      %753 = vmatpush1.bf16.msra.mxu0 0
      %754 = vmatprep.subr.bf16.mxu0 0
      %755 = vmatpush1.bf16.msra.mxu0 0
      %756 = vmatprep.subr.bf16.mxu0 0
      %757 = vmatpush1.bf16.msra.mxu0 0
      %758 = vmatprep.subr.bf16.mxu0 0
      %759 = vmatpush1.bf16.msra.mxu0 0
      %760 = vmatprep.subr.bf16.mxu0 0
      %761 = vmatpush1.bf16.msra.mxu0 0
      %762 = vmatprep.subr.bf16.mxu0 0
      %763 = vmatpush1.bf16.msra.mxu0 0
      %764 = vmatprep.subr.bf16.mxu0 0
      %765 = vmatpush1.bf16.msra.mxu0 0
      %766 = vmatprep.subr.bf16.mxu0 0
      %767 = vmatpush1.bf16.msra.mxu0 0
      %768 = vmatprep.mubr.bf16.mxu0 0
      %769 = vmatmul.mubr.bf16.gmra.mrb[0].mxu0 %v728
      %v770 = vpop.f32.mrb[0].mxu0
      %v771 = vadd.f32 0.0, %v770
      %v772 = vpop.f32.mrb[0].mxu0
      %v773 = vpop.f32.mrb[0].mxu0
      %v774 = vadd.f32 0.0, %v773
      %v775 = vpop.f32.mrb[0].mxu0
      %776 = vmatprep.mubr.bf16.mxu0 0
      %777 = vmatmul.mubr.bf16.gmra.mrb[0].mxu0 %v731
      %v778 = vpop.f32.mrb[0].mxu0
      %v779 = vadd.f32 0.0, %v778
      %v780 = vpop.f32.mrb[0].mxu0
      %v781 = vpop.f32.mrb[0].mxu0
      %v782 = vpop.f32.mrb[0].mxu0
      %783 = vdwg.mxu0
      %v785 = vsel %vm525, %v663, 0
      %v788 = vsel %vm525, %v664, 0
      %v791 = vand.u32 %v269, %v675
      %793 = vmatprep.subr.bf16.mxu0 0
      %794 = vmatpush1.bf16.msra.mxu0 %v268
      %795 = vmatprep.subr.bf16.mxu0 0
      %796 = vmatpush1.bf16.msra.mxu0 %v791
      %797 = vmatprep.subr.bf16.mxu0 0
      %798 = vmatpush1.bf16.msra.mxu0 0
      %799 = vmatprep.subr.bf16.mxu0 0
      %800 = vmatpush1.bf16.msra.mxu0 0
      %801 = vmatprep.subr.bf16.mxu0 0
      %802 = vmatpush1.bf16.msra.mxu0 0
      %803 = vmatprep.subr.bf16.mxu0 0
      %804 = vmatpush1.bf16.msra.mxu0 0
      %805 = vmatprep.subr.bf16.mxu0 0
      %806 = vmatpush1.bf16.msra.mxu0 0
      %807 = vmatprep.subr.bf16.mxu0 0
      %808 = vmatpush1.bf16.msra.mxu0 0
      %809 = vmatprep.subr.bf16.mxu0 0
      %810 = vmatpush1.bf16.msra.mxu0 0
      %811 = vmatprep.subr.bf16.mxu0 0
      %812 = vmatpush1.bf16.msra.mxu0 0
      %813 = vmatprep.subr.bf16.mxu0 0
      %814 = vmatpush1.bf16.msra.mxu0 0
      %815 = vmatprep.subr.bf16.mxu0 0
      %816 = vmatpush1.bf16.msra.mxu0 0
      %817 = vmatprep.subr.bf16.mxu0 0
      %818 = vmatpush1.bf16.msra.mxu0 0
      %819 = vmatprep.subr.bf16.mxu0 0
      %820 = vmatpush1.bf16.msra.mxu0 0
      %821 = vmatprep.subr.bf16.mxu0 0
      %822 = vmatpush1.bf16.msra.mxu0 0
      %823 = vmatprep.subr.bf16.mxu0 0
      %824 = vmatpush1.bf16.msra.mxu0 0
      %825 = vmatprep.mubr.bf16.mxu0 0
      %826 = vmatmul.mubr.bf16.gmra.mrb[0].mxu0 %v785
      %v827 = vpop.f32.mrb[0].mxu0
      %v828 = vadd.f32 0.0, %v827
      %v829 = vpop.f32.mrb[0].mxu0
      %v830 = vpop.f32.mrb[0].mxu0
      %v831 = vadd.f32 0.0, %v830
      %v832 = vpop.f32.mrb[0].mxu0
      %833 = vmatprep.mubr.bf16.mxu0 0
      %834 = vmatmul.mubr.bf16.gmra.mrb[0].mxu0 %v788
      %v835 = vpop.f32.mrb[0].mxu0
      %v836 = vadd.f32 0.0, %v835
      %v837 = vpop.f32.mrb[0].mxu0
      %v838 = vpop.f32.mrb[0].mxu0
      %v839 = vpop.f32.mrb[0].mxu0
      %840 = vdwg.mxu0
      %v842 = vsel %vm525, %v665, 0
      %v845 = vsel %vm525, %v666, 0
      %v848 = vand.u32 %v271, %v675
      %850 = vmatprep.subr.bf16.mxu0 0
      %851 = vmatpush1.bf16.msra.mxu0 %v270
      %852 = vmatprep.subr.bf16.mxu0 0
      %853 = vmatpush1.bf16.msra.mxu0 %v848
      %854 = vmatprep.subr.bf16.mxu0 0
      %855 = vmatpush1.bf16.msra.mxu0 0
      %856 = vmatprep.subr.bf16.mxu0 0
      %857 = vmatpush1.bf16.msra.mxu0 0
      %858 = vmatprep.subr.bf16.mxu0 0
      %859 = vmatpush1.bf16.msra.mxu0 0
      %860 = vmatprep.subr.bf16.mxu0 0
      %861 = vmatpush1.bf16.msra.mxu0 0
      %862 = vmatprep.subr.bf16.mxu0 0
      %863 = vmatpush1.bf16.msra.mxu0 0
      %864 = vmatprep.subr.bf16.mxu0 0
      %865 = vmatpush1.bf16.msra.mxu0 0
      %866 = vmatprep.subr.bf16.mxu0 0
      %867 = vmatpush1.bf16.msra.mxu0 0
      %868 = vmatprep.subr.bf16.mxu0 0
      %869 = vmatpush1.bf16.msra.mxu0 0
      %870 = vmatprep.subr.bf16.mxu0 0
      %871 = vmatpush1.bf16.msra.mxu0 0
      %872 = vmatprep.subr.bf16.mxu0 0
      %873 = vmatpush1.bf16.msra.mxu0 0
      %874 = vmatprep.subr.bf16.mxu0 0
      %875 = vmatpush1.bf16.msra.mxu0 0
      %876 = vmatprep.subr.bf16.mxu0 0
      %877 = vmatpush1.bf16.msra.mxu0 0
      %878 = vmatprep.subr.bf16.mxu0 0
      %879 = vmatpush1.bf16.msra.mxu0 0
      %880 = vmatprep.subr.bf16.mxu0 0
      %881 = vmatpush1.bf16.msra.mxu0 0
      %882 = vmatprep.mubr.bf16.mxu0 0
      %883 = vmatmul.mubr.bf16.gmra.mrb[0].mxu0 %v842
      %v884 = vpop.f32.mrb[0].mxu0
      %v885 = vadd.f32 0.0, %v884
      %v886 = vpop.f32.mrb[0].mxu0
      %v887 = vpop.f32.mrb[0].mxu0
      %v888 = vadd.f32 0.0, %v887
      %v889 = vpop.f32.mrb[0].mxu0
      %890 = vmatprep.mubr.bf16.mxu0 0
      %891 = vmatmul.mubr.bf16.gmra.mrb[0].mxu0 %v845
      %v892 = vpop.f32.mrb[0].mxu0
      %v893 = vadd.f32 0.0, %v892
      %v894 = vpop.f32.mrb[0].mxu0
      %v895 = vpop.f32.mrb[0].mxu0
      %v896 = vpop.f32.mrb[0].mxu0
      %897 = vdwg.mxu0
      %898 = vst.msk [vmem:[%s210] sm:$0xff] %vm272, %v714
      %899 = vst.msk [vmem:[%s210 + $0x8] sm:$0xff] %vm272, %v717
      %vm900 = vcmask 57344
      %901 = vst.msk [vmem:[%s210 + $0x10] sm:$0x1] %vm900, %v722
      %902 = vst.msk [vmem:[%s210 + $0x18] sm:$0xff] %vm272, %v771
      %903 = vst.msk [vmem:[%s210 + $0x20] sm:$0xff] %vm272, %v774
      %904 = vst.msk [vmem:[%s210 + $0x28] sm:$0x1] %vm900, %v779
      %905 = vst.msk [vmem:[%s210 + $0x30] sm:$0xff] %vm272, %v828
      %906 = vst.msk [vmem:[%s210 + $0x38] sm:$0xff] %vm272, %v831
      %907 = vst.msk [vmem:[%s210 + $0x40] sm:$0x1] %vm900, %v836
      %908 = vst.msk [vmem:[%s210 + $0x48] sm:$0xff] %vm272, %v885
      %909 = vst.msk [vmem:[%s210 + $0x50] sm:$0xff] %vm272, %v888
      %910 = vst.msk [vmem:[%s210 + $0x58] sm:$0x1] %vm900, %v893
      %p911 = scmp.lt.s32.totalorder %s14, 1
      %s912 = scalar_select %p911, %s14, 1
      %s913 = smul.addr %s912, 12
      %s914 = smul.addr %s913, 8
      %s915 = scalar_lea.vmem %s3, %s914
      // Predicated region
      $region33: #{mae_forward.27} parent=31 // pred_check
        %p916 = pneg %p110
      $region34: #{mae_forward.27} parent=31 // pred_check_branch
        %918 = sbr.rel (%p916) target = $region36
      $region35: #{mae_forward.27} parent=31 // pred_region
        _
      $region36: #{mae_forward.27} parent=31 // pred_fallthru
        _
    $region32: #{mae_forward.27} parent=5 // pred_fallthru
      _
    %p919 = scmp.le.s32.totalorder 2, %s9
    // Predicated region
    $region37: #{mae_forward.27} parent=5 // pred_check
      %p920 = pneg %p919
    $region38: #{mae_forward.27} parent=5 // pred_check_branch
      %922 = sbr.rel (%p920) target = $region40
    $region39: #{mae_forward.27} parent=5 // pred_region
      %s923 = ssub.s32 %s9, 2
      // Predicated region
      $region41: #{mae_forward.27} parent=39 // pred_check
        %p924 = pneg %p116
      $region42: #{mae_forward.27} parent=39 // pred_check_branch
        %926 = sbr.rel (%p924) target = $region44
      $region43: #{mae_forward.27} parent=39 // pred_region
        %p927 = scmp.lt.s32.totalorder %s15, 1
        %s928 = scalar_select %p927, %s15, 1
        %s929 = smul.addr %s928, 12
        %s930 = smul.addr %s929, 8
        %s931 = scalar_lea.vmem %s3, %s930
      $region44: #{mae_forward.27} parent=39 // pred_fallthru
        _
    $region40: #{mae_forward.27} parent=5 // pred_fallthru
      _
  $region6: #{mae_forward.27} parent=0 // loop_footer
    %s13 = sadd.s32 1, %s9
  $region7: #{mae_forward.27} parent=0 // loop_footer_branch
    %8 = sbr.rel target = $region3
  $region8: #{mae_forward.27} parent=0 // loop_exit
    _

// kernel: mae_forward.32
$region0: #{mae_forward.32}
  #allocation0 [shape = 'u32[]', space=smem, size = 0x4, offset = 0x4, fixed_abs, tag = 'smem constant byte address 0x4 - core index']
  #allocation1 [shape = 'u32[144,128]{1,0:T(1,128)}', space=vmem, size = 0x12000, scoped, tag = 'internal scratch']
  %s0 = inlined_call_operand.vmem [shape: f32[48,32], index: 0, kind: input, shape index: {}]
  %s1 = inlined_call_operand.vmem [shape: f32[2,32], index: 1, kind: input, shape index: {}]
  %s2 = inlined_call_operand.vmem [shape: f32[48,32], index: 2, kind: output, shape index: {}]
  %s3 = sld [smem:[#allocation0]]
  $region41: #{mae_forward.32} parent=0
    _
  %s5 = ssub.s32 1, %s3
  %s6 = scalar_select 0, %s5, %s3
  loop: start=0, step=1, limit=4
  $region2: #{mae_forward.32} parent=0 // loop_pre_header
    _
  $region3: #{mae_forward.32} parent=0 // loop_header
    %s8 = sphi 0, %s12
    %p9 = scmp.ge.s32.totalorder %s8, 4
    %s18 = sphi 0, %s20
    %s21 = sphi 0, %s18
    %s22 = sphi 0, %s21
    %s38 = sphi 0, %s22
    %s42 = sphi 0, %s42
    %s44 = sphi 0, %s42
    %s45 = sphi 0, %s44
    %s59 = sphi 0, %s45
    %s65 = sphi 0, %s67
    %s68 = sphi 0, %s65
    %s69 = sphi 0, %s68
    %s85 = sphi 0, %s69
  $region4: #{mae_forward.32} parent=0 // loop_header_branch
    %11 = sbr.rel (%p9) target = $region8
  $region5: #{mae_forward.32} parent=0 // loop_body
    %s13 = ssub.s32 %s8, 1
    %s14 = ssub.s32 %s8, 2
    %s15 = sadd.s32 %s8, 1
    %s16 = ssub.s32 %s8, %s15
    %p17 = scmp.eq.s32.totalorder %s16, 0
    %s19 = sadd.s32 %s18, 1
    %s20 = scalar_select %p17, %s18, %s19
    %p23 = pneg %p17
    %p24 = scmp.eq.s32.totalorder %s8, 1
    %p25 = por %p23, %p24
    %p26 = scmp.ne.s32.totalorder %s18, %s21
    %p27 = scmp.eq.s32.totalorder %s8, 0
    %p28 = por %p26, %p27
    %p29 = scmp.ne.s32.totalorder %s18, %s21
    %p30 = scmp.eq.s32.totalorder %s13, 1
    %p31 = por %p29, %p30
    %p32 = scmp.ne.s32.totalorder %s21, %s22
    %p33 = scmp.eq.s32.totalorder %s13, 0
    %p34 = por %p32, %p33
    %p35 = scmp.ne.s32.totalorder %s21, %s22
    %p36 = scmp.eq.s32.totalorder %s14, 1
    %p37 = por %p35, %p36
    %p39 = scmp.ne.s32.totalorder %s22, %s38
    %p40 = scmp.eq.s32.totalorder %s14, 0
    %p41 = por %p39, %p40
    %s43 = sadd.s32 %s42, 1
    %p46 = scmp.eq.s32.totalorder %s8, 1
    %p47 = scmp.ne.s32.totalorder %s42, %s44
    %p48 = scmp.eq.s32.totalorder %s8, 0
    %p49 = por %p47, %p48
    %p50 = scmp.ne.s32.totalorder %s42, %s44
    %p51 = scmp.eq.s32.totalorder %s13, 1
    %p52 = por %p50, %p51
    %p53 = scmp.ne.s32.totalorder %s44, %s45
    %p54 = scmp.eq.s32.totalorder %s13, 0
    %p55 = por %p53, %p54
    %p56 = scmp.ne.s32.totalorder %s44, %s45
    %p57 = scmp.eq.s32.totalorder %s14, 1
    %p58 = por %p56, %p57
    %p60 = scmp.ne.s32.totalorder %s45, %s59
    %p61 = scmp.eq.s32.totalorder %s14, 0
    %p62 = por %p60, %p61
    %s63 = ssub.s32 %s8, %s15
    %p64 = scmp.eq.s32.totalorder %s63, 0
    %s66 = sadd.s32 %s65, 1
    %s67 = scalar_select %p64, %s65, %s66
    %p70 = pneg %p64
    %p71 = scmp.eq.s32.totalorder %s8, 1
    %p72 = por %p70, %p71
    %p73 = scmp.ne.s32.totalorder %s65, %s68
    %p74 = scmp.eq.s32.totalorder %s8, 0
    %p75 = por %p73, %p74
    %p76 = scmp.ne.s32.totalorder %s65, %s68
    %p77 = scmp.eq.s32.totalorder %s13, 1
    %p78 = por %p76, %p77
    %p79 = scmp.ne.s32.totalorder %s68, %s69
    %p80 = scmp.eq.s32.totalorder %s13, 0
    %p81 = por %p79, %p80
    %p82 = scmp.ne.s32.totalorder %s68, %s69
    %p83 = scmp.eq.s32.totalorder %s14, 1
    %p84 = por %p82, %p83
    %p86 = scmp.ne.s32.totalorder %s69, %s85
    %p87 = scmp.eq.s32.totalorder %s14, 0
    %p88 = por %p86, %p87
    %p89 = scmp.le.s32.totalorder 1, %s8
    %p90 = scmp.lt.s32.totalorder %s8, 3
    %p91 = pnand %p89, %p90
    %p92 = pneg %p91
    // Predicated region
    $region9: #{mae_forward.32} parent=5 // pred_check
      _
    $region10: #{mae_forward.32} parent=5 // pred_check_branch
      %94 = sbr.rel (%p91) target = $region12
    $region11: #{mae_forward.32} parent=5 // pred_region
      %s95 = ssub.s32 %s8, 1
      // Predicated region
      $region13: #{mae_forward.32} parent=11 // pred_check
        %p96 = pneg %p55
      $region14: #{mae_forward.32} parent=11 // pred_check_branch
        %98 = sbr.rel (%p96) target = $region16
      $region15: #{mae_forward.32} parent=11 // pred_region
        _
      $region16: #{mae_forward.32} parent=11 // pred_fallthru
        _
    $region12: #{mae_forward.32} parent=5 // pred_fallthru
      _
    %p99 = scmp.lt.s32.totalorder %s8, 2
    // Predicated region
    $region17: #{mae_forward.32} parent=5 // pred_check
      %p100 = pneg %p99
    $region18: #{mae_forward.32} parent=5 // pred_check_branch
      %102 = sbr.rel (%p100) target = $region20
    $region19: #{mae_forward.32} parent=5 // pred_region
      // Predicated region
      $region21: #{mae_forward.32} parent=19 // pred_check
        %p103 = pneg %p28
      $region22: #{mae_forward.32} parent=19 // pred_check_branch
        %105 = sbr.rel (%p103) target = $region24
      $region23: #{mae_forward.32} parent=19 // pred_region
        %s106 = smul.u32 3, %s8
        %p107 = scmp.lt.s32.totalorder %s106, 5
        %s108 = scalar_select %p107, %s106, 5
        %s109 = smul.addr %s108, 8
        %s110 = scalar_lea.vmem %s0, %s109
        %s111 = smul.u32 3, %s8
      $region24: #{mae_forward.32} parent=19 // pred_fallthru
        _
    $region20: #{mae_forward.32} parent=5 // pred_fallthru
      _
    %p112 = scmp.le.s32.totalorder 1, %s8
    %p113 = scmp.lt.s32.totalorder %s8, 3
    %p114 = pnand %p112, %p113
    %p115 = pneg %p114
    // Predicated region
    $region25: #{mae_forward.32} parent=5 // pred_check
      _
    $region26: #{mae_forward.32} parent=5 // pred_check_branch
      %117 = sbr.rel (%p114) target = $region28
    $region27: #{mae_forward.32} parent=5 // pred_region
      %s118 = ssub.s32 %s8, 1
      %s119 = smul.u32 3, %s13
      %p120 = scmp.lt.s32.totalorder %s119, 5
      %s121 = scalar_select %p120, %s119, 5
      %s122 = smul.addr %s121, 8
      %s123 = scalar_lea.vmem %s0, %s122
      %p124 = pneg %p34
      %p125 = pneg %p31
      %p126 = pneg %p55
      %p127 = pneg %p52
      %p128 = pneg %p81
      %p129 = pneg %p78
      %s130 = smul.u32 3, %s13
      %p131 = scmp.lt.s32.totalorder %s130, 5
      %s132 = scalar_select %p131, %s130, 5
      %s133 = smul.addr %s132, 8
      %s134 = scalar_lea.vmem %s2, %s133
      %s135 = smul.u32 3, %s13
      %p136 = scmp.lt.s32.totalorder %s135, 5
      %s137 = scalar_select %p136, %s135, 5
      %s138 = smul.addr %s137, 8
      %s139 = scalar_lea.vmem %s0, %s138
      %s140 = smul.u32 3, %s13
      %s141 = smul.u32 3, %s13
      %p142 = scmp.lt.s32.totalorder %s141, 5
      %s143 = scalar_select %p142, %s141, 5
      %s144 = smul.addr %s143, 8
      %s145 = scalar_lea.vmem %s2, %s144
      %s146 = smul.u32 3, %s13
      %v147 = vld [vmem:[%s139] sm:$0xff]
      %v148 = vld [vmem:[%s139 + $0x8] sm:$0xff]
      %v149 = vld [vmem:[%s139 + $0x10] sm:$0xff]
      %v150 = vld [vmem:[%s1] sm:$0x1]
      %v151 = vld [vmem:[%s1 + $0x1] sm:$0x1]
      %vm152 = vcmask 261120
      %v153 = vsel %vm152, %v147, 0.0
      %154 = vadd.xlane.f32.xlu0 %v153
      %v155 = vpop.xlane.xlu0 %154
      %v156 = vsel %vm152, %v148, 0.0
      %157 = vadd.xlane.f32.xlu0 %v156
      %v158 = vpop.xlane.xlu0 %157
      %v159 = vsel %vm152, %v149, 0.0
      %160 = vadd.xlane.f32.xlu0 %v159
      %v161 = vpop.xlane.xlu0 %160
      %v162 = vrcp.pop 32.0
      %v163 = vmul.f32 %v155, %v162
      %v164 = vmul.f32 %v158, %v162
      %v165 = vmul.f32 %v161, %v162
      %v166 = vsub.f32 %v147, %v163
      %v167 = vsub.f32 %v148, %v164
      %v168 = vsub.f32 %v149, %v165
      %v169 = vmul.f32 %v166, %v166
      %v170 = vmul.f32 %v167, %v167
      %v171 = vmul.f32 %v168, %v168
      %v172 = vsel %vm152, %v169, 0.0
      %173 = vadd.xlane.f32.xlu0 %v172
      %v174 = vpop.xlane.xlu0 %173
      %v175 = vsel %vm152, %v170, 0.0
      %176 = vadd.xlane.f32.xlu0 %v175
      %v177 = vpop.xlane.xlu0 %176
      %v178 = vsel %vm152, %v171, 0.0
      %179 = vadd.xlane.f32.xlu0 %v178
      %v180 = vpop.xlane.xlu0 %179
      %v181 = vmul.f32 %v174, %v162
      %v182 = vmul.f32 %v177, %v162
      %v183 = vmul.f32 %v180, %v162
      %v184 = vadd.f32 %v181, 1e-05
      %v185 = vadd.f32 %v182, 1e-05
      %v186 = vadd.f32 %v183, 1e-05
      %v187 = vrsqrt.pop %v184
      %v188 = vrsqrt.pop %v185
      %v189 = vrsqrt.pop %v186
      %v190 = vmul.f32 %v166, %v187
      %v191 = vmul.f32 %v167, %v188
      %v192 = vmul.f32 %v168, %v189
      %v193 = vlaneseq
      %v194 = vshrl.u32 %v193, 7
      %v195 = vsub.s32 0, %v194
      %v196 = vrot.slane %v150, %v195
      %v197 = vmul.f32 %v190, %v196
      %v198 = vmul.f32 %v191, %v196
      %v199 = vmul.f32 %v192, %v196
      %v200 = vlaneseq
      %v201 = vshrl.u32 %v200, 7
      %v202 = vsub.s32 0, %v201
      %v203 = vrot.slane %v151, %v202
      %v204 = vadd.f32 %v197, %v203
      %v205 = vadd.f32 %v198, %v203
      %v206 = vadd.f32 %v199, %v203
      %207 = vst.msk [vmem:[%s145] sm:$0xff] %vm152, %v204
      %208 = vst.msk [vmem:[%s145 + $0x8] sm:$0xff] %vm152, %v205
      %209 = vst.msk [vmem:[%s145 + $0x10] sm:$0xff] %vm152, %v206
      %s210 = smul.u32 3, %s13
      %p211 = scmp.lt.s32.totalorder %s210, 5
      %s212 = scalar_select %p211, %s210, 5
      %s213 = smul.addr %s212, 8
      %s214 = scalar_lea.vmem %s2, %s213
      // Predicated region
      $region29: #{mae_forward.32} parent=27 // pred_check
        %p215 = pneg %p78
      $region30: #{mae_forward.32} parent=27 // pred_check_branch
        %217 = sbr.rel (%p215) target = $region32
      $region31: #{mae_forward.32} parent=27 // pred_region
        %s218 = smul.u32 3, %s13
      $region32: #{mae_forward.32} parent=27 // pred_fallthru
        _
    $region28: #{mae_forward.32} parent=5 // pred_fallthru
      _
    %p219 = scmp.le.s32.totalorder 2, %s8
    // Predicated region
    $region33: #{mae_forward.32} parent=5 // pred_check
      %p220 = pneg %p219
    $region34: #{mae_forward.32} parent=5 // pred_check_branch
      %222 = sbr.rel (%p220) target = $region36
    $region35: #{mae_forward.32} parent=5 // pred_region
      %s223 = ssub.s32 %s8, 2
      // Predicated region
      $region37: #{mae_forward.32} parent=35 // pred_check
        %p224 = pneg %p84
      $region38: #{mae_forward.32} parent=35 // pred_check_branch
        %226 = sbr.rel (%p224) target = $region40
      $region39: #{mae_forward.32} parent=35 // pred_region
        %s227 = smul.u32 3, %s14
        %p228 = scmp.lt.s32.totalorder %s227, 5
        %s229 = scalar_select %p228, %s227, 5
        %s230 = smul.addr %s229, 8
        %s231 = scalar_lea.vmem %s2, %s230
      $region40: #{mae_forward.32} parent=35 // pred_fallthru
        _
    $region36: #{mae_forward.32} parent=5 // pred_fallthru
      _
  $region6: #{mae_forward.32} parent=0 // loop_footer
    %s12 = sadd.s32 1, %s8
  $region7: #{mae_forward.32} parent=0 // loop_footer_branch
    %7 = sbr.rel target = $region3
  $region8: #{mae_forward.32} parent=0 // loop_exit
    _

// kernel: mae_forward.33
$region0: #{mae_forward.33}
  #allocation0 [shape = 'u32[]', space=smem, size = 0x4, offset = 0x4, fixed_abs, tag = 'smem constant byte address 0x4 - core index']
  #allocation1 [shape = 'u32[144,128]{1,0:T(1,128)}', space=vmem, size = 0x12000, scoped, tag = 'internal scratch']
  %s0 = inlined_call_operand.vmem [shape: f32[48,32], index: 0, kind: input, shape index: {}]
  %s1 = inlined_call_operand.vmem [shape: bf16[32,48], index: 1, kind: input, shape index: {}]
  %s2 = inlined_call_operand.vmem [shape: f32[1,48], index: 2, kind: input, shape index: {}]
  %s3 = inlined_call_operand.vmem [shape: f32[48,48], index: 3, kind: output, shape index: {}]
  %s4 = sld [smem:[#allocation0]]
  $region45: #{mae_forward.33} parent=0
    _
  %s6 = ssub.s32 1, %s4
  %s7 = scalar_select 0, %s6, %s4
  loop: start=0, step=1, limit=4
  $region2: #{mae_forward.33} parent=0 // loop_pre_header
    _
  $region3: #{mae_forward.33} parent=0 // loop_header
    %s9 = sphi 0, %s13
    %p10 = scmp.ge.s32.totalorder %s9, 4
    %s19 = sphi 0, %s21
    %s22 = sphi 0, %s19
    %s23 = sphi 0, %s22
    %s39 = sphi 0, %s23
    %s43 = sphi 0, %s43
    %s45 = sphi 0, %s43
    %s46 = sphi 0, %s45
    %s60 = sphi 0, %s46
    %s64 = sphi 0, %s64
    %s66 = sphi 0, %s64
    %s67 = sphi 0, %s66
    %s81 = sphi 0, %s67
    %s87 = sphi 0, %s89
    %s90 = sphi 0, %s87
    %s91 = sphi 0, %s90
    %s107 = sphi 0, %s91
  $region4: #{mae_forward.33} parent=0 // loop_header_branch
    %12 = sbr.rel (%p10) target = $region8
  $region5: #{mae_forward.33} parent=0 // loop_body
    %s14 = ssub.s32 %s9, 1
    %s15 = ssub.s32 %s9, 2
    %s16 = sadd.s32 %s9, 1
    %s17 = ssub.s32 %s9, %s16
    %p18 = scmp.eq.s32.totalorder %s17, 0
    %s20 = sadd.s32 %s19, 1
    %s21 = scalar_select %p18, %s19, %s20
    %p24 = pneg %p18
    %p25 = scmp.eq.s32.totalorder %s9, 1
    %p26 = por %p24, %p25
    %p27 = scmp.ne.s32.totalorder %s19, %s22
    %p28 = scmp.eq.s32.totalorder %s9, 0
    %p29 = por %p27, %p28
    %p30 = scmp.ne.s32.totalorder %s19, %s22
    %p31 = scmp.eq.s32.totalorder %s14, 1
    %p32 = por %p30, %p31
    %p33 = scmp.ne.s32.totalorder %s22, %s23
    %p34 = scmp.eq.s32.totalorder %s14, 0
    %p35 = por %p33, %p34
    %p36 = scmp.ne.s32.totalorder %s22, %s23
    %p37 = scmp.eq.s32.totalorder %s15, 1
    %p38 = por %p36, %p37
    %p40 = scmp.ne.s32.totalorder %s23, %s39
    %p41 = scmp.eq.s32.totalorder %s15, 0
    %p42 = por %p40, %p41
    %s44 = sadd.s32 %s43, 1
    %p47 = scmp.eq.s32.totalorder %s9, 1
    %p48 = scmp.ne.s32.totalorder %s43, %s45
    %p49 = scmp.eq.s32.totalorder %s9, 0
    %p50 = por %p48, %p49
    %p51 = scmp.ne.s32.totalorder %s43, %s45
    %p52 = scmp.eq.s32.totalorder %s14, 1
    %p53 = por %p51, %p52
    %p54 = scmp.ne.s32.totalorder %s45, %s46
    %p55 = scmp.eq.s32.totalorder %s14, 0
    %p56 = por %p54, %p55
    %p57 = scmp.ne.s32.totalorder %s45, %s46
    %p58 = scmp.eq.s32.totalorder %s15, 1
    %p59 = por %p57, %p58
    %p61 = scmp.ne.s32.totalorder %s46, %s60
    %p62 = scmp.eq.s32.totalorder %s15, 0
    %p63 = por %p61, %p62
    %s65 = sadd.s32 %s64, 1
    %p68 = scmp.eq.s32.totalorder %s9, 1
    %p69 = scmp.ne.s32.totalorder %s64, %s66
    %p70 = scmp.eq.s32.totalorder %s9, 0
    %p71 = por %p69, %p70
    %p72 = scmp.ne.s32.totalorder %s64, %s66
    %p73 = scmp.eq.s32.totalorder %s14, 1
    %p74 = por %p72, %p73
    %p75 = scmp.ne.s32.totalorder %s66, %s67
    %p76 = scmp.eq.s32.totalorder %s14, 0
    %p77 = por %p75, %p76
    %p78 = scmp.ne.s32.totalorder %s66, %s67
    %p79 = scmp.eq.s32.totalorder %s15, 1
    %p80 = por %p78, %p79
    %p82 = scmp.ne.s32.totalorder %s67, %s81
    %p83 = scmp.eq.s32.totalorder %s15, 0
    %p84 = por %p82, %p83
    %s85 = ssub.s32 %s9, %s16
    %p86 = scmp.eq.s32.totalorder %s85, 0
    %s88 = sadd.s32 %s87, 1
    %s89 = scalar_select %p86, %s87, %s88
    %p92 = pneg %p86
    %p93 = scmp.eq.s32.totalorder %s9, 1
    %p94 = por %p92, %p93
    %p95 = scmp.ne.s32.totalorder %s87, %s90
    %p96 = scmp.eq.s32.totalorder %s9, 0
    %p97 = por %p95, %p96
    %p98 = scmp.ne.s32.totalorder %s87, %s90
    %p99 = scmp.eq.s32.totalorder %s14, 1
    %p100 = por %p98, %p99
    %p101 = scmp.ne.s32.totalorder %s90, %s91
    %p102 = scmp.eq.s32.totalorder %s14, 0
    %p103 = por %p101, %p102
    %p104 = scmp.ne.s32.totalorder %s90, %s91
    %p105 = scmp.eq.s32.totalorder %s15, 1
    %p106 = por %p104, %p105
    %p108 = scmp.ne.s32.totalorder %s91, %s107
    %p109 = scmp.eq.s32.totalorder %s15, 0
    %p110 = por %p108, %p109
    %p111 = scmp.le.s32.totalorder 1, %s9
    %p112 = scmp.lt.s32.totalorder %s9, 3
    %p113 = pnand %p111, %p112
    %p114 = pneg %p113
    // Predicated region
    $region9: #{mae_forward.33} parent=5 // pred_check
      _
    $region10: #{mae_forward.33} parent=5 // pred_check_branch
      %116 = sbr.rel (%p113) target = $region12
    $region11: #{mae_forward.33} parent=5 // pred_region
      %s117 = ssub.s32 %s9, 1
      // Predicated region
      $region13: #{mae_forward.33} parent=11 // pred_check
        %p118 = pneg %p56
      $region14: #{mae_forward.33} parent=11 // pred_check_branch
        %120 = sbr.rel (%p118) target = $region16
      $region15: #{mae_forward.33} parent=11 // pred_region
        _
      $region16: #{mae_forward.33} parent=11 // pred_fallthru
        _
      // Predicated region
      $region17: #{mae_forward.33} parent=11 // pred_check
        %p121 = pneg %p77
      $region18: #{mae_forward.33} parent=11 // pred_check_branch
        %123 = sbr.rel (%p121) target = $region20
      $region19: #{mae_forward.33} parent=11 // pred_region
        _
      $region20: #{mae_forward.33} parent=11 // pred_fallthru
        _
    $region12: #{mae_forward.33} parent=5 // pred_fallthru
      _
    %p124 = scmp.lt.s32.totalorder %s9, 2
    // Predicated region
    $region21: #{mae_forward.33} parent=5 // pred_check
      %p125 = pneg %p124
    $region22: #{mae_forward.33} parent=5 // pred_check_branch
      %127 = sbr.rel (%p125) target = $region24
    $region23: #{mae_forward.33} parent=5 // pred_region
      // Predicated region
      $region25: #{mae_forward.33} parent=23 // pred_check
        %p128 = pneg %p29
      $region26: #{mae_forward.33} parent=23 // pred_check_branch
        %130 = sbr.rel (%p128) target = $region28
      $region27: #{mae_forward.33} parent=23 // pred_region
        %s131 = smul.u32 3, %s9
        %p132 = scmp.lt.s32.totalorder %s131, 5
        %s133 = scalar_select %p132, %s131, 5
        %s134 = smul.addr %s133, 8
        %s135 = scalar_lea.vmem %s0, %s134
        %s136 = smul.u32 3, %s9
      $region28: #{mae_forward.33} parent=23 // pred_fallthru
        _
    $region24: #{mae_forward.33} parent=5 // pred_fallthru
      _
    %p137 = scmp.le.s32.totalorder 1, %s9
    %p138 = scmp.lt.s32.totalorder %s9, 3
    %p139 = pnand %p137, %p138
    %p140 = pneg %p139
    // Predicated region
    $region29: #{mae_forward.33} parent=5 // pred_check
      _
    $region30: #{mae_forward.33} parent=5 // pred_check_branch
      %142 = sbr.rel (%p139) target = $region32
    $region31: #{mae_forward.33} parent=5 // pred_region
      %s143 = ssub.s32 %s9, 1
      %s144 = smul.u32 3, %s14
      %p145 = scmp.lt.s32.totalorder %s144, 5
      %s146 = scalar_select %p145, %s144, 5
      %s147 = smul.addr %s146, 8
      %s148 = scalar_lea.vmem %s0, %s147
      %p149 = pneg %p35
      %p150 = pneg %p32
      %p151 = pneg %p56
      %p152 = pneg %p53
      %p153 = pneg %p77
      %p154 = pneg %p74
      %p155 = pneg %p103
      %p156 = pneg %p100
      %s157 = smul.u32 3, %s14
      %p158 = scmp.lt.s32.totalorder %s157, 5
      %s159 = scalar_select %p158, %s157, 5
      %s160 = smul.addr %s159, 8
      %s161 = scalar_lea.vmem %s3, %s160
      %s162 = smul.u32 3, %s14
      %p163 = scmp.lt.s32.totalorder %s162, 5
      %s164 = scalar_select %p163, %s162, 5
      %s165 = smul.addr %s164, 8
      %s166 = scalar_lea.vmem %s0, %s165
      %s167 = smul.u32 3, %s14
      %s168 = smul.u32 3, %s14
      %p169 = scmp.lt.s32.totalorder %s168, 5
      %s170 = scalar_select %p169, %s168, 5
      %s171 = smul.addr %s170, 8
      %s172 = scalar_lea.vmem %s3, %s171
      %s173 = smul.u32 3, %s14
      %v175 = vld [vmem:[%s166] sm:$0xff]
      %v176 = vld [vmem:[%s166 + $0x8] sm:$0xff]
      %v177 = vld [vmem:[%s166 + $0x10] sm:$0xff]
      %v178 = vpack.c.bf16 %v176, %v175
      %v179 = vpack.c.bf16 %v177, %v177
      %v180 = vld [vmem:[%s1] sm:$0xf]
      %v181 = vld [vmem:[%s1 + $0x4] sm:$0xf]
      %v182 = vld [vmem:[%s1 + $0x8] sm:$0xf]
      %v183 = vld [vmem:[%s1 + $0xc] sm:$0xf]
      %v184 = vld [vmem:[%s2] sm:$0x1]
      %v186 = vlaneseq
      %v187 = vshrl.u32 %v186, 7
      %v188 = vsub.s32 0, %v187
      %v189 = vrot.slane %v184, %v188
      %v195 = vunpack.c.l.b16 %v180
      %v196 = vunpack.c.l.b16 %v181
      %v197 = vunpack.c.l.b16 %v182
      %v198 = vunpack.c.l.b16 %v183
      %v199 = vpack.c.b16 %v196, %v195
      %v200 = vpack.c.b16 %v198, %v197
      %vm203 = vcmask 261120
      %v205 = vsel %vm203, %v178, 0
      %v208 = vsel %vm203, %v179, 0
      %210 = vmatprep.subr.bf16.mxu0 0
      %211 = vmatpush1.bf16.msra.mxu0 %v199
      %212 = vmatprep.subr.bf16.mxu0 0
      %213 = vmatpush1.bf16.msra.mxu0 %v200
      %214 = vmatprep.subr.bf16.mxu0 0
      %215 = vmatpush1.bf16.msra.mxu0 0
      %216 = vmatprep.subr.bf16.mxu0 0
      %217 = vmatpush1.bf16.msra.mxu0 0
      %218 = vmatprep.subr.bf16.mxu0 0
      %219 = vmatpush1.bf16.msra.mxu0 0
      %220 = vmatprep.subr.bf16.mxu0 0
      %221 = vmatpush1.bf16.msra.mxu0 0
      %222 = vmatprep.subr.bf16.mxu0 0
      %223 = vmatpush1.bf16.msra.mxu0 0
      %224 = vmatprep.subr.bf16.mxu0 0
      %225 = vmatpush1.bf16.msra.mxu0 0
      %226 = vmatprep.subr.bf16.mxu0 0
      %227 = vmatpush1.bf16.msra.mxu0 0
      %228 = vmatprep.subr.bf16.mxu0 0
      %229 = vmatpush1.bf16.msra.mxu0 0
      %230 = vmatprep.subr.bf16.mxu0 0
      %231 = vmatpush1.bf16.msra.mxu0 0
      %232 = vmatprep.subr.bf16.mxu0 0
      %233 = vmatpush1.bf16.msra.mxu0 0
      %234 = vmatprep.subr.bf16.mxu0 0
      %235 = vmatpush1.bf16.msra.mxu0 0
      %236 = vmatprep.subr.bf16.mxu0 0
      %237 = vmatpush1.bf16.msra.mxu0 0
      %238 = vmatprep.subr.bf16.mxu0 0
      %239 = vmatpush1.bf16.msra.mxu0 0
      %240 = vmatprep.subr.bf16.mxu0 0
      %241 = vmatpush1.bf16.msra.mxu0 0
      %242 = vmatprep.mubr.bf16.mxu0 0
      %243 = vmatmul.mubr.bf16.gmra.mrb[0].mxu0 %v205
      %v244 = vpop.f32.mrb[0].mxu0
      %v245 = vadd.f32 %v189, %v244
      %v246 = vpop.f32.mrb[0].mxu0
      %v247 = vpop.f32.mrb[0].mxu0
      %v248 = vadd.f32 %v189, %v247
      %v249 = vpop.f32.mrb[0].mxu0
      %250 = vmatprep.mubr.bf16.mxu0 0
      %251 = vmatmul.mubr.bf16.gmra.mrb[0].mxu0 %v208
      %v252 = vpop.f32.mrb[0].mxu0
      %v253 = vadd.f32 %v189, %v252
      %v254 = vpop.f32.mrb[0].mxu0
      %v255 = vpop.f32.mrb[0].mxu0
      %v256 = vpop.f32.mrb[0].mxu0
      %257 = vdwg.mxu0
      %vm258 = vcmask 392192
      %259 = vst.msk [vmem:[%s172] sm:$0xff] %vm258, %v245
      %260 = vst.msk [vmem:[%s172 + $0x8] sm:$0xff] %vm258, %v248
      %261 = vst.msk [vmem:[%s172 + $0x10] sm:$0xff] %vm258, %v253
      %s262 = smul.u32 3, %s14
      %p263 = scmp.lt.s32.totalorder %s262, 5
      %s264 = scalar_select %p263, %s262, 5
      %s265 = smul.addr %s264, 8
      %s266 = scalar_lea.vmem %s3, %s265
      // Predicated region
      $region33: #{mae_forward.33} parent=31 // pred_check
        %p267 = pneg %p100
      $region34: #{mae_forward.33} parent=31 // pred_check_branch
        %269 = sbr.rel (%p267) target = $region36
      $region35: #{mae_forward.33} parent=31 // pred_region
        %s270 = smul.u32 3, %s14
      $region36: #{mae_forward.33} parent=31 // pred_fallthru
        _
    $region32: #{mae_forward.33} parent=5 // pred_fallthru
      _
    %p271 = scmp.le.s32.totalorder 2, %s9
    // Predicated region
    $region37: #{mae_forward.33} parent=5 // pred_check
      %p272 = pneg %p271
    $region38: #{mae_forward.33} parent=5 // pred_check_branch
      %274 = sbr.rel (%p272) target = $region40
    $region39: #{mae_forward.33} parent=5 // pred_region
      %s275 = ssub.s32 %s9, 2
      // Predicated region
      $region41: #{mae_forward.33} parent=39 // pred_check
        %p276 = pneg %p106
      $region42: #{mae_forward.33} parent=39 // pred_check_branch
        %278 = sbr.rel (%p276) target = $region44
      $region43: #{mae_forward.33} parent=39 // pred_region
        %s279 = smul.u32 3, %s15
        %p280 = scmp.lt.s32.totalorder %s279, 5
        %s281 = scalar_select %p280, %s279, 5
        %s282 = smul.addr %s281, 8
        %s283 = scalar_lea.vmem %s3, %s282
      $region44: #{mae_forward.33} parent=39 // pred_fallthru
        _
    $region40: #{mae_forward.33} parent=5 // pred_fallthru
      _
  $region6: #{mae_forward.33} parent=0 // loop_footer
    %s13 = sadd.s32 1, %s9
  $region7: #{mae_forward.33} parent=0 // loop_footer_branch
    %8 = sbr.rel target = $region3
  $region8: #{mae_forward.33} parent=0 // loop_exit
    _

// kernel: mae_forward.28
$region0: #{mae_forward.28}
  #allocation0 [shape = 'u32[]', space=smem, size = 0x4, offset = 0x4, fixed_abs, tag = 'smem constant byte address 0x4 - core index']
  #allocation1 [shape = 'u32[144,128]{1,0:T(1,128)}', space=vmem, size = 0x12000, scoped, tag = 'internal scratch']
  %s0 = inlined_call_operand.vmem [shape: f32[48,32], index: 0, kind: input, shape index: {}]
  %s1 = inlined_call_operand.vmem [shape: f32[48,32], index: 1, kind: input, shape index: {}]
  %s2 = inlined_call_operand.vmem [shape: bf16[32,32], index: 2, kind: input, shape index: {}]
  %s3 = inlined_call_operand.vmem [shape: f32[4,32], index: 3, kind: input, shape index: {}]
  %s4 = inlined_call_operand.vmem [shape: bf16[32,64], index: 4, kind: input, shape index: {}]
  %s5 = inlined_call_operand.vmem [shape: f32[1,64], index: 5, kind: input, shape index: {}]
  %s6 = inlined_call_operand.vmem [shape: bf16[64,32], index: 6, kind: input, shape index: {}]
  %s7 = inlined_call_operand.vmem [shape: f32[48,32], index: 7, kind: output, shape index: {}]
  %s8 = sld [smem:[#allocation0]]
  $region61: #{mae_forward.28} parent=0
    _
  %s10 = ssub.s32 1, %s8
  %s11 = scalar_select 0, %s10, %s8
  loop: start=0, step=1, limit=4
  $region2: #{mae_forward.28} parent=0 // loop_pre_header
    _
  $region3: #{mae_forward.28} parent=0 // loop_header
    %s13 = sphi 0, %s17
    %p14 = scmp.ge.s32.totalorder %s13, 4
    %s23 = sphi 0, %s25
    %s26 = sphi 0, %s23
    %s27 = sphi 0, %s26
    %s43 = sphi 0, %s27
    %s49 = sphi 0, %s51
    %s52 = sphi 0, %s49
    %s53 = sphi 0, %s52
    %s69 = sphi 0, %s53
    %s73 = sphi 0, %s73
    %s75 = sphi 0, %s73
    %s76 = sphi 0, %s75
    %s90 = sphi 0, %s76
    %s94 = sphi 0, %s94
    %s96 = sphi 0, %s94
    %s97 = sphi 0, %s96
    %s111 = sphi 0, %s97
    %s115 = sphi 0, %s115
    %s117 = sphi 0, %s115
    %s118 = sphi 0, %s117
    %s132 = sphi 0, %s118
    %s136 = sphi 0, %s136
    %s138 = sphi 0, %s136
    %s139 = sphi 0, %s138
    %s153 = sphi 0, %s139
    %s157 = sphi 0, %s157
    %s159 = sphi 0, %s157
    %s160 = sphi 0, %s159
    %s174 = sphi 0, %s160
    %s180 = sphi 0, %s182
    %s183 = sphi 0, %s180
    %s184 = sphi 0, %s183
    %s200 = sphi 0, %s184
  $region4: #{mae_forward.28} parent=0 // loop_header_branch
    %16 = sbr.rel (%p14) target = $region8
  $region5: #{mae_forward.28} parent=0 // loop_body
    %s18 = ssub.s32 %s13, 1
    %s19 = ssub.s32 %s13, 2
    %s20 = sadd.s32 %s13, 1
    %s21 = ssub.s32 %s13, %s20
    %p22 = scmp.eq.s32.totalorder %s21, 0
    %s24 = sadd.s32 %s23, 1
    %s25 = scalar_select %p22, %s23, %s24
    %p28 = pneg %p22
    %p29 = scmp.eq.s32.totalorder %s13, 1
    %p30 = por %p28, %p29
    %p31 = scmp.ne.s32.totalorder %s23, %s26
    %p32 = scmp.eq.s32.totalorder %s13, 0
    %p33 = por %p31, %p32
    %p34 = scmp.ne.s32.totalorder %s23, %s26
    %p35 = scmp.eq.s32.totalorder %s18, 1
    %p36 = por %p34, %p35
    %p37 = scmp.ne.s32.totalorder %s26, %s27
    %p38 = scmp.eq.s32.totalorder %s18, 0
    %p39 = por %p37, %p38
    %p40 = scmp.ne.s32.totalorder %s26, %s27
    %p41 = scmp.eq.s32.totalorder %s19, 1
    %p42 = por %p40, %p41
    %p44 = scmp.ne.s32.totalorder %s27, %s43
    %p45 = scmp.eq.s32.totalorder %s19, 0
    %p46 = por %p44, %p45
    %s47 = ssub.s32 %s13, %s20
    %p48 = scmp.eq.s32.totalorder %s47, 0
    %s50 = sadd.s32 %s49, 1
    %s51 = scalar_select %p48, %s49, %s50
    %p54 = pneg %p48
    %p55 = scmp.eq.s32.totalorder %s13, 1
    %p56 = por %p54, %p55
    %p57 = scmp.ne.s32.totalorder %s49, %s52
    %p58 = scmp.eq.s32.totalorder %s13, 0
    %p59 = por %p57, %p58
    %p60 = scmp.ne.s32.totalorder %s49, %s52
    %p61 = scmp.eq.s32.totalorder %s18, 1
    %p62 = por %p60, %p61
    %p63 = scmp.ne.s32.totalorder %s52, %s53
    %p64 = scmp.eq.s32.totalorder %s18, 0
    %p65 = por %p63, %p64
    %p66 = scmp.ne.s32.totalorder %s52, %s53
    %p67 = scmp.eq.s32.totalorder %s19, 1
    %p68 = por %p66, %p67
    %p70 = scmp.ne.s32.totalorder %s53, %s69
    %p71 = scmp.eq.s32.totalorder %s19, 0
    %p72 = por %p70, %p71
    %s74 = sadd.s32 %s73, 1
    %p77 = scmp.eq.s32.totalorder %s13, 1
    %p78 = scmp.ne.s32.totalorder %s73, %s75
    %p79 = scmp.eq.s32.totalorder %s13, 0
    %p80 = por %p78, %p79
    %p81 = scmp.ne.s32.totalorder %s73, %s75
    %p82 = scmp.eq.s32.totalorder %s18, 1
    %p83 = por %p81, %p82
    %p84 = scmp.ne.s32.totalorder %s75, %s76
    %p85 = scmp.eq.s32.totalorder %s18, 0
    %p86 = por %p84, %p85
    %p87 = scmp.ne.s32.totalorder %s75, %s76
    %p88 = scmp.eq.s32.totalorder %s19, 1
    %p89 = por %p87, %p88
    %p91 = scmp.ne.s32.totalorder %s76, %s90
    %p92 = scmp.eq.s32.totalorder %s19, 0
    %p93 = por %p91, %p92
    %s95 = sadd.s32 %s94, 1
    %p98 = scmp.eq.s32.totalorder %s13, 1
    %p99 = scmp.ne.s32.totalorder %s94, %s96
    %p100 = scmp.eq.s32.totalorder %s13, 0
    %p101 = por %p99, %p100
    %p102 = scmp.ne.s32.totalorder %s94, %s96
    %p103 = scmp.eq.s32.totalorder %s18, 1
    %p104 = por %p102, %p103
    %p105 = scmp.ne.s32.totalorder %s96, %s97
    %p106 = scmp.eq.s32.totalorder %s18, 0
    %p107 = por %p105, %p106
    %p108 = scmp.ne.s32.totalorder %s96, %s97
    %p109 = scmp.eq.s32.totalorder %s19, 1
    %p110 = por %p108, %p109
    %p112 = scmp.ne.s32.totalorder %s97, %s111
    %p113 = scmp.eq.s32.totalorder %s19, 0
    %p114 = por %p112, %p113
    %s116 = sadd.s32 %s115, 1
    %p119 = scmp.eq.s32.totalorder %s13, 1
    %p120 = scmp.ne.s32.totalorder %s115, %s117
    %p121 = scmp.eq.s32.totalorder %s13, 0
    %p122 = por %p120, %p121
    %p123 = scmp.ne.s32.totalorder %s115, %s117
    %p124 = scmp.eq.s32.totalorder %s18, 1
    %p125 = por %p123, %p124
    %p126 = scmp.ne.s32.totalorder %s117, %s118
    %p127 = scmp.eq.s32.totalorder %s18, 0
    %p128 = por %p126, %p127
    %p129 = scmp.ne.s32.totalorder %s117, %s118
    %p130 = scmp.eq.s32.totalorder %s19, 1
    %p131 = por %p129, %p130
    %p133 = scmp.ne.s32.totalorder %s118, %s132
    %p134 = scmp.eq.s32.totalorder %s19, 0
    %p135 = por %p133, %p134
    %s137 = sadd.s32 %s136, 1
    %p140 = scmp.eq.s32.totalorder %s13, 1
    %p141 = scmp.ne.s32.totalorder %s136, %s138
    %p142 = scmp.eq.s32.totalorder %s13, 0
    %p143 = por %p141, %p142
    %p144 = scmp.ne.s32.totalorder %s136, %s138
    %p145 = scmp.eq.s32.totalorder %s18, 1
    %p146 = por %p144, %p145
    %p147 = scmp.ne.s32.totalorder %s138, %s139
    %p148 = scmp.eq.s32.totalorder %s18, 0
    %p149 = por %p147, %p148
    %p150 = scmp.ne.s32.totalorder %s138, %s139
    %p151 = scmp.eq.s32.totalorder %s19, 1
    %p152 = por %p150, %p151
    %p154 = scmp.ne.s32.totalorder %s139, %s153
    %p155 = scmp.eq.s32.totalorder %s19, 0
    %p156 = por %p154, %p155
    %s158 = sadd.s32 %s157, 1
    %p161 = scmp.eq.s32.totalorder %s13, 1
    %p162 = scmp.ne.s32.totalorder %s157, %s159
    %p163 = scmp.eq.s32.totalorder %s13, 0
    %p164 = por %p162, %p163
    %p165 = scmp.ne.s32.totalorder %s157, %s159
    %p166 = scmp.eq.s32.totalorder %s18, 1
    %p167 = por %p165, %p166
    %p168 = scmp.ne.s32.totalorder %s159, %s160
    %p169 = scmp.eq.s32.totalorder %s18, 0
    %p170 = por %p168, %p169
    %p171 = scmp.ne.s32.totalorder %s159, %s160
    %p172 = scmp.eq.s32.totalorder %s19, 1
    %p173 = por %p171, %p172
    %p175 = scmp.ne.s32.totalorder %s160, %s174
    %p176 = scmp.eq.s32.totalorder %s19, 0
    %p177 = por %p175, %p176
    %s178 = ssub.s32 %s13, %s20
    %p179 = scmp.eq.s32.totalorder %s178, 0
    %s181 = sadd.s32 %s180, 1
    %s182 = scalar_select %p179, %s180, %s181
    %p185 = pneg %p179
    %p186 = scmp.eq.s32.totalorder %s13, 1
    %p187 = por %p185, %p186
    %p188 = scmp.ne.s32.totalorder %s180, %s183
    %p189 = scmp.eq.s32.totalorder %s13, 0
    %p190 = por %p188, %p189
    %p191 = scmp.ne.s32.totalorder %s180, %s183
    %p192 = scmp.eq.s32.totalorder %s18, 1
    %p193 = por %p191, %p192
    %p194 = scmp.ne.s32.totalorder %s183, %s184
    %p195 = scmp.eq.s32.totalorder %s18, 0
    %p196 = por %p194, %p195
    %p197 = scmp.ne.s32.totalorder %s183, %s184
    %p198 = scmp.eq.s32.totalorder %s19, 1
    %p199 = por %p197, %p198
    %p201 = scmp.ne.s32.totalorder %s184, %s200
    %p202 = scmp.eq.s32.totalorder %s19, 0
    %p203 = por %p201, %p202
    %p204 = scmp.le.s32.totalorder 1, %s13
    %p205 = scmp.lt.s32.totalorder %s13, 3
    %p206 = pnand %p204, %p205
    %p207 = pneg %p206
    // Predicated region
    $region9: #{mae_forward.28} parent=5 // pred_check
      _
    $region10: #{mae_forward.28} parent=5 // pred_check_branch
      %209 = sbr.rel (%p206) target = $region12
    $region11: #{mae_forward.28} parent=5 // pred_region
      %s210 = ssub.s32 %s13, 1
      // Predicated region
      $region13: #{mae_forward.28} parent=11 // pred_check
        %p211 = pneg %p86
      $region14: #{mae_forward.28} parent=11 // pred_check_branch
        %213 = sbr.rel (%p211) target = $region16
      $region15: #{mae_forward.28} parent=11 // pred_region
        _
      $region16: #{mae_forward.28} parent=11 // pred_fallthru
        _
      // Predicated region
      $region17: #{mae_forward.28} parent=11 // pred_check
        %p214 = pneg %p107
      $region18: #{mae_forward.28} parent=11 // pred_check_branch
        %216 = sbr.rel (%p214) target = $region20
      $region19: #{mae_forward.28} parent=11 // pred_region
        _
      $region20: #{mae_forward.28} parent=11 // pred_fallthru
        _
      // Predicated region
      $region21: #{mae_forward.28} parent=11 // pred_check
        %p217 = pneg %p128
      $region22: #{mae_forward.28} parent=11 // pred_check_branch
        %219 = sbr.rel (%p217) target = $region24
      $region23: #{mae_forward.28} parent=11 // pred_region
        _
      $region24: #{mae_forward.28} parent=11 // pred_fallthru
        _
      // Predicated region
      $region25: #{mae_forward.28} parent=11 // pred_check
        %p220 = pneg %p149
      $region26: #{mae_forward.28} parent=11 // pred_check_branch
        %222 = sbr.rel (%p220) target = $region28
      $region27: #{mae_forward.28} parent=11 // pred_region
        _
      $region28: #{mae_forward.28} parent=11 // pred_fallthru
        _
      // Predicated region
      $region29: #{mae_forward.28} parent=11 // pred_check
        %p223 = pneg %p170
      $region30: #{mae_forward.28} parent=11 // pred_check_branch
        %225 = sbr.rel (%p223) target = $region32
      $region31: #{mae_forward.28} parent=11 // pred_region
        _
      $region32: #{mae_forward.28} parent=11 // pred_fallthru
        _
    $region12: #{mae_forward.28} parent=5 // pred_fallthru
      _
    %p226 = scmp.lt.s32.totalorder %s13, 2
    // Predicated region
    $region33: #{mae_forward.28} parent=5 // pred_check
      %p227 = pneg %p226
    $region34: #{mae_forward.28} parent=5 // pred_check_branch
      %229 = sbr.rel (%p227) target = $region36
    $region35: #{mae_forward.28} parent=5 // pred_region
      // Predicated region
      $region37: #{mae_forward.28} parent=35 // pred_check
        %p230 = pneg %p33
      $region38: #{mae_forward.28} parent=35 // pred_check_branch
        %232 = sbr.rel (%p230) target = $region40
      $region39: #{mae_forward.28} parent=35 // pred_region
        %s233 = smul.u32 3, %s13
        %p234 = scmp.lt.s32.totalorder %s233, 5
        %s235 = scalar_select %p234, %s233, 5
        %s236 = smul.addr %s235, 8
        %s237 = scalar_lea.vmem %s0, %s236
        %s238 = smul.u32 3, %s13
      $region40: #{mae_forward.28} parent=35 // pred_fallthru
        _
      // Predicated region
      $region41: #{mae_forward.28} parent=35 // pred_check
        %p239 = pneg %p59
      $region42: #{mae_forward.28} parent=35 // pred_check_branch
        %241 = sbr.rel (%p239) target = $region44
      $region43: #{mae_forward.28} parent=35 // pred_region
        %s242 = smul.u32 3, %s13
        %p243 = scmp.lt.s32.totalorder %s242, 5
        %s244 = scalar_select %p243, %s242, 5
        %s245 = smul.addr %s244, 8
        %s246 = scalar_lea.vmem %s1, %s245
        %s247 = smul.u32 3, %s13
      $region44: #{mae_forward.28} parent=35 // pred_fallthru
        _
    $region36: #{mae_forward.28} parent=5 // pred_fallthru
      _
    %p248 = scmp.le.s32.totalorder 1, %s13
    %p249 = scmp.lt.s32.totalorder %s13, 3
    %p250 = pnand %p248, %p249
    %p251 = pneg %p250
    // Predicated region
    $region45: #{mae_forward.28} parent=5 // pred_check
      _
    $region46: #{mae_forward.28} parent=5 // pred_check_branch
      %253 = sbr.rel (%p250) target = $region48
    $region47: #{mae_forward.28} parent=5 // pred_region
      %s254 = ssub.s32 %s13, 1
      %s255 = smul.u32 3, %s18
      %p256 = scmp.lt.s32.totalorder %s255, 5
      %s257 = scalar_select %p256, %s255, 5
      %s258 = smul.addr %s257, 8
      %s259 = scalar_lea.vmem %s0, %s258
      %p260 = pneg %p39
      %p261 = pneg %p36
      %s262 = smul.u32 3, %s18
      %p263 = scmp.lt.s32.totalorder %s262, 5
      %s264 = scalar_select %p263, %s262, 5
      %s265 = smul.addr %s264, 8
      %s266 = scalar_lea.vmem %s1, %s265
      %p267 = pneg %p65
      %p268 = pneg %p62
      %p269 = pneg %p86
      %p270 = pneg %p83
      %p271 = pneg %p107
      %p272 = pneg %p104
      %p273 = pneg %p128
      %p274 = pneg %p125
      %p275 = pneg %p149
      %p276 = pneg %p146
      %p277 = pneg %p170
      %p278 = pneg %p167
      %p279 = pneg %p196
      %p280 = pneg %p193
      %s281 = smul.u32 3, %s18
      %p282 = scmp.lt.s32.totalorder %s281, 5
      %s283 = scalar_select %p282, %s281, 5
      %s284 = smul.addr %s283, 8
      %s285 = scalar_lea.vmem %s7, %s284
      %s286 = smul.u32 3, %s18
      %p287 = scmp.lt.s32.totalorder %s286, 5
      %s288 = scalar_select %p287, %s286, 5
      %s289 = smul.addr %s288, 8
      %s290 = scalar_lea.vmem %s0, %s289
      %s291 = smul.u32 3, %s18
      %s292 = smul.u32 3, %s18
      %p293 = scmp.lt.s32.totalorder %s292, 5
      %s294 = scalar_select %p293, %s292, 5
      %s295 = smul.addr %s294, 8
      %s296 = scalar_lea.vmem %s1, %s295
      %s297 = smul.u32 3, %s18
      %s298 = smul.u32 3, %s18
      %p299 = scmp.lt.s32.totalorder %s298, 5
      %s300 = scalar_select %p299, %s298, 5
      %s301 = smul.addr %s300, 8
      %s302 = scalar_lea.vmem %s7, %s301
      %s303 = smul.u32 3, %s18
      %v305 = vld [vmem:[%s3] sm:$0x1]
      %v306 = vld [vmem:[%s3 + $0x1] sm:$0x1]
      %v307 = vld [vmem:[%s3 + $0x2] sm:$0x1]
      %v308 = vld [vmem:[%s3 + $0x3] sm:$0x1]
      %v309 = vld [vmem:[%s290] sm:$0xff]
      %v310 = vld [vmem:[%s290 + $0x8] sm:$0xff]
      %v311 = vld [vmem:[%s290 + $0x10] sm:$0xff]
      %v312 = vld [vmem:[%s296] sm:$0xff]
      %v313 = vld [vmem:[%s296 + $0x8] sm:$0xff]
      %v314 = vld [vmem:[%s296 + $0x10] sm:$0xff]
      %v315 = vpack.c.bf16 %v313, %v312
      %v316 = vpack.c.bf16 %v314, %v314
      %v317 = vld [vmem:[%s2] sm:$0xf]
      %v318 = vld [vmem:[%s2 + $0x4] sm:$0xf]
      %v319 = vld [vmem:[%s2 + $0x8] sm:$0xf]
      %v320 = vld [vmem:[%s2 + $0xc] sm:$0xf]
      %v325 = vunpack.c.l.b16 %v317
      %v326 = vunpack.c.l.b16 %v318
      %v327 = vunpack.c.l.b16 %v319
      %v328 = vunpack.c.l.b16 %v320
      %v329 = vpack.c.b16 %v326, %v325
      %v330 = vpack.c.b16 %v328, %v327
      %vm333 = vcmask 261120
      %v335 = vsel %vm333, %v315, 0
      %v338 = vsel %vm333, %v316, 0
      %340 = vmatprep.subr.bf16.mxu0 0
      %341 = vmatpush1.bf16.msra.mxu0 %v329
      %342 = vmatprep.subr.bf16.mxu0 0
      %343 = vmatpush1.bf16.msra.mxu0 %v330
      %344 = vmatprep.subr.bf16.mxu0 0
      %345 = vmatpush1.bf16.msra.mxu0 0
      %346 = vmatprep.subr.bf16.mxu0 0
      %347 = vmatpush1.bf16.msra.mxu0 0
      %348 = vmatprep.subr.bf16.mxu0 0
      %349 = vmatpush1.bf16.msra.mxu0 0
      %350 = vmatprep.subr.bf16.mxu0 0
      %351 = vmatpush1.bf16.msra.mxu0 0
      %352 = vmatprep.subr.bf16.mxu0 0
      %353 = vmatpush1.bf16.msra.mxu0 0
      %354 = vmatprep.subr.bf16.mxu0 0
      %355 = vmatpush1.bf16.msra.mxu0 0
      %356 = vmatprep.subr.bf16.mxu0 0
      %357 = vmatpush1.bf16.msra.mxu0 0
      %358 = vmatprep.subr.bf16.mxu0 0
      %359 = vmatpush1.bf16.msra.mxu0 0
      %360 = vmatprep.subr.bf16.mxu0 0
      %361 = vmatpush1.bf16.msra.mxu0 0
      %362 = vmatprep.subr.bf16.mxu0 0
      %363 = vmatpush1.bf16.msra.mxu0 0
      %364 = vmatprep.subr.bf16.mxu0 0
      %365 = vmatpush1.bf16.msra.mxu0 0
      %366 = vmatprep.subr.bf16.mxu0 0
      %367 = vmatpush1.bf16.msra.mxu0 0
      %368 = vmatprep.subr.bf16.mxu0 0
      %369 = vmatpush1.bf16.msra.mxu0 0
      %370 = vmatprep.subr.bf16.mxu0 0
      %371 = vmatpush1.bf16.msra.mxu0 0
      %372 = vmatprep.mubr.bf16.mxu0 0
      %373 = vmatmul.mubr.bf16.gmra.mrb[0].mxu0 %v335
      %v374 = vpop.f32.mrb[0].mxu0
      %v375 = vadd.f32 0.0, %v374
      %v376 = vpop.f32.mrb[0].mxu0
      %v377 = vpop.f32.mrb[0].mxu0
      %v378 = vadd.f32 0.0, %v377
      %v379 = vpop.f32.mrb[0].mxu0
      %380 = vmatprep.mubr.bf16.mxu0 0
      %381 = vmatmul.mubr.bf16.gmra.mrb[0].mxu0 %v338
      %v382 = vpop.f32.mrb[0].mxu0
      %v383 = vadd.f32 0.0, %v382
      %v384 = vpop.f32.mrb[0].mxu0
      %v385 = vpop.f32.mrb[0].mxu0
      %v386 = vpop.f32.mrb[0].mxu0
      %387 = vdwg.mxu0
      %v388 = vadd.f32 %v309, %v375
      %v389 = vadd.f32 %v310, %v378
      %v390 = vadd.f32 %v311, %v383
      %v391 = vlaneseq
      %v392 = vshrl.u32 %v391, 7
      %v393 = vsub.s32 0, %v392
      %v394 = vrot.slane %v305, %v393
      %v395 = vadd.f32 %v388, %v394
      %v396 = vadd.f32 %v389, %v394
      %v397 = vadd.f32 %v390, %v394
      %v398 = vsel %vm333, %v395, 0.0
      %399 = vadd.xlane.f32.xlu0 %v398
      %v400 = vpop.xlane.xlu0 %399
      %v401 = vsel %vm333, %v396, 0.0
      %402 = vadd.xlane.f32.xlu0 %v401
      %v403 = vpop.xlane.xlu0 %402
      %v404 = vsel %vm333, %v397, 0.0
      %405 = vadd.xlane.f32.xlu0 %v404
      %v406 = vpop.xlane.xlu0 %405
      %v407 = vrcp.pop 32.0
      %v408 = vmul.f32 %v400, %v407
      %v409 = vmul.f32 %v403, %v407
      %v410 = vmul.f32 %v406, %v407
      %v411 = vsub.f32 %v395, %v408
      %v412 = vsub.f32 %v396, %v409
      %v413 = vsub.f32 %v397, %v410
      %v414 = vmul.f32 %v411, %v411
      %v415 = vmul.f32 %v412, %v412
      %v416 = vmul.f32 %v413, %v413
      %v417 = vsel %vm333, %v414, 0.0
      %418 = vadd.xlane.f32.xlu0 %v417
      %v419 = vpop.xlane.xlu0 %418
      %v420 = vsel %vm333, %v415, 0.0
      %421 = vadd.xlane.f32.xlu0 %v420
      %v422 = vpop.xlane.xlu0 %421
      %v423 = vsel %vm333, %v416, 0.0
      %424 = vadd.xlane.f32.xlu0 %v423
      %v425 = vpop.xlane.xlu0 %424
      %v426 = vmul.f32 %v419, %v407
      %v427 = vmul.f32 %v422, %v407
      %v428 = vmul.f32 %v425, %v407
      %v429 = vadd.f32 %v426, 1e-05
      %v430 = vadd.f32 %v427, 1e-05
      %v431 = vadd.f32 %v428, 1e-05
      %v432 = vrsqrt.pop %v429
      %v433 = vrsqrt.pop %v430
      %v434 = vrsqrt.pop %v431
      %v435 = vmul.f32 %v411, %v432
      %v436 = vmul.f32 %v412, %v433
      %v437 = vmul.f32 %v413, %v434
      %v438 = vlaneseq
      %v439 = vshrl.u32 %v438, 7
      %v440 = vsub.s32 0, %v439
      %v441 = vrot.slane %v306, %v440
      %v442 = vmul.f32 %v435, %v441
      %v443 = vmul.f32 %v436, %v441
      %v444 = vmul.f32 %v437, %v441
      %v445 = vlaneseq
      %v446 = vshrl.u32 %v445, 7
      %v447 = vsub.s32 0, %v446
      %v448 = vrot.slane %v307, %v447
      %v449 = vadd.f32 %v442, %v448
      %v450 = vadd.f32 %v443, %v448
      %v451 = vadd.f32 %v444, %v448
      %v452 = vpack.c.bf16 %v450, %v449
      %v453 = vpack.c.bf16 %v451, %v451
      %v454 = vld [vmem:[%s4] sm:$0xf]
      %v455 = vld [vmem:[%s4 + $0x4] sm:$0xf]
      %v456 = vld [vmem:[%s4 + $0x8] sm:$0xf]
      %v457 = vld [vmem:[%s4 + $0xc] sm:$0xf]
      %v458 = vld [vmem:[%s5] sm:$0x1]
      %v460 = vlaneseq
      %v461 = vshrl.u32 %v460, 7
      %v462 = vsub.s32 0, %v461
      %v463 = vrot.slane %v458, %v462
      %v469 = vunpack.c.l.b16 %v454
      %v470 = vunpack.c.l.b16 %v455
      %v471 = vunpack.c.l.b16 %v456
      %v472 = vunpack.c.l.b16 %v457
      %v473 = vpack.c.b16 %v470, %v469
      %v474 = vpack.c.b16 %v472, %v471
      %v478 = vsel %vm333, %v452, 0
      %v481 = vsel %vm333, %v453, 0
      %483 = vmatprep.subr.bf16.mxu0 0
      %484 = vmatpush1.bf16.msra.mxu0 %v473
      %485 = vmatprep.subr.bf16.mxu0 0
      %486 = vmatpush1.bf16.msra.mxu0 %v474
      %487 = vmatprep.subr.bf16.mxu0 0
      %488 = vmatpush1.bf16.msra.mxu0 0
      %489 = vmatprep.subr.bf16.mxu0 0
      %490 = vmatpush1.bf16.msra.mxu0 0
      %491 = vmatprep.subr.bf16.mxu0 0
      %492 = vmatpush1.bf16.msra.mxu0 0
      %493 = vmatprep.subr.bf16.mxu0 0
      %494 = vmatpush1.bf16.msra.mxu0 0
      %495 = vmatprep.subr.bf16.mxu0 0
      %496 = vmatpush1.bf16.msra.mxu0 0
      %497 = vmatprep.subr.bf16.mxu0 0
      %498 = vmatpush1.bf16.msra.mxu0 0
      %499 = vmatprep.subr.bf16.mxu0 0
      %500 = vmatpush1.bf16.msra.mxu0 0
      %501 = vmatprep.subr.bf16.mxu0 0
      %502 = vmatpush1.bf16.msra.mxu0 0
      %503 = vmatprep.subr.bf16.mxu0 0
      %504 = vmatpush1.bf16.msra.mxu0 0
      %505 = vmatprep.subr.bf16.mxu0 0
      %506 = vmatpush1.bf16.msra.mxu0 0
      %507 = vmatprep.subr.bf16.mxu0 0
      %508 = vmatpush1.bf16.msra.mxu0 0
      %509 = vmatprep.subr.bf16.mxu0 0
      %510 = vmatpush1.bf16.msra.mxu0 0
      %511 = vmatprep.subr.bf16.mxu0 0
      %512 = vmatpush1.bf16.msra.mxu0 0
      %513 = vmatprep.subr.bf16.mxu0 0
      %514 = vmatpush1.bf16.msra.mxu0 0
      %515 = vmatprep.mubr.bf16.mxu0 0
      %516 = vmatmul.mubr.bf16.gmra.mrb[0].mxu0 %v478
      %v517 = vpop.f32.mrb[0].mxu0
      %v518 = vadd.f32 %v463, %v517
      %v519 = vpop.f32.mrb[0].mxu0
      %v520 = vpop.f32.mrb[0].mxu0
      %v521 = vadd.f32 %v463, %v520
      %v522 = vpop.f32.mrb[0].mxu0
      %523 = vmatprep.mubr.bf16.mxu0 0
      %524 = vmatmul.mubr.bf16.gmra.mrb[0].mxu0 %v481
      %v525 = vpop.f32.mrb[0].mxu0
      %v526 = vadd.f32 %v463, %v525
      %v527 = vpop.f32.mrb[0].mxu0
      %v528 = vpop.f32.mrb[0].mxu0
      %v529 = vpop.f32.mrb[0].mxu0
      %530 = vdwg.mxu0
      %v531 = vmul.f32 %v518, %v518
      %v532 = vmul.f32 %v521, %v521
      %v533 = vmul.f32 %v526, %v526
      %v534 = vmul.f32 %v518, %v531
      %v535 = vmul.f32 %v521, %v532
      %v536 = vmul.f32 %v526, %v533
      %v537 = vmul.f32 %v534, 0.044715
      %v538 = vmul.f32 %v535, 0.044715
      %v539 = vmul.f32 %v536, 0.044715
      %v540 = vadd.f32 %v518, %v537
      %v541 = vadd.f32 %v521, %v538
      %v542 = vadd.f32 %v526, %v539
      %v543 = vmul.f32 %v540, 0.7978846
      %v544 = vmul.f32 %v541, 0.7978846
      %v545 = vmul.f32 %v542, 0.7978846
      %v546 = vtanh.pop %v543
      %v547 = vtanh.pop %v544
      %v548 = vtanh.pop %v545
      %v549 = vadd.f32 %v546, 1.0
      %v550 = vadd.f32 %v547, 1.0
      %v551 = vadd.f32 %v548, 1.0
      %v552 = vmul.f32 %v549, 0.5
      %v553 = vmul.f32 %v550, 0.5
      %v554 = vmul.f32 %v551, 0.5
      %v555 = vmul.f32 %v518, %v552
      %v556 = vmul.f32 %v521, %v553
      %v557 = vmul.f32 %v526, %v554
      %v558 = vpack.c.bf16 %v556, %v555
      %v559 = vpack.c.bf16 %v557, %v557
      %v560 = vld [vmem:[%s6] sm:$0xf]
      %v561 = vld [vmem:[%s6 + $0x4] sm:$0xf]
      %v562 = vld [vmem:[%s6 + $0x8] sm:$0xf]
      %v563 = vld [vmem:[%s6 + $0xc] sm:$0xf]
      %v564 = vld [vmem:[%s6 + $0x10] sm:$0xf]
      %v565 = vld [vmem:[%s6 + $0x14] sm:$0xf]
      %v566 = vld [vmem:[%s6 + $0x18] sm:$0xf]
      %v567 = vld [vmem:[%s6 + $0x1c] sm:$0xf]
      %v576 = vunpack.c.l.b16 %v560
      %v577 = vunpack.c.l.b16 %v561
      %v578 = vunpack.c.l.b16 %v562
      %v579 = vunpack.c.l.b16 %v563
      %v580 = vunpack.c.l.b16 %v564
      %v581 = vunpack.c.l.b16 %v565
      %v582 = vunpack.c.l.b16 %v566
      %v583 = vunpack.c.l.b16 %v567
      %v584 = vpack.c.b16 %v577, %v576
      %v585 = vpack.c.b16 %v579, %v578
      %v586 = vpack.c.b16 %v581, %v580
      %v587 = vpack.c.b16 %v583, %v582
      %vm592 = vcmask 523264
      %v594 = vsel %vm592, %v558, 0
      %v597 = vsel %vm592, %v559, 0
      %599 = vmatprep.subr.bf16.mxu0 0
      %600 = vmatpush1.bf16.msra.mxu0 %v584
      %601 = vmatprep.subr.bf16.mxu0 0
      %602 = vmatpush1.bf16.msra.mxu0 %v585
      %603 = vmatprep.subr.bf16.mxu0 0
      %604 = vmatpush1.bf16.msra.mxu0 %v586
      %605 = vmatprep.subr.bf16.mxu0 0
      %606 = vmatpush1.bf16.msra.mxu0 %v587
      %607 = vmatprep.subr.bf16.mxu0 0
      %608 = vmatpush1.bf16.msra.mxu0 0
      %609 = vmatprep.subr.bf16.mxu0 0
      %610 = vmatpush1.bf16.msra.mxu0 0
      %611 = vmatprep.subr.bf16.mxu0 0
      %612 = vmatpush1.bf16.msra.mxu0 0
      %613 = vmatprep.subr.bf16.mxu0 0
      %614 = vmatpush1.bf16.msra.mxu0 0
      %615 = vmatprep.subr.bf16.mxu0 0
      %616 = vmatpush1.bf16.msra.mxu0 0
      %617 = vmatprep.subr.bf16.mxu0 0
      %618 = vmatpush1.bf16.msra.mxu0 0
      %619 = vmatprep.subr.bf16.mxu0 0
      %620 = vmatpush1.bf16.msra.mxu0 0
      %621 = vmatprep.subr.bf16.mxu0 0
      %622 = vmatpush1.bf16.msra.mxu0 0
      %623 = vmatprep.subr.bf16.mxu0 0
      %624 = vmatpush1.bf16.msra.mxu0 0
      %625 = vmatprep.subr.bf16.mxu0 0
      %626 = vmatpush1.bf16.msra.mxu0 0
      %627 = vmatprep.subr.bf16.mxu0 0
      %628 = vmatpush1.bf16.msra.mxu0 0
      %629 = vmatprep.subr.bf16.mxu0 0
      %630 = vmatpush1.bf16.msra.mxu0 0
      %631 = vmatprep.mubr.bf16.mxu0 0
      %632 = vmatmul.mubr.bf16.gmra.mrb[0].mxu0 %v594
      %v633 = vpop.f32.mrb[0].mxu0
      %v634 = vadd.f32 0.0, %v633
      %v635 = vpop.f32.mrb[0].mxu0
      %v636 = vpop.f32.mrb[0].mxu0
      %v637 = vadd.f32 0.0, %v636
      %v638 = vpop.f32.mrb[0].mxu0
      %639 = vmatprep.mubr.bf16.mxu0 0
      %640 = vmatmul.mubr.bf16.gmra.mrb[0].mxu0 %v597
      %v641 = vpop.f32.mrb[0].mxu0
      %v642 = vadd.f32 0.0, %v641
      %v643 = vpop.f32.mrb[0].mxu0
      %v644 = vpop.f32.mrb[0].mxu0
      %v645 = vpop.f32.mrb[0].mxu0
      %646 = vdwg.mxu0
      %v647 = vadd.f32 %v395, %v634
      %v648 = vadd.f32 %v396, %v637
      %v649 = vadd.f32 %v397, %v642
      %v650 = vlaneseq
      %v651 = vshrl.u32 %v650, 7
      %v652 = vsub.s32 0, %v651
      %v653 = vrot.slane %v308, %v652
      %v654 = vadd.f32 %v647, %v653
      %v655 = vadd.f32 %v648, %v653
      %v656 = vadd.f32 %v649, %v653
      %657 = vst.msk [vmem:[%s302] sm:$0xff] %vm333, %v654
      %658 = vst.msk [vmem:[%s302 + $0x8] sm:$0xff] %vm333, %v655
      %659 = vst.msk [vmem:[%s302 + $0x10] sm:$0xff] %vm333, %v656
      %s660 = smul.u32 3, %s18
      %p661 = scmp.lt.s32.totalorder %s660, 5
      %s662 = scalar_select %p661, %s660, 5
      %s663 = smul.addr %s662, 8
      %s664 = scalar_lea.vmem %s7, %s663
      // Predicated region
      $region49: #{mae_forward.28} parent=47 // pred_check
        %p665 = pneg %p193
      $region50: #{mae_forward.28} parent=47 // pred_check_branch
        %667 = sbr.rel (%p665) target = $region52
      $region51: #{mae_forward.28} parent=47 // pred_region
        %s668 = smul.u32 3, %s18
      $region52: #{mae_forward.28} parent=47 // pred_fallthru
        _
    $region48: #{mae_forward.28} parent=5 // pred_fallthru
      _
    %p669 = scmp.le.s32.totalorder 2, %s13
    // Predicated region
    $region53: #{mae_forward.28} parent=5 // pred_check
      %p670 = pneg %p669
    $region54: #{mae_forward.28} parent=5 // pred_check_branch
      %672 = sbr.rel (%p670) target = $region56
    $region55: #{mae_forward.28} parent=5 // pred_region
      %s673 = ssub.s32 %s13, 2
      // Predicated region
      $region57: #{mae_forward.28} parent=55 // pred_check
        %p674 = pneg %p199
      $region58: #{mae_forward.28} parent=55 // pred_check_branch
        %676 = sbr.rel (%p674) target = $region60
      $region59: #{mae_forward.28} parent=55 // pred_region
        %s677 = smul.u32 3, %s19
        %p678 = scmp.lt.s32.totalorder %s677, 5
        %s679 = scalar_select %p678, %s677, 5
        %s680 = smul.addr %s679, 8
        %s681 = scalar_lea.vmem %s7, %s680
      $region60: #{mae_forward.28} parent=55 // pred_fallthru
        _
    $region56: #{mae_forward.28} parent=5 // pred_fallthru
      _
  $region6: #{mae_forward.28} parent=0 // loop_footer
    %s17 = sadd.s32 1, %s13
  $region7: #{mae_forward.28} parent=0 // loop_footer_branch
    %12 = sbr.rel target = $region3
  $region8: #{mae_forward.28} parent=0 // loop_exit
    _

</llo_original>
